<compile_context>
chip_gen: v7x
topology: tpu7x:2x2x1
jax: 0.10.0
libtpu: 0.0.40
codegen_flags: <defaults>
</compile_context>

<pallas_src>
import jax
import jax.numpy as jnp
from jax import lax
from jax.experimental import pallas as pl
from jax.experimental.pallas import tpu as pltpu


# ---------------------------------------------------------------------------
# Fused kernel: conv3x3 + BN(folded) + ReLU  -> conv3x3 + BN(folded) + ReLU
# ---------------------------------------------------------------------------
def _double_conv_kernel(x_ref, w1_ref, b1_ref, w2_ref, b2_ref, o_ref,
                        xflat_ref, mflat_ref):
    """One batch element per grid step.

    Layout: channels on sublanes, flattened padded spatial (row stride
    Wp = W + 2) on lanes, so all matmuls and stores are lane-dense.

    x_ref     : (1, Cin, H, W)     NCHW input block
    w1_ref    : (9, Cmid, Cin)     per-tap conv1 weights, BN1 scale folded in
    b1_ref    : (Cmid, 1)          folded BN1 bias (f32)
    w2_ref    : (9, Cout, Cmid)    per-tap conv2 weights, BN2 scale folded in
    b2_ref    : (Cout, 1)          folded BN2 bias (f32)
    o_ref     : (1, Cout, H*Wp)    output slab in padded-stride layout

    Scratch (VMEM):
    xflat_ref : (Cin,  (H+3)*Wp)   zero-padded input, flattened
    mflat_ref : (Cmid, (H+3)*Wp)   zero-padded conv1 activation (never in HBM)
    """
    _, c_in, H, W = x_ref.shape
    c_mid = w1_ref.shape[1]
    Wp = W + 2
    S = H * Wp                         # lanes the convs are evaluated on
    flat_len = xflat_ref.shape[1]
    dt = xflat_ref.dtype

    # Lanes whose padded-column index is a real image column.  The two "junk"
    # columns per row exist because the output keeps the padded row stride Wp.
    lane = lax.broadcasted_iota(jnp.int32, (1, S), 1)
    col_ok = (lane % Wp) < W

    def conv3x3(src_ref, w_ref, b_ref):
        # 9 accumulated matmuls (one per tap), K = C.  No im2col patch is
        # materialized: each tap RHS is just a lane-shifted slice of the flat
        # padded activation, so scratch stays 1x the activation (not 9x).
        acc = jnp.zeros((w_ref.shape[1], S), jnp.float32)
        for dy in range(3):
            for dx in range(3):
                t = dy * 3 + dx
                slab = src_ref[:, pl.ds(dy * Wp + dx, S)]      # (C, S)
                acc = acc + jnp.dot(w_ref[t], slab,
                                    preferred_element_type=jnp.float32)
        # folded-BN bias + ReLU epilogue in f32
        return jnp.maximum(acc + b_ref[...], 0.0)              # (Cout_stage, S)

    # ---- stage 0: build the zero-padded flat input in VMEM -----------------
    # Border-only zeroing: head, per-row 2-column gaps and tail are the only
    # positions not overwritten by the data stores below.
    xv = x_ref[0].astype(dt)                                   # (Cin, H, W)
    xflat_ref[:, pl.ds(0, Wp + 1)] = jnp.zeros((c_in, Wp + 1), dt)
    for i in range(H):
        base = (i + 1) * Wp + 1
        xflat_ref[:, pl.ds(base, W)] = xv[:, i, :]
        xflat_ref[:, pl.ds(base + W, 2)] = jnp.zeros((c_in, 2), dt)
    tail = (H + 1) * Wp + 1
    xflat_ref[:, pl.ds(tail, flat_len - tail)] = jnp.zeros(
        (c_in, flat_len - tail), dt)

    # ---- stage 1: conv1 + BN1 + ReLU (activation stays on-chip) ------------
    y1 = conv3x3(xflat_ref, w1_ref, b1_ref)                    # (Cmid, S) f32
    # Zero the junk columns (they become the zero padding of stage 2), then
    # insert at offset Wp+1 with ONE contiguous lane-dense store.
    y1 = jnp.where(col_ok, y1, 0.0).astype(dt)
    mflat_ref[:, pl.ds(0, Wp + 1)] = jnp.zeros((c_mid, Wp + 1), dt)
    mflat_ref[:, pl.ds(Wp + 1, S)] = y1
    rest = flat_len - (Wp + 1 + S)
    mflat_ref[:, pl.ds(Wp + 1 + S, rest)] = jnp.zeros((c_mid, rest), dt)

    # ---- stage 2: conv2 + BN2 + ReLU ---------------------------------------
    y2 = conv3x3(mflat_ref, w2_ref, b2_ref)                    # (Cout, S) f32
    # Lane-dense output store (spatial on lanes); junk columns are sliced off
    # for free in the wrapper.
    o_ref[0] = y2.astype(o_ref.dtype)


def double_conv_fused(x_nchw, w1_taps, b1, w2_taps, b2,
                      *, matmul_dtype=jnp.bfloat16):
    """Fused DoubleConv.  x is NCHW; weights are (9, Cout, Cin) per-tap with
    the BN scale already folded in; biases are per-output-channel."""
    N, c_in, H, W = x_nchw.shape
    c_mid = w1_taps.shape[1]
    c_out = w2_taps.shape[1]
    Wp = W + 2
    S = H * Wp
    flat_len = (H + 3) * Wp

    w1 = w1_taps.astype(matmul_dtype)
    w2 = w2_taps.astype(matmul_dtype)
    b1 = b1.reshape(c_mid, 1).astype(jnp.float32)
    b2 = b2.reshape(c_out, 1).astype(jnp.float32)

    # Explicit scoped-VMEM budget (blocks are double-buffered by Pallas).
    isz = jnp.dtype(matmul_dtype).itemsize
    xsz = jnp.dtype(x_nchw.dtype).itemsize
    vmem_bytes = (
        2 * c_in * H * W * xsz                                   # x block
        + 2 * (9 * c_mid * c_in + 9 * c_out * c_mid) * isz       # weights
        + 2 * (c_mid + c_out) * 4                                # biases
        + 2 * c_out * S * xsz                                    # out block
        + (c_in + c_mid) * flat_len * isz)                       # scratch
    vmem_bytes = int(min(max(4 * vmem_bytes + (2 << 20), 8 << 20), 64 << 20))

    out = pl.pallas_call(
        _double_conv_kernel,
        out_shape=jax.ShapeDtypeStruct((N, c_out, S), x_nchw.dtype),
        grid_spec=pltpu.PrefetchScalarGridSpec(
            num_scalar_prefetch=0,
            grid=(N,),
            in_specs=[
                pl.BlockSpec((1, c_in, H, W), lambda n: (n, 0, 0, 0)),
                pl.BlockSpec((9, c_mid, c_in), lambda n: (0, 0, 0)),
                pl.BlockSpec((c_mid, 1), lambda n: (0, 0)),
                pl.BlockSpec((9, c_out, c_mid), lambda n: (0, 0, 0)),
                pl.BlockSpec((c_out, 1), lambda n: (0, 0)),
            ],
            out_specs=pl.BlockSpec((1, c_out, S), lambda n: (n, 0, 0)),
            scratch_shapes=[
                pltpu.VMEM((c_in, flat_len), matmul_dtype),
                pltpu.VMEM((c_mid, flat_len), matmul_dtype),
            ],
        ),
        compiler_params=pltpu.CompilerParams(
            dimension_semantics=("parallel",),
            vmem_limit_bytes=vmem_bytes),
    )(x_nchw, w1, b1, w2, b2)

    # Padded-stride slab -> NCHW: free XLA reshape + column slice.
    return out.reshape(N, c_out, H, Wp)[:, :, :, :W]


# ---------------------------------------------------------------------------
# Parameter helpers (inference-mode BatchNorm folding) and public forward
# ---------------------------------------------------------------------------
def _fold_bn(gamma, beta, running_mean, running_var, eps=1e-5):
    scale = gamma / jnp.sqrt(running_var + eps)
    bias = beta - running_mean * scale
    return scale, bias


def _to_taps(w_oihw):
    """OIHW (Cout, Cin, 3, 3) -> per-tap (9, Cout, Cin), tap index = dy*3+dx."""
    c_out, c_in = w_oihw.shape[0], w_oihw.shape[1]
    return jnp.transpose(w_oihw, (2, 3, 0, 1)).reshape(9, c_out, c_in)


def init_double_conv_params(key, in_channel, out_channel):
    """Deterministic synthetic parameters matching the nn.Module shapes."""
    ks = jax.random.split(key, 10)
    f32 = jnp.float32
    w1 = jax.random.normal(ks[0], (out_channel, in_channel, 3, 3), f32)
    w1 = w1 / jnp.sqrt(9.0 * in_channel)
    w2 = jax.random.normal(ks[1], (out_channel, out_channel, 3, 3), f32)
    w2 = w2 / jnp.sqrt(9.0 * out_channel)
    bn1 = dict(
        gamma=1.0 + 0.1 * jax.random.normal(ks[2], (out_channel,), f32),
        beta=0.1 * jax.random.normal(ks[3], (out_channel,), f32),
        mean=0.1 * jax.random.normal(ks[4], (out_channel,), f32),
        var=1.0 + 0.2 * jax.random.uniform(ks[5], (out_channel,), f32),
    )
    bn2 = dict(
        gamma=1.0 + 0.1 * jax.random.normal(ks[6], (out_channel,), f32),
        beta=0.1 * jax.random.normal(ks[7], (out_channel,), f32),
        mean=0.1 * jax.random.normal(ks[8], (out_channel,), f32),
        var=1.0 + 0.2 * jax.random.uniform(ks[9], (out_channel,), f32),
    )
    return dict(w1=w1, bn1=bn1, w2=w2, bn2=bn2)


def double_conv_forward(x_nchw, params, *, matmul_dtype=jnp.bfloat16):
    """DoubleConv forward; input/output are NCHW like PyTorch."""
    s1, b1 = _fold_bn(params["bn1"]["gamma"], params["bn1"]["beta"],
                      params["bn1"]["mean"], params["bn1"]["var"])
    s2, b2 = _fold_bn(params["bn2"]["gamma"], params["bn2"]["beta"],
                      params["bn2"]["mean"], params["bn2"]["var"])
    # Fold BN scale into the conv weights (per output channel); only the bias
    # enters the kernel.
    w1_t = _to_taps(params["w1"]) * s1[None, :, None]
    w2_t = _to_taps(params["w2"]) * s2[None, :, None]
    return double_conv_fused(x_nchw, w1_t, b1, w2_t, b2,
                             matmul_dtype=matmul_dtype)


# ---------------------------------------------------------------------------
# Pure-JAX reference (lax conv) for correctness checking
# ---------------------------------------------------------------------------
def _reference_double_conv(x_nchw, params):
    def conv(x, w):
        return lax.conv_general_dilated(
            x, w, window_strides=(1, 1), padding="SAME",
            dimension_numbers=("NCHW", "OIHW", "NCHW"),
            precision=lax.Precision.HIGHEST)

    s1, b1 = _fold_bn(params["bn1"]["gamma"], params["bn1"]["beta"],
                      params["bn1"]["mean"], params["bn1"]["var"])
    s2, b2 = _fold_bn(params["bn2"]["gamma"], params["bn2"]["beta"],
                      params["bn2"]["mean"], params["bn2"]["var"])
    y = jnp.maximum(conv(x_nchw, params["w1"]) * s1[None, :, None, None]
                    + b1[None, :, None, None], 0.0)
    y = jnp.maximum(conv(y, params["w2"]) * s2[None, :, None, None]
                    + b2[None, :, None, None], 0.0)
    return y


if __name__ == "__main__":
    key = jax.random.PRNGKey(0)
    k_x, k_p = jax.random.split(key)

    N, Cin, H, W = 2, 4, 16, 16
    Cout = 8

    x = jax.random.normal(k_x, (N, Cin, H, W), jnp.float32)
    params = init_double_conv_params(k_p, Cin, Cout)

    fwd = jax.jit(lambda xx: double_conv_forward(xx, params))
    out = jax.block_until_ready(fwd(x))

    ref = _reference_double_conv(x, params)
    assert out.shape == (N, Cout, H, W), out.shape
    max_err = float(jnp.max(jnp.abs(out - ref)))
    # bf16 MXU path (default).  Use matmul_dtype=jnp.float32 for <1e-4 error.
    assert max_err < 1e-1, f"max abs error too large: {max_err}"

    print("KERNEL_OK")
</pallas_src>

<mosaic_0001>
module attributes {stable_mosaic.version = 11 : i64} {
  func.func @_double_conv_kernel(%arg0: i32, %arg1: memref<1x4x16x16xf32, #tpu.memory_space<vmem>>, %arg2: memref<9x8x4xbf16, #tpu.memory_space<vmem>>, %arg3: memref<8x1xf32, #tpu.memory_space<vmem>>, %arg4: memref<9x8x8xbf16, #tpu.memory_space<vmem>>, %arg5: memref<8x1xf32, #tpu.memory_space<vmem>>, %arg6: memref<1x8x288xf32, #tpu.memory_space<vmem>>, %arg7: memref<4x342xbf16, #tpu.memory_space<vmem>>, %arg8: memref<8x342xbf16, #tpu.memory_space<vmem>>) attributes {dimension_semantics = [#tpu.dimension_semantics<parallel>], iteration_bounds = array<i64: 2>, scalar_prefetch = 0 : i64, scratch_operands = 2 : i64, tpu.core_type = #tpu.core_type<tc>, window_params = [{transform_indices = @transform_0, window_bounds = array<i64: 1, 4, 16, 16>}, {pipeline_mode = #tpu.pipeline_mode<synchronous>, transform_indices = @transform_1, window_bounds = array<i64: 9, 8, 4>}, {pipeline_mode = #tpu.pipeline_mode<synchronous>, transform_indices = @transform_2, window_bounds = array<i64: 8, 1>}, {pipeline_mode = #tpu.pipeline_mode<synchronous>, transform_indices = @transform_3, window_bounds = array<i64: 9, 8, 8>}, {pipeline_mode = #tpu.pipeline_mode<synchronous>, transform_indices = @transform_4, window_bounds = array<i64: 8, 1>}, {transform_indices = @transform_5, window_bounds = array<i64: 1, 8, 288>}]} {
    %0 = tpu.iota {dimensions = array<i32: 1>} : vector<1x288xi32>
    %c18_i32 = arith.constant 18 : i32
    %c0_i32 = arith.constant 0 : i32
    %1 = arith.cmpi eq, %c18_i32, %c0_i32 : i32
    %c1_i32 = arith.constant 1 : i32
    %2 = arith.select %1, %c1_i32, %c18_i32 : i32
    %3 = vector.broadcast %2 : i32 to vector<1x288xi32>
    %4 = arith.remsi %0, %3 : vector<1x288xi32>
    %c0_i32_0 = arith.constant 0 : i32
    %5 = vector.broadcast %c0_i32_0 : i32 to vector<1x288xi32>
    %6 = arith.cmpi ne, %4, %5 : vector<1x288xi32>
    %c0_i32_1 = arith.constant 0 : i32
    %7 = vector.broadcast %c0_i32_1 : i32 to vector<1x288xi32>
    %8 = arith.cmpi slt, %4, %7 : vector<1x288xi32>
    %c0_i32_2 = arith.constant 0 : i32
    %9 = arith.cmpi slt, %2, %c0_i32_2 : i32
    %10 = vector.broadcast %9 : i1 to vector<1x288xi1>
    %11 = vector.broadcast %10 : vector<1x288xi1> to vector<1x288xi1>
    %12 = arith.xori %8, %11 : vector<1x288xi1>
    %13 = arith.andi %12, %6 : vector<1x288xi1>
    %14 = vector.broadcast %2 : i32 to vector<1x288xi32>
    %15 = arith.addi %4, %14 : vector<1x288xi32>
    %16 = arith.select %13, %15, %4 : vector<1x288xi1>, vector<1x288xi32>
    %c16_i32 = arith.constant 16 : i32
    %17 = vector.broadcast %c16_i32 : i32 to vector<1x288xi32>
    %18 = arith.cmpi slt, %16, %17 : vector<1x288xi32>
    %c0 = arith.constant 0 : index
    %c0_3 = arith.constant 0 : index
    %c0_4 = arith.constant 0 : index
    %c0_5 = arith.constant 0 : index
    %19 = vector.load %arg1[%c0, %c0_3, %c0_4, %c0_5] : memref<1x4x16x16xf32, #tpu.memory_space<vmem>>, vector<1x4x16x16xf32>
    %20 = vector.shape_cast %19 : vector<1x4x16x16xf32> to vector<4x16x16xf32>
    %21 = arith.truncf %20 : vector<4x16x16xf32> to vector<4x16x16xbf16>
    %cst = arith.constant 0.000000e+00 : bf16
    %22 = vector.broadcast %cst : bf16 to vector<4x19xbf16>
    %c0_6 = arith.constant 0 : index
    %c0_7 = arith.constant 0 : index
    %23 = vector.load %arg7[%c0_6, %c0_7] : memref<4x342xbf16, #tpu.memory_space<vmem>>, vector<4x19xbf16>
    tpu.vector_store %arg7[%c0_6, %c0_7], %22 {strides = array<i32>} : memref<4x342xbf16, #tpu.memory_space<vmem>>, vector<4x19xbf16>,
    %24 = vector.extract_strided_slice %21 {offsets = [0, 0, 0], sizes = [4, 1, 16], strides = [1, 1, 1]} : vector<4x16x16xbf16> to vector<4x1x16xbf16>
    %25 = vector.shape_cast %24 : vector<4x1x16xbf16> to vector<4x16xbf16>
    %c0_8 = arith.constant 0 : index
    %c19 = arith.constant 19 : index
    %26 = vector.load %arg7[%c0_8, %c19] : memref<4x342xbf16, #tpu.memory_space<vmem>>, vector<4x16xbf16>
    tpu.vector_store %arg7[%c0_8, %c19], %25 {strides = array<i32>} : memref<4x342xbf16, #tpu.memory_space<vmem>>, vector<4x16xbf16>,
    %cst_9 = arith.constant 0.000000e+00 : bf16
    %27 = vector.broadcast %cst_9 : bf16 to vector<4x2xbf16>
    %c0_10 = arith.constant 0 : index
    %c35 = arith.constant 35 : index
    %28 = vector.load %arg7[%c0_10, %c35] : memref<4x342xbf16, #tpu.memory_space<vmem>>, vector<4x2xbf16>
    tpu.vector_store %arg7[%c0_10, %c35], %27 {strides = array<i32>} : memref<4x342xbf16, #tpu.memory_space<vmem>>, vector<4x2xbf16>,
    %29 = vector.extract_strided_slice %21 {offsets = [0, 1, 0], sizes = [4, 1, 16], strides = [1, 1, 1]} : vector<4x16x16xbf16> to vector<4x1x16xbf16>
    %30 = vector.shape_cast %29 : vector<4x1x16xbf16> to vector<4x16xbf16>
    %c0_11 = arith.constant 0 : index
    %c37 = arith.constant 37 : index
    %31 = vector.load %arg7[%c0_11, %c37] : memref<4x342xbf16, #tpu.memory_space<vmem>>, vector<4x16xbf16>
    tpu.vector_store %arg7[%c0_11, %c37], %30 {strides = array<i32>} : memref<4x342xbf16, #tpu.memory_space<vmem>>, vector<4x16xbf16>,
    %cst_12 = arith.constant 0.000000e+00 : bf16
    %32 = vector.broadcast %cst_12 : bf16 to vector<4x2xbf16>
    %c0_13 = arith.constant 0 : index
    %c53 = arith.constant 53 : index
    %33 = vector.load %arg7[%c0_13, %c53] : memref<4x342xbf16, #tpu.memory_space<vmem>>, vector<4x2xbf16>
    tpu.vector_store %arg7[%c0_13, %c53], %32 {strides = array<i32>} : memref<4x342xbf16, #tpu.memory_space<vmem>>, vector<4x2xbf16>,
    %34 = vector.extract_strided_slice %21 {offsets = [0, 2, 0], sizes = [4, 1, 16], strides = [1, 1, 1]} : vector<4x16x16xbf16> to vector<4x1x16xbf16>
    %35 = vector.shape_cast %34 : vector<4x1x16xbf16> to vector<4x16xbf16>
    %c0_14 = arith.constant 0 : index
    %c55 = arith.constant 55 : index
    %36 = vector.load %arg7[%c0_14, %c55] : memref<4x342xbf16, #tpu.memory_space<vmem>>, vector<4x16xbf16>
    tpu.vector_store %arg7[%c0_14, %c55], %35 {strides = array<i32>} : memref<4x342xbf16, #tpu.memory_space<vmem>>, vector<4x16xbf16>,
    %cst_15 = arith.constant 0.000000e+00 : bf16
    %37 = vector.broadcast %cst_15 : bf16 to vector<4x2xbf16>
    %c0_16 = arith.constant 0 : index
    %c71 = arith.constant 71 : index
    %38 = vector.load %arg7[%c0_16, %c71] : memref<4x342xbf16, #tpu.memory_space<vmem>>, vector<4x2xbf16>
    tpu.vector_store %arg7[%c0_16, %c71], %37 {strides = array<i32>} : memref<4x342xbf16, #tpu.memory_space<vmem>>, vector<4x2xbf16>,
    %39 = vector.extract_strided_slice %21 {offsets = [0, 3, 0], sizes = [4, 1, 16], strides = [1, 1, 1]} : vector<4x16x16xbf16> to vector<4x1x16xbf16>
    %40 = vector.shape_cast %39 : vector<4x1x16xbf16> to vector<4x16xbf16>
    %c0_17 = arith.constant 0 : index
    %c73 = arith.constant 73 : index
    %41 = vector.load %arg7[%c0_17, %c73] : memref<4x342xbf16, #tpu.memory_space<vmem>>, vector<4x16xbf16>
    tpu.vector_store %arg7[%c0_17, %c73], %40 {strides = array<i32>} : memref<4x342xbf16, #tpu.memory_space<vmem>>, vector<4x16xbf16>,
    %cst_18 = arith.constant 0.000000e+00 : bf16
    %42 = vector.broadcast %cst_18 : bf16 to vector<4x2xbf16>
    %c0_19 = arith.constant 0 : index
    %c89 = arith.constant 89 : index
    %43 = vector.load %arg7[%c0_19, %c89] : memref<4x342xbf16, #tpu.memory_space<vmem>>, vector<4x2xbf16>
    tpu.vector_store %arg7[%c0_19, %c89], %42 {strides = array<i32>} : memref<4x342xbf16, #tpu.memory_space<vmem>>, vector<4x2xbf16>,
    %44 = vector.extract_strided_slice %21 {offsets = [0, 4, 0], sizes = [4, 1, 16], strides = [1, 1, 1]} : vector<4x16x16xbf16> to vector<4x1x16xbf16>
    %45 = vector.shape_cast %44 : vector<4x1x16xbf16> to vector<4x16xbf16>
    %c0_20 = arith.constant 0 : index
    %c91 = arith.constant 91 : index
    %46 = vector.load %arg7[%c0_20, %c91] : memref<4x342xbf16, #tpu.memory_space<vmem>>, vector<4x16xbf16>
    tpu.vector_store %arg7[%c0_20, %c91], %45 {strides = array<i32>} : memref<4x342xbf16, #tpu.memory_space<vmem>>, vector<4x16xbf16>,
    %cst_21 = arith.constant 0.000000e+00 : bf16
    %47 = vector.broadcast %cst_21 : bf16 to vector<4x2xbf16>
    %c0_22 = arith.constant 0 : index
    %c107 = arith.constant 107 : index
    %48 = vector.load %arg7[%c0_22, %c107] : memref<4x342xbf16, #tpu.memory_space<vmem>>, vector<4x2xbf16>
    tpu.vector_store %arg7[%c0_22, %c107], %47 {strides = array<i32>} : memref<4x342xbf16, #tpu.memory_space<vmem>>, vector<4x2xbf16>,
    %49 = vector.extract_strided_slice %21 {offsets = [0, 5, 0], sizes = [4, 1, 16], strides = [1, 1, 1]} : vector<4x16x16xbf16> to vector<4x1x16xbf16>
    %50 = vector.shape_cast %49 : vector<4x1x16xbf16> to vector<4x16xbf16>
    %c0_23 = arith.constant 0 : index
    %c109 = arith.constant 109 : index
    %51 = vector.load %arg7[%c0_23, %c109] : memref<4x342xbf16, #tpu.memory_space<vmem>>, vector<4x16xbf16>
    tpu.vector_store %arg7[%c0_23, %c109], %50 {strides = array<i32>} : memref<4x342xbf16, #tpu.memory_space<vmem>>, vector<4x16xbf16>,
    %cst_24 = arith.constant 0.000000e+00 : bf16
    %52 = vector.broadcast %cst_24 : bf16 to vector<4x2xbf16>
    %c0_25 = arith.constant 0 : index
    %c125 = arith.constant 125 : index
    %53 = vector.load %arg7[%c0_25, %c125] : memref<4x342xbf16, #tpu.memory_space<vmem>>, vector<4x2xbf16>
    tpu.vector_store %arg7[%c0_25, %c125], %52 {strides = array<i32>} : memref<4x342xbf16, #tpu.memory_space<vmem>>, vector<4x2xbf16>,
    %54 = vector.extract_strided_slice %21 {offsets = [0, 6, 0], sizes = [4, 1, 16], strides = [1, 1, 1]} : vector<4x16x16xbf16> to vector<4x1x16xbf16>
    %55 = vector.shape_cast %54 : vector<4x1x16xbf16> to vector<4x16xbf16>
    %c0_26 = arith.constant 0 : index
    %c127 = arith.constant 127 : index
    %56 = vector.load %arg7[%c0_26, %c127] : memref<4x342xbf16, #tpu.memory_space<vmem>>, vector<4x16xbf16>
    tpu.vector_store %arg7[%c0_26, %c127], %55 {strides = array<i32>} : memref<4x342xbf16, #tpu.memory_space<vmem>>, vector<4x16xbf16>,
    %cst_27 = arith.constant 0.000000e+00 : bf16
    %57 = vector.broadcast %cst_27 : bf16 to vector<4x2xbf16>
    %c0_28 = arith.constant 0 : index
    %c143 = arith.constant 143 : index
    %58 = vector.load %arg7[%c0_28, %c143] : memref<4x342xbf16, #tpu.memory_space<vmem>>, vector<4x2xbf16>
    tpu.vector_store %arg7[%c0_28, %c143], %57 {strides = array<i32>} : memref<4x342xbf16, #tpu.memory_space<vmem>>, vector<4x2xbf16>,
    %59 = vector.extract_strided_slice %21 {offsets = [0, 7, 0], sizes = [4, 1, 16], strides = [1, 1, 1]} : vector<4x16x16xbf16> to vector<4x1x16xbf16>
    %60 = vector.shape_cast %59 : vector<4x1x16xbf16> to vector<4x16xbf16>
    %c0_29 = arith.constant 0 : index
    %c145 = arith.constant 145 : index
    %61 = vector.load %arg7[%c0_29, %c145] : memref<4x342xbf16, #tpu.memory_space<vmem>>, vector<4x16xbf16>
    tpu.vector_store %arg7[%c0_29, %c145], %60 {strides = array<i32>} : memref<4x342xbf16, #tpu.memory_space<vmem>>, vector<4x16xbf16>,
    %cst_30 = arith.constant 0.000000e+00 : bf16
    %62 = vector.broadcast %cst_30 : bf16 to vector<4x2xbf16>
    %c0_31 = arith.constant 0 : index
    %c161 = arith.constant 161 : index
    %63 = vector.load %arg7[%c0_31, %c161] : memref<4x342xbf16, #tpu.memory_space<vmem>>, vector<4x2xbf16>
    tpu.vector_store %arg7[%c0_31, %c161], %62 {strides = array<i32>} : memref<4x342xbf16, #tpu.memory_space<vmem>>, vector<4x2xbf16>,
    %64 = vector.extract_strided_slice %21 {offsets = [0, 8, 0], sizes = [4, 1, 16], strides = [1, 1, 1]} : vector<4x16x16xbf16> to vector<4x1x16xbf16>
    %65 = vector.shape_cast %64 : vector<4x1x16xbf16> to vector<4x16xbf16>
    %c0_32 = arith.constant 0 : index
    %c163 = arith.constant 163 : index
    %66 = vector.load %arg7[%c0_32, %c163] : memref<4x342xbf16, #tpu.memory_space<vmem>>, vector<4x16xbf16>
    tpu.vector_store %arg7[%c0_32, %c163], %65 {strides = array<i32>} : memref<4x342xbf16, #tpu.memory_space<vmem>>, vector<4x16xbf16>,
    %cst_33 = arith.constant 0.000000e+00 : bf16
    %67 = vector.broadcast %cst_33 : bf16 to vector<4x2xbf16>
    %c0_34 = arith.constant 0 : index
    %c179 = arith.constant 179 : index
    %68 = vector.load %arg7[%c0_34, %c179] : memref<4x342xbf16, #tpu.memory_space<vmem>>, vector<4x2xbf16>
    tpu.vector_store %arg7[%c0_34, %c179], %67 {strides = array<i32>} : memref<4x342xbf16, #tpu.memory_space<vmem>>, vector<4x2xbf16>,
    %69 = vector.extract_strided_slice %21 {offsets = [0, 9, 0], sizes = [4, 1, 16], strides = [1, 1, 1]} : vector<4x16x16xbf16> to vector<4x1x16xbf16>
    %70 = vector.shape_cast %69 : vector<4x1x16xbf16> to vector<4x16xbf16>
    %c0_35 = arith.constant 0 : index
    %c181 = arith.constant 181 : index
    %71 = vector.load %arg7[%c0_35, %c181] : memref<4x342xbf16, #tpu.memory_space<vmem>>, vector<4x16xbf16>
    tpu.vector_store %arg7[%c0_35, %c181], %70 {strides = array<i32>} : memref<4x342xbf16, #tpu.memory_space<vmem>>, vector<4x16xbf16>,
    %cst_36 = arith.constant 0.000000e+00 : bf16
    %72 = vector.broadcast %cst_36 : bf16 to vector<4x2xbf16>
    %c0_37 = arith.constant 0 : index
    %c197 = arith.constant 197 : index
    %73 = vector.load %arg7[%c0_37, %c197] : memref<4x342xbf16, #tpu.memory_space<vmem>>, vector<4x2xbf16>
    tpu.vector_store %arg7[%c0_37, %c197], %72 {strides = array<i32>} : memref<4x342xbf16, #tpu.memory_space<vmem>>, vector<4x2xbf16>,
    %74 = vector.extract_strided_slice %21 {offsets = [0, 10, 0], sizes = [4, 1, 16], strides = [1, 1, 1]} : vector<4x16x16xbf16> to vector<4x1x16xbf16>
    %75 = vector.shape_cast %74 : vector<4x1x16xbf16> to vector<4x16xbf16>
    %c0_38 = arith.constant 0 : index
    %c199 = arith.constant 199 : index
    %76 = vector.load %arg7[%c0_38, %c199] : memref<4x342xbf16, #tpu.memory_space<vmem>>, vector<4x16xbf16>
    tpu.vector_store %arg7[%c0_38, %c199], %75 {strides = array<i32>} : memref<4x342xbf16, #tpu.memory_space<vmem>>, vector<4x16xbf16>,
    %cst_39 = arith.constant 0.000000e+00 : bf16
    %77 = vector.broadcast %cst_39 : bf16 to vector<4x2xbf16>
    %c0_40 = arith.constant 0 : index
    %c215 = arith.constant 215 : index
    %78 = vector.load %arg7[%c0_40, %c215] : memref<4x342xbf16, #tpu.memory_space<vmem>>, vector<4x2xbf16>
    tpu.vector_store %arg7[%c0_40, %c215], %77 {strides = array<i32>} : memref<4x342xbf16, #tpu.memory_space<vmem>>, vector<4x2xbf16>,
    %79 = vector.extract_strided_slice %21 {offsets = [0, 11, 0], sizes = [4, 1, 16], strides = [1, 1, 1]} : vector<4x16x16xbf16> to vector<4x1x16xbf16>
    %80 = vector.shape_cast %79 : vector<4x1x16xbf16> to vector<4x16xbf16>
    %c0_41 = arith.constant 0 : index
    %c217 = arith.constant 217 : index
    %81 = vector.load %arg7[%c0_41, %c217] : memref<4x342xbf16, #tpu.memory_space<vmem>>, vector<4x16xbf16>
    tpu.vector_store %arg7[%c0_41, %c217], %80 {strides = array<i32>} : memref<4x342xbf16, #tpu.memory_space<vmem>>, vector<4x16xbf16>,
    %cst_42 = arith.constant 0.000000e+00 : bf16
    %82 = vector.broadcast %cst_42 : bf16 to vector<4x2xbf16>
    %c0_43 = arith.constant 0 : index
    %c233 = arith.constant 233 : index
    %83 = vector.load %arg7[%c0_43, %c233] : memref<4x342xbf16, #tpu.memory_space<vmem>>, vector<4x2xbf16>
    tpu.vector_store %arg7[%c0_43, %c233], %82 {strides = array<i32>} : memref<4x342xbf16, #tpu.memory_space<vmem>>, vector<4x2xbf16>,
    %84 = vector.extract_strided_slice %21 {offsets = [0, 12, 0], sizes = [4, 1, 16], strides = [1, 1, 1]} : vector<4x16x16xbf16> to vector<4x1x16xbf16>
    %85 = vector.shape_cast %84 : vector<4x1x16xbf16> to vector<4x16xbf16>
    %c0_44 = arith.constant 0 : index
    %c235 = arith.constant 235 : index
    %86 = vector.load %arg7[%c0_44, %c235] : memref<4x342xbf16, #tpu.memory_space<vmem>>, vector<4x16xbf16>
    tpu.vector_store %arg7[%c0_44, %c235], %85 {strides = array<i32>} : memref<4x342xbf16, #tpu.memory_space<vmem>>, vector<4x16xbf16>,
    %cst_45 = arith.constant 0.000000e+00 : bf16
    %87 = vector.broadcast %cst_45 : bf16 to vector<4x2xbf16>
    %c0_46 = arith.constant 0 : index
    %c251 = arith.constant 251 : index
    %88 = vector.load %arg7[%c0_46, %c251] : memref<4x342xbf16, #tpu.memory_space<vmem>>, vector<4x2xbf16>
    tpu.vector_store %arg7[%c0_46, %c251], %87 {strides = array<i32>} : memref<4x342xbf16, #tpu.memory_space<vmem>>, vector<4x2xbf16>,
    %89 = vector.extract_strided_slice %21 {offsets = [0, 13, 0], sizes = [4, 1, 16], strides = [1, 1, 1]} : vector<4x16x16xbf16> to vector<4x1x16xbf16>
    %90 = vector.shape_cast %89 : vector<4x1x16xbf16> to vector<4x16xbf16>
    %c0_47 = arith.constant 0 : index
    %c253 = arith.constant 253 : index
    %91 = vector.load %arg7[%c0_47, %c253] : memref<4x342xbf16, #tpu.memory_space<vmem>>, vector<4x16xbf16>
    tpu.vector_store %arg7[%c0_47, %c253], %90 {strides = array<i32>} : memref<4x342xbf16, #tpu.memory_space<vmem>>, vector<4x16xbf16>,
    %cst_48 = arith.constant 0.000000e+00 : bf16
    %92 = vector.broadcast %cst_48 : bf16 to vector<4x2xbf16>
    %c0_49 = arith.constant 0 : index
    %c269 = arith.constant 269 : index
    %93 = vector.load %arg7[%c0_49, %c269] : memref<4x342xbf16, #tpu.memory_space<vmem>>, vector<4x2xbf16>
    tpu.vector_store %arg7[%c0_49, %c269], %92 {strides = array<i32>} : memref<4x342xbf16, #tpu.memory_space<vmem>>, vector<4x2xbf16>,
    %94 = vector.extract_strided_slice %21 {offsets = [0, 14, 0], sizes = [4, 1, 16], strides = [1, 1, 1]} : vector<4x16x16xbf16> to vector<4x1x16xbf16>
    %95 = vector.shape_cast %94 : vector<4x1x16xbf16> to vector<4x16xbf16>
    %c0_50 = arith.constant 0 : index
    %c271 = arith.constant 271 : index
    %96 = vector.load %arg7[%c0_50, %c271] : memref<4x342xbf16, #tpu.memory_space<vmem>>, vector<4x16xbf16>
    tpu.vector_store %arg7[%c0_50, %c271], %95 {strides = array<i32>} : memref<4x342xbf16, #tpu.memory_space<vmem>>, vector<4x16xbf16>,
    %cst_51 = arith.constant 0.000000e+00 : bf16
    %97 = vector.broadcast %cst_51 : bf16 to vector<4x2xbf16>
    %c0_52 = arith.constant 0 : index
    %c287 = arith.constant 287 : index
    %98 = vector.load %arg7[%c0_52, %c287] : memref<4x342xbf16, #tpu.memory_space<vmem>>, vector<4x2xbf16>
    tpu.vector_store %arg7[%c0_52, %c287], %97 {strides = array<i32>} : memref<4x342xbf16, #tpu.memory_space<vmem>>, vector<4x2xbf16>,
    %99 = vector.extract_strided_slice %21 {offsets = [0, 15, 0], sizes = [4, 1, 16], strides = [1, 1, 1]} : vector<4x16x16xbf16> to vector<4x1x16xbf16>
    %100 = vector.shape_cast %99 : vector<4x1x16xbf16> to vector<4x16xbf16>
    %c0_53 = arith.constant 0 : index
    %c289 = arith.constant 289 : index
    %101 = vector.load %arg7[%c0_53, %c289] : memref<4x342xbf16, #tpu.memory_space<vmem>>, vector<4x16xbf16>
    tpu.vector_store %arg7[%c0_53, %c289], %100 {strides = array<i32>} : memref<4x342xbf16, #tpu.memory_space<vmem>>, vector<4x16xbf16>,
    %cst_54 = arith.constant 0.000000e+00 : bf16
    %102 = vector.broadcast %cst_54 : bf16 to vector<4x2xbf16>
    %c0_55 = arith.constant 0 : index
    %c305 = arith.constant 305 : index
    %103 = vector.load %arg7[%c0_55, %c305] : memref<4x342xbf16, #tpu.memory_space<vmem>>, vector<4x2xbf16>
    tpu.vector_store %arg7[%c0_55, %c305], %102 {strides = array<i32>} : memref<4x342xbf16, #tpu.memory_space<vmem>>, vector<4x2xbf16>,
    %cst_56 = arith.constant 0.000000e+00 : bf16
    %104 = vector.broadcast %cst_56 : bf16 to vector<4x35xbf16>
    %c0_57 = arith.constant 0 : index
    %c307 = arith.constant 307 : index
    %105 = vector.load %arg7[%c0_57, %c307] : memref<4x342xbf16, #tpu.memory_space<vmem>>, vector<4x35xbf16>
    tpu.vector_store %arg7[%c0_57, %c307], %104 {strides = array<i32>} : memref<4x342xbf16, #tpu.memory_space<vmem>>, vector<4x35xbf16>,
    %cst_58 = arith.constant 0.000000e+00 : f32
    %106 = vector.broadcast %cst_58 : f32 to vector<8x288xf32>
    %c0_59 = arith.constant 0 : index
    %c0_60 = arith.constant 0 : index
    %107 = vector.load %arg7[%c0_59, %c0_60] : memref<4x342xbf16, #tpu.memory_space<vmem>>, vector<4x288xbf16>
    %c0_61 = arith.constant 0 : index
    %c0_62 = arith.constant 0 : index
    %c0_63 = arith.constant 0 : index
    %108 = vector.load %arg2[%c0_61, %c0_62, %c0_63] : memref<9x8x4xbf16, #tpu.memory_space<vmem>>, vector<1x8x4xbf16>
    %109 = vector.shape_cast %108 : vector<1x8x4xbf16> to vector<8x4xbf16>
    %cst_64 = arith.constant dense<0.000000e+00> : vector<8x288xf32>
    %110 = tpu.matmul %109, %107, %cst_64 {dimension_numbers = #tpu.dot_dimension_numbers<[1], [0], [0], [1], [0, 0, 1, 1], [], []>} : vector<8x4xbf16>, vector<4x288xbf16>, vector<8x288xf32> -> vector<8x288xf32>
    %111 = arith.addf %106, %110 : vector<8x288xf32>
    %c0_65 = arith.constant 0 : index
    %c1 = arith.constant 1 : index
    %112 = vector.load %arg7[%c0_65, %c1] : memref<4x342xbf16, #tpu.memory_space<vmem>>, vector<4x288xbf16>
    %c1_66 = arith.constant 1 : index
    %c0_67 = arith.constant 0 : index
    %c0_68 = arith.constant 0 : index
    %113 = vector.load %arg2[%c1_66, %c0_67, %c0_68] : memref<9x8x4xbf16, #tpu.memory_space<vmem>>, vector<1x8x4xbf16>
    %114 = vector.shape_cast %113 : vector<1x8x4xbf16> to vector<8x4xbf16>
    %cst_69 = arith.constant dense<0.000000e+00> : vector<8x288xf32>
    %115 = tpu.matmul %114, %112, %cst_69 {dimension_numbers = #tpu.dot_dimension_numbers<[1], [0], [0], [1], [0, 0, 1, 1], [], []>} : vector<8x4xbf16>, vector<4x288xbf16>, vector<8x288xf32> -> vector<8x288xf32>
    %116 = arith.addf %111, %115 : vector<8x288xf32>
    %c0_70 = arith.constant 0 : index
    %c2 = arith.constant 2 : index
    %117 = vector.load %arg7[%c0_70, %c2] : memref<4x342xbf16, #tpu.memory_space<vmem>>, vector<4x288xbf16>
    %c2_71 = arith.constant 2 : index
    %c0_72 = arith.constant 0 : index
    %c0_73 = arith.constant 0 : index
    %118 = vector.load %arg2[%c2_71, %c0_72, %c0_73] : memref<9x8x4xbf16, #tpu.memory_space<vmem>>, vector<1x8x4xbf16>
    %119 = vector.shape_cast %118 : vector<1x8x4xbf16> to vector<8x4xbf16>
    %cst_74 = arith.constant dense<0.000000e+00> : vector<8x288xf32>
    %120 = tpu.matmul %119, %117, %cst_74 {dimension_numbers = #tpu.dot_dimension_numbers<[1], [0], [0], [1], [0, 0, 1, 1], [], []>} : vector<8x4xbf16>, vector<4x288xbf16>, vector<8x288xf32> -> vector<8x288xf32>
    %121 = arith.addf %116, %120 : vector<8x288xf32>
    %c0_75 = arith.constant 0 : index
    %c18 = arith.constant 18 : index
    %122 = vector.load %arg7[%c0_75, %c18] : memref<4x342xbf16, #tpu.memory_space<vmem>>, vector<4x288xbf16>
    %c3 = arith.constant 3 : index
    %c0_76 = arith.constant 0 : index
    %c0_77 = arith.constant 0 : index
    %123 = vector.load %arg2[%c3, %c0_76, %c0_77] : memref<9x8x4xbf16, #tpu.memory_space<vmem>>, vector<1x8x4xbf16>
    %124 = vector.shape_cast %123 : vector<1x8x4xbf16> to vector<8x4xbf16>
    %cst_78 = arith.constant dense<0.000000e+00> : vector<8x288xf32>
    %125 = tpu.matmul %124, %122, %cst_78 {dimension_numbers = #tpu.dot_dimension_numbers<[1], [0], [0], [1], [0, 0, 1, 1], [], []>} : vector<8x4xbf16>, vector<4x288xbf16>, vector<8x288xf32> -> vector<8x288xf32>
    %126 = arith.addf %121, %125 : vector<8x288xf32>
    %c0_79 = arith.constant 0 : index
    %c19_80 = arith.constant 19 : index
    %127 = vector.load %arg7[%c0_79, %c19_80] : memref<4x342xbf16, #tpu.memory_space<vmem>>, vector<4x288xbf16>
    %c4 = arith.constant 4 : index
    %c0_81 = arith.constant 0 : index
    %c0_82 = arith.constant 0 : index
    %128 = vector.load %arg2[%c4, %c0_81, %c0_82] : memref<9x8x4xbf16, #tpu.memory_space<vmem>>, vector<1x8x4xbf16>
    %129 = vector.shape_cast %128 : vector<1x8x4xbf16> to vector<8x4xbf16>
    %cst_83 = arith.constant dense<0.000000e+00> : vector<8x288xf32>
    %130 = tpu.matmul %129, %127, %cst_83 {dimension_numbers = #tpu.dot_dimension_numbers<[1], [0], [0], [1], [0, 0, 1, 1], [], []>} : vector<8x4xbf16>, vector<4x288xbf16>, vector<8x288xf32> -> vector<8x288xf32>
    %131 = arith.addf %126, %130 : vector<8x288xf32>
    %c0_84 = arith.constant 0 : index
    %c20 = arith.constant 20 : index
    %132 = vector.load %arg7[%c0_84, %c20] : memref<4x342xbf16, #tpu.memory_space<vmem>>, vector<4x288xbf16>
    %c5 = arith.constant 5 : index
    %c0_85 = arith.constant 0 : index
    %c0_86 = arith.constant 0 : index
    %133 = vector.load %arg2[%c5, %c0_85, %c0_86] : memref<9x8x4xbf16, #tpu.memory_space<vmem>>, vector<1x8x4xbf16>
    %134 = vector.shape_cast %133 : vector<1x8x4xbf16> to vector<8x4xbf16>
    %cst_87 = arith.constant dense<0.000000e+00> : vector<8x288xf32>
    %135 = tpu.matmul %134, %132, %cst_87 {dimension_numbers = #tpu.dot_dimension_numbers<[1], [0], [0], [1], [0, 0, 1, 1], [], []>} : vector<8x4xbf16>, vector<4x288xbf16>, vector<8x288xf32> -> vector<8x288xf32>
    %136 = arith.addf %131, %135 : vector<8x288xf32>
    %c0_88 = arith.constant 0 : index
    %c36 = arith.constant 36 : index
    %137 = vector.load %arg7[%c0_88, %c36] : memref<4x342xbf16, #tpu.memory_space<vmem>>, vector<4x288xbf16>
    %c6 = arith.constant 6 : index
    %c0_89 = arith.constant 0 : index
    %c0_90 = arith.constant 0 : index
    %138 = vector.load %arg2[%c6, %c0_89, %c0_90] : memref<9x8x4xbf16, #tpu.memory_space<vmem>>, vector<1x8x4xbf16>
    %139 = vector.shape_cast %138 : vector<1x8x4xbf16> to vector<8x4xbf16>
    %cst_91 = arith.constant dense<0.000000e+00> : vector<8x288xf32>
    %140 = tpu.matmul %139, %137, %cst_91 {dimension_numbers = #tpu.dot_dimension_numbers<[1], [0], [0], [1], [0, 0, 1, 1], [], []>} : vector<8x4xbf16>, vector<4x288xbf16>, vector<8x288xf32> -> vector<8x288xf32>
    %141 = arith.addf %136, %140 : vector<8x288xf32>
    %c0_92 = arith.constant 0 : index
    %c37_93 = arith.constant 37 : index
    %142 = vector.load %arg7[%c0_92, %c37_93] : memref<4x342xbf16, #tpu.memory_space<vmem>>, vector<4x288xbf16>
    %c7 = arith.constant 7 : index
    %c0_94 = arith.constant 0 : index
    %c0_95 = arith.constant 0 : index
    %143 = vector.load %arg2[%c7, %c0_94, %c0_95] : memref<9x8x4xbf16, #tpu.memory_space<vmem>>, vector<1x8x4xbf16>
    %144 = vector.shape_cast %143 : vector<1x8x4xbf16> to vector<8x4xbf16>
    %cst_96 = arith.constant dense<0.000000e+00> : vector<8x288xf32>
    %145 = tpu.matmul %144, %142, %cst_96 {dimension_numbers = #tpu.dot_dimension_numbers<[1], [0], [0], [1], [0, 0, 1, 1], [], []>} : vector<8x4xbf16>, vector<4x288xbf16>, vector<8x288xf32> -> vector<8x288xf32>
    %146 = arith.addf %141, %145 : vector<8x288xf32>
    %c0_97 = arith.constant 0 : index
    %c38 = arith.constant 38 : index
    %147 = vector.load %arg7[%c0_97, %c38] : memref<4x342xbf16, #tpu.memory_space<vmem>>, vector<4x288xbf16>
    %c8 = arith.constant 8 : index
    %c0_98 = arith.constant 0 : index
    %c0_99 = arith.constant 0 : index
    %148 = vector.load %arg2[%c8, %c0_98, %c0_99] : memref<9x8x4xbf16, #tpu.memory_space<vmem>>, vector<1x8x4xbf16>
    %149 = vector.shape_cast %148 : vector<1x8x4xbf16> to vector<8x4xbf16>
    %cst_100 = arith.constant dense<0.000000e+00> : vector<8x288xf32>
    %150 = tpu.matmul %149, %147, %cst_100 {dimension_numbers = #tpu.dot_dimension_numbers<[1], [0], [0], [1], [0, 0, 1, 1], [], []>} : vector<8x4xbf16>, vector<4x288xbf16>, vector<8x288xf32> -> vector<8x288xf32>
    %151 = arith.addf %146, %150 : vector<8x288xf32>
    %c0_101 = arith.constant 0 : index
    %c0_102 = arith.constant 0 : index
    %152 = vector.load %arg3[%c0_101, %c0_102] : memref<8x1xf32, #tpu.memory_space<vmem>>, vector<8x1xf32>
    %153 = vector.broadcast %152 : vector<8x1xf32> to vector<8x288xf32>
    %154 = arith.addf %151, %153 : vector<8x288xf32>
    %cst_103 = arith.constant 0.000000e+00 : f32
    %155 = vector.broadcast %cst_103 : f32 to vector<8x288xf32>
    %156 = arith.maximumf %154, %155 : vector<8x288xf32>
    %cst_104 = arith.constant 0.000000e+00 : f32
    %157 = vector.shape_cast %18 : vector<1x288xi1> to vector<1x288xi1>
    %158 = vector.broadcast %157 : vector<1x288xi1> to vector<8x288xi1>
    %159 = vector.broadcast %cst_104 : f32 to vector<8x288xf32>
    %160 = arith.select %158, %156, %159 : vector<8x288xi1>, vector<8x288xf32>
    %161 = arith.truncf %160 : vector<8x288xf32> to vector<8x288xbf16>
    %cst_105 = arith.constant 0.000000e+00 : bf16
    %162 = vector.broadcast %cst_105 : bf16 to vector<8x19xbf16>
    %c0_106 = arith.constant 0 : index
    %c0_107 = arith.constant 0 : index
    %163 = vector.load %arg8[%c0_106, %c0_107] : memref<8x342xbf16, #tpu.memory_space<vmem>>, vector<8x19xbf16>
    tpu.vector_store %arg8[%c0_106, %c0_107], %162 {strides = array<i32>} : memref<8x342xbf16, #tpu.memory_space<vmem>>, vector<8x19xbf16>,
    %c0_108 = arith.constant 0 : index
    %c19_109 = arith.constant 19 : index
    %164 = vector.load %arg8[%c0_108, %c19_109] : memref<8x342xbf16, #tpu.memory_space<vmem>>, vector<8x288xbf16>
    tpu.vector_store %arg8[%c0_108, %c19_109], %161 {strides = array<i32>} : memref<8x342xbf16, #tpu.memory_space<vmem>>, vector<8x288xbf16>,
    %cst_110 = arith.constant 0.000000e+00 : bf16
    %165 = vector.broadcast %cst_110 : bf16 to vector<8x35xbf16>
    %c0_111 = arith.constant 0 : index
    %c307_112 = arith.constant 307 : index
    %166 = vector.load %arg8[%c0_111, %c307_112] : memref<8x342xbf16, #tpu.memory_space<vmem>>, vector<8x35xbf16>
    tpu.vector_store %arg8[%c0_111, %c307_112], %165 {strides = array<i32>} : memref<8x342xbf16, #tpu.memory_space<vmem>>, vector<8x35xbf16>,
    %cst_113 = arith.constant 0.000000e+00 : f32
    %167 = vector.broadcast %cst_113 : f32 to vector<8x288xf32>
    %c0_114 = arith.constant 0 : index
    %c0_115 = arith.constant 0 : index
    %168 = vector.load %arg8[%c0_114, %c0_115] : memref<8x342xbf16, #tpu.memory_space<vmem>>, vector<8x288xbf16>
    %c0_116 = arith.constant 0 : index
    %c0_117 = arith.constant 0 : index
    %c0_118 = arith.constant 0 : index
    %169 = vector.load %arg4[%c0_116, %c0_117, %c0_118] : memref<9x8x8xbf16, #tpu.memory_space<vmem>>, vector<1x8x8xbf16>
    %170 = vector.shape_cast %169 : vector<1x8x8xbf16> to vector<8x8xbf16>
    %cst_119 = arith.constant dense<0.000000e+00> : vector<8x288xf32>
    %171 = tpu.matmul %170, %168, %cst_119 {dimension_numbers = #tpu.dot_dimension_numbers<[1], [0], [0], [1], [0, 0, 1, 1], [], []>} : vector<8x8xbf16>, vector<8x288xbf16>, vector<8x288xf32> -> vector<8x288xf32>
    %172 = arith.addf %167, %171 : vector<8x288xf32>
    %c0_120 = arith.constant 0 : index
    %c1_121 = arith.constant 1 : index
    %173 = vector.load %arg8[%c0_120, %c1_121] : memref<8x342xbf16, #tpu.memory_space<vmem>>, vector<8x288xbf16>
    %c1_122 = arith.constant 1 : index
    %c0_123 = arith.constant 0 : index
    %c0_124 = arith.constant 0 : index
    %174 = vector.load %arg4[%c1_122, %c0_123, %c0_124] : memref<9x8x8xbf16, #tpu.memory_space<vmem>>, vector<1x8x8xbf16>
    %175 = vector.shape_cast %174 : vector<1x8x8xbf16> to vector<8x8xbf16>
    %cst_125 = arith.constant dense<0.000000e+00> : vector<8x288xf32>
    %176 = tpu.matmul %175, %173, %cst_125 {dimension_numbers = #tpu.dot_dimension_numbers<[1], [0], [0], [1], [0, 0, 1, 1], [], []>} : vector<8x8xbf16>, vector<8x288xbf16>, vector<8x288xf32> -> vector<8x288xf32>
    %177 = arith.addf %172, %176 : vector<8x288xf32>
    %c0_126 = arith.constant 0 : index
    %c2_127 = arith.constant 2 : index
    %178 = vector.load %arg8[%c0_126, %c2_127] : memref<8x342xbf16, #tpu.memory_space<vmem>>, vector<8x288xbf16>
    %c2_128 = arith.constant 2 : index
    %c0_129 = arith.constant 0 : index
    %c0_130 = arith.constant 0 : index
    %179 = vector.load %arg4[%c2_128, %c0_129, %c0_130] : memref<9x8x8xbf16, #tpu.memory_space<vmem>>, vector<1x8x8xbf16>
    %180 = vector.shape_cast %179 : vector<1x8x8xbf16> to vector<8x8xbf16>
    %cst_131 = arith.constant dense<0.000000e+00> : vector<8x288xf32>
    %181 = tpu.matmul %180, %178, %cst_131 {dimension_numbers = #tpu.dot_dimension_numbers<[1], [0], [0], [1], [0, 0, 1, 1], [], []>} : vector<8x8xbf16>, vector<8x288xbf16>, vector<8x288xf32> -> vector<8x288xf32>
    %182 = arith.addf %177, %181 : vector<8x288xf32>
    %c0_132 = arith.constant 0 : index
    %c18_133 = arith.constant 18 : index
    %183 = vector.load %arg8[%c0_132, %c18_133] : memref<8x342xbf16, #tpu.memory_space<vmem>>, vector<8x288xbf16>
    %c3_134 = arith.constant 3 : index
    %c0_135 = arith.constant 0 : index
    %c0_136 = arith.constant 0 : index
    %184 = vector.load %arg4[%c3_134, %c0_135, %c0_136] : memref<9x8x8xbf16, #tpu.memory_space<vmem>>, vector<1x8x8xbf16>
    %185 = vector.shape_cast %184 : vector<1x8x8xbf16> to vector<8x8xbf16>
    %cst_137 = arith.constant dense<0.000000e+00> : vector<8x288xf32>
    %186 = tpu.matmul %185, %183, %cst_137 {dimension_numbers = #tpu.dot_dimension_numbers<[1], [0], [0], [1], [0, 0, 1, 1], [], []>} : vector<8x8xbf16>, vector<8x288xbf16>, vector<8x288xf32> -> vector<8x288xf32>
    %187 = arith.addf %182, %186 : vector<8x288xf32>
    %c0_138 = arith.constant 0 : index
    %c19_139 = arith.constant 19 : index
    %188 = vector.load %arg8[%c0_138, %c19_139] : memref<8x342xbf16, #tpu.memory_space<vmem>>, vector<8x288xbf16>
    %c4_140 = arith.constant 4 : index
    %c0_141 = arith.constant 0 : index
    %c0_142 = arith.constant 0 : index
    %189 = vector.load %arg4[%c4_140, %c0_141, %c0_142] : memref<9x8x8xbf16, #tpu.memory_space<vmem>>, vector<1x8x8xbf16>
    %190 = vector.shape_cast %189 : vector<1x8x8xbf16> to vector<8x8xbf16>
    %cst_143 = arith.constant dense<0.000000e+00> : vector<8x288xf32>
    %191 = tpu.matmul %190, %188, %cst_143 {dimension_numbers = #tpu.dot_dimension_numbers<[1], [0], [0], [1], [0, 0, 1, 1], [], []>} : vector<8x8xbf16>, vector<8x288xbf16>, vector<8x288xf32> -> vector<8x288xf32>
    %192 = arith.addf %187, %191 : vector<8x288xf32>
    %c0_144 = arith.constant 0 : index
    %c20_145 = arith.constant 20 : index
    %193 = vector.load %arg8[%c0_144, %c20_145] : memref<8x342xbf16, #tpu.memory_space<vmem>>, vector<8x288xbf16>
    %c5_146 = arith.constant 5 : index
    %c0_147 = arith.constant 0 : index
    %c0_148 = arith.constant 0 : index
    %194 = vector.load %arg4[%c5_146, %c0_147, %c0_148] : memref<9x8x8xbf16, #tpu.memory_space<vmem>>, vector<1x8x8xbf16>
    %195 = vector.shape_cast %194 : vector<1x8x8xbf16> to vector<8x8xbf16>
    %cst_149 = arith.constant dense<0.000000e+00> : vector<8x288xf32>
    %196 = tpu.matmul %195, %193, %cst_149 {dimension_numbers = #tpu.dot_dimension_numbers<[1], [0], [0], [1], [0, 0, 1, 1], [], []>} : vector<8x8xbf16>, vector<8x288xbf16>, vector<8x288xf32> -> vector<8x288xf32>
    %197 = arith.addf %192, %196 : vector<8x288xf32>
    %c0_150 = arith.constant 0 : index
    %c36_151 = arith.constant 36 : index
    %198 = vector.load %arg8[%c0_150, %c36_151] : memref<8x342xbf16, #tpu.memory_space<vmem>>, vector<8x288xbf16>
    %c6_152 = arith.constant 6 : index
    %c0_153 = arith.constant 0 : index
    %c0_154 = arith.constant 0 : index
    %199 = vector.load %arg4[%c6_152, %c0_153, %c0_154] : memref<9x8x8xbf16, #tpu.memory_space<vmem>>, vector<1x8x8xbf16>
    %200 = vector.shape_cast %199 : vector<1x8x8xbf16> to vector<8x8xbf16>
    %cst_155 = arith.constant dense<0.000000e+00> : vector<8x288xf32>
    %201 = tpu.matmul %200, %198, %cst_155 {dimension_numbers = #tpu.dot_dimension_numbers<[1], [0], [0], [1], [0, 0, 1, 1], [], []>} : vector<8x8xbf16>, vector<8x288xbf16>, vector<8x288xf32> -> vector<8x288xf32>
    %202 = arith.addf %197, %201 : vector<8x288xf32>
    %c0_156 = arith.constant 0 : index
    %c37_157 = arith.constant 37 : index
    %203 = vector.load %arg8[%c0_156, %c37_157] : memref<8x342xbf16, #tpu.memory_space<vmem>>, vector<8x288xbf16>
    %c7_158 = arith.constant 7 : index
    %c0_159 = arith.constant 0 : index
    %c0_160 = arith.constant 0 : index
    %204 = vector.load %arg4[%c7_158, %c0_159, %c0_160] : memref<9x8x8xbf16, #tpu.memory_space<vmem>>, vector<1x8x8xbf16>
    %205 = vector.shape_cast %204 : vector<1x8x8xbf16> to vector<8x8xbf16>
    %cst_161 = arith.constant dense<0.000000e+00> : vector<8x288xf32>
    %206 = tpu.matmul %205, %203, %cst_161 {dimension_numbers = #tpu.dot_dimension_numbers<[1], [0], [0], [1], [0, 0, 1, 1], [], []>} : vector<8x8xbf16>, vector<8x288xbf16>, vector<8x288xf32> -> vector<8x288xf32>
    %207 = arith.addf %202, %206 : vector<8x288xf32>
    %c0_162 = arith.constant 0 : index
    %c38_163 = arith.constant 38 : index
    %208 = vector.load %arg8[%c0_162, %c38_163] : memref<8x342xbf16, #tpu.memory_space<vmem>>, vector<8x288xbf16>
    %c8_164 = arith.constant 8 : index
    %c0_165 = arith.constant 0 : index
    %c0_166 = arith.constant 0 : index
    %209 = vector.load %arg4[%c8_164, %c0_165, %c0_166] : memref<9x8x8xbf16, #tpu.memory_space<vmem>>, vector<1x8x8xbf16>
    %210 = vector.shape_cast %209 : vector<1x8x8xbf16> to vector<8x8xbf16>
    %cst_167 = arith.constant dense<0.000000e+00> : vector<8x288xf32>
    %211 = tpu.matmul %210, %208, %cst_167 {dimension_numbers = #tpu.dot_dimension_numbers<[1], [0], [0], [1], [0, 0, 1, 1], [], []>} : vector<8x8xbf16>, vector<8x288xbf16>, vector<8x288xf32> -> vector<8x288xf32>
    %212 = arith.addf %207, %211 : vector<8x288xf32>
    %c0_168 = arith.constant 0 : index
    %c0_169 = arith.constant 0 : index
    %213 = vector.load %arg5[%c0_168, %c0_169] : memref<8x1xf32, #tpu.memory_space<vmem>>, vector<8x1xf32>
    %214 = vector.broadcast %213 : vector<8x1xf32> to vector<8x288xf32>
    %215 = arith.addf %212, %214 : vector<8x288xf32>
    %cst_170 = arith.constant 0.000000e+00 : f32
    %216 = vector.broadcast %cst_170 : f32 to vector<8x288xf32>
    %217 = arith.maximumf %215, %216 : vector<8x288xf32>
    %c0_171 = arith.constant 0 : index
    %c0_172 = arith.constant 0 : index
    %c0_173 = arith.constant 0 : index
    %218 = vector.load %arg6[%c0_171, %c0_172, %c0_173] : memref<1x8x288xf32, #tpu.memory_space<vmem>>, vector<1x8x288xf32>
    %219 = vector.shape_cast %218 : vector<1x8x288xf32> to vector<8x288xf32>
    %220 = vector.shape_cast %217 : vector<8x288xf32> to vector<1x8x288xf32>
    tpu.vector_store %arg6[%c0_171, %c0_172, %c0_173], %220 {strides = array<i32>} : memref<1x8x288xf32, #tpu.memory_space<vmem>>, vector<1x8x288xf32>,
    return
  }
  func.func @transform_0(%arg0: i32) -> (i32, i32, i32, i32) {
    %c0_i32 = arith.constant 0 : i32
    %c0_i32_0 = arith.constant 0 : i32
    %c0_i32_1 = arith.constant 0 : i32
    %c0_i32_2 = arith.constant 0 : i32
    return %arg0, %c0_i32, %c0_i32_0, %c0_i32_1 : i32, i32, i32, i32
  }
  func.func @transform_1(%arg0: i32) -> (i32, i32, i32) {
    %c0_i32 = arith.constant 0 : i32
    %c0_i32_0 = arith.constant 0 : i32
    %c0_i32_1 = arith.constant 0 : i32
    %c0_i32_2 = arith.constant 0 : i32
    return %c0_i32, %c0_i32_0, %c0_i32_1 : i32, i32, i32
  }
  func.func @transform_2(%arg0: i32) -> (i32, i32) {
    %c0_i32 = arith.constant 0 : i32
    %c0_i32_0 = arith.constant 0 : i32
    %c0_i32_1 = arith.constant 0 : i32
    return %c0_i32, %c0_i32_0 : i32, i32
  }
  func.func @transform_3(%arg0: i32) -> (i32, i32, i32) {
    %c0_i32 = arith.constant 0 : i32
    %c0_i32_0 = arith.constant 0 : i32
    %c0_i32_1 = arith.constant 0 : i32
    %c0_i32_2 = arith.constant 0 : i32
    return %c0_i32, %c0_i32_0, %c0_i32_1 : i32, i32, i32
  }
  func.func @transform_4(%arg0: i32) -> (i32, i32) {
    %c0_i32 = arith.constant 0 : i32
    %c0_i32_0 = arith.constant 0 : i32
    %c0_i32_1 = arith.constant 0 : i32
    return %c0_i32, %c0_i32_0 : i32, i32
  }
  func.func @transform_5(%arg0: i32) -> (i32, i32, i32) {
    %c0_i32 = arith.constant 0 : i32
    %c0_i32_0 = arith.constant 0 : i32
    %c0_i32_1 = arith.constant 0 : i32
    return %arg0, %c0_i32, %c0_i32_0 : i32, i32, i32
  }
}

</mosaic_0001>

<llo_original>
// kernel: _lambda_.1
$region0: #{_lambda_.1}
  #allocation0 [shape = 'u32[]', space=smem, size = 0x4, offset = 0x4, fixed_abs, tag = 'smem constant byte address 0x4 - core index']
  #allocation1 [shape = 'u32[144,128]{1,0:T(1,128)}', space=vmem, size = 0x12000, scoped, tag = 'internal scratch']
  #allocation2 [shape = 'bf16[4,342]{1,0:T(4,128)(2,1)}', space=vmem, size = 0xc00, scoped, tag = 'scratch operand']
  #allocation3 [shape = 'bf16[8,342]{1,0:T(8,128)(2,1)}', space=vmem, size = 0x1800, scoped, tag = 'scratch operand']
  %s0 = inlined_call_operand.hbm [shape: f32[2,4,16,16], index: 0, kind: input, shape index: {}]
  %s1 = inlined_call_operand.hbm [shape: bf16[9,8,4], index: 1, kind: input, shape index: {}]
  %s2 = inlined_call_operand.hbm [shape: f32[8,1], index: 2, kind: input, shape index: {}]
  %s3 = inlined_call_operand.hbm [shape: bf16[9,8,8], index: 3, kind: input, shape index: {}]
  %s4 = inlined_call_operand.hbm [shape: f32[8,1], index: 4, kind: input, shape index: {}]
  %s5 = inlined_call_operand.vmem [shape: f32[2,8,288], index: 5, kind: output, shape index: {}]
  %s6 = sld [smem:[#allocation0]]
  $region73: #{_lambda_.1} parent=0
    _
  %s8 = ssub.s32 1, %s6
  %s9 = scalar_select 0, %s8, %s6
  $region1: #{_lambda_.1} parent=0
    #allocation4 [shape = 'u8[65536]{0}', space=vmem, size = 0x10000, scoped, tag = 'input window, operand 0']
    #allocation5 [shape = 's32[2]{0}', space=sflag, size = 0x8, scoped, tag = 'scoped memory for _lambda_.1']
    #allocation6 [shape = 'u8[18432]{0}', space=vmem, size = 0x4800, scoped, tag = 'input window, operand 1, single buffered']
    #allocation7 [shape = 's32[1]{0}', space=sflag, size = 0x4, scoped, tag = 'scoped memory for _lambda_.1']
    #allocation8 [shape = 'u8[4096]{0}', space=vmem, size = 0x1000, scoped, tag = 'input window, operand 2, single buffered']
    #allocation9 [shape = 'u8[18432]{0}', space=vmem, size = 0x4800, scoped, tag = 'input window, operand 3, single buffered']
    #allocation10 [shape = 's32[1]{0}', space=sflag, size = 0x4, scoped, tag = 'scoped memory for _lambda_.1']
    #allocation11 [shape = 'u8[4096]{0}', space=vmem, size = 0x1000, scoped, tag = 'input window, operand 4, single buffered']
    %10 = vsyncpa [#allocation5], 0
    %s11 = scalar_lea.sflag [#allocation5], 1
    %12 = vsyncpa %s11, 0
    %13 = vsyncpa [#allocation7], 0
    %14 = vsyncpa [#allocation10], 0
    loop: start=0, step=1, limit=4
    $region2: #{_lambda_.1} parent=1 // loop_pre_header
      _
    $region3: #{_lambda_.1} parent=1 // loop_header
      %s16 = sphi 0, %s20
      %p17 = scmp.ge.s32.totalorder %s16, 4
      %s26 = sphi 0, %s28
      %s29 = sphi 0, %s26
      %s30 = sphi 0, %s29
      %s46 = sphi 0, %s30
      %s50 = sphi 0, %s50
      %s52 = sphi 0, %s50
      %s53 = sphi 0, %s52
      %s67 = sphi 0, %s53
      %s71 = sphi 0, %s71
      %s73 = sphi 0, %s71
      %s74 = sphi 0, %s73
      %s88 = sphi 0, %s74
      %s92 = sphi 0, %s92
      %s94 = sphi 0, %s92
      %s95 = sphi 0, %s94
      %s109 = sphi 0, %s95
      %s113 = sphi 0, %s113
      %s115 = sphi 0, %s113
      %s116 = sphi 0, %s115
      %s130 = sphi 0, %s116
      %s136 = sphi 0, %s138
      %s139 = sphi 0, %s136
      %s140 = sphi 0, %s139
      %s156 = sphi 0, %s140
    $region4: #{_lambda_.1} parent=1 // loop_header_branch
      %19 = sbr.rel (%p17) target = $region8
    $region5: #{_lambda_.1} parent=1 // loop_body
      %s21 = ssub.s32 %s16, 1
      %s22 = ssub.s32 %s16, 2
      %s23 = sadd.s32 %s16, 1
      %s24 = ssub.s32 %s16, %s23
      %p25 = scmp.eq.s32.totalorder %s24, 0
      %s27 = sadd.s32 %s26, 1
      %s28 = scalar_select %p25, %s26, %s27
      %p31 = pneg %p25
      %p32 = scmp.eq.s32.totalorder %s16, 1
      %p33 = por %p31, %p32
      %p34 = scmp.ne.s32.totalorder %s26, %s29
      %p35 = scmp.eq.s32.totalorder %s16, 0
      %p36 = por %p34, %p35
      %p37 = scmp.ne.s32.totalorder %s26, %s29
      %p38 = scmp.eq.s32.totalorder %s21, 1
      %p39 = por %p37, %p38
      %p40 = scmp.ne.s32.totalorder %s29, %s30
      %p41 = scmp.eq.s32.totalorder %s21, 0
      %p42 = por %p40, %p41
      %p43 = scmp.ne.s32.totalorder %s29, %s30
      %p44 = scmp.eq.s32.totalorder %s22, 1
      %p45 = por %p43, %p44
      %p47 = scmp.ne.s32.totalorder %s30, %s46
      %p48 = scmp.eq.s32.totalorder %s22, 0
      %p49 = por %p47, %p48
      %s51 = sadd.s32 %s50, 1
      %p54 = scmp.eq.s32.totalorder %s16, 1
      %p55 = scmp.ne.s32.totalorder %s50, %s52
      %p56 = scmp.eq.s32.totalorder %s16, 0
      %p57 = por %p55, %p56
      %p58 = scmp.ne.s32.totalorder %s50, %s52
      %p59 = scmp.eq.s32.totalorder %s21, 1
      %p60 = por %p58, %p59
      %p61 = scmp.ne.s32.totalorder %s52, %s53
      %p62 = scmp.eq.s32.totalorder %s21, 0
      %p63 = por %p61, %p62
      %p64 = scmp.ne.s32.totalorder %s52, %s53
      %p65 = scmp.eq.s32.totalorder %s22, 1
      %p66 = por %p64, %p65
      %p68 = scmp.ne.s32.totalorder %s53, %s67
      %p69 = scmp.eq.s32.totalorder %s22, 0
      %p70 = por %p68, %p69
      %s72 = sadd.s32 %s71, 1
      %p75 = scmp.eq.s32.totalorder %s16, 1
      %p76 = scmp.ne.s32.totalorder %s71, %s73
      %p77 = scmp.eq.s32.totalorder %s16, 0
      %p78 = por %p76, %p77
      %p79 = scmp.ne.s32.totalorder %s71, %s73
      %p80 = scmp.eq.s32.totalorder %s21, 1
      %p81 = por %p79, %p80
      %p82 = scmp.ne.s32.totalorder %s73, %s74
      %p83 = scmp.eq.s32.totalorder %s21, 0
      %p84 = por %p82, %p83
      %p85 = scmp.ne.s32.totalorder %s73, %s74
      %p86 = scmp.eq.s32.totalorder %s22, 1
      %p87 = por %p85, %p86
      %p89 = scmp.ne.s32.totalorder %s74, %s88
      %p90 = scmp.eq.s32.totalorder %s22, 0
      %p91 = por %p89, %p90
      %s93 = sadd.s32 %s92, 1
      %p96 = scmp.eq.s32.totalorder %s16, 1
      %p97 = scmp.ne.s32.totalorder %s92, %s94
      %p98 = scmp.eq.s32.totalorder %s16, 0
      %p99 = por %p97, %p98
      %p100 = scmp.ne.s32.totalorder %s92, %s94
      %p101 = scmp.eq.s32.totalorder %s21, 1
      %p102 = por %p100, %p101
      %p103 = scmp.ne.s32.totalorder %s94, %s95
      %p104 = scmp.eq.s32.totalorder %s21, 0
      %p105 = por %p103, %p104
      %p106 = scmp.ne.s32.totalorder %s94, %s95
      %p107 = scmp.eq.s32.totalorder %s22, 1
      %p108 = por %p106, %p107
      %p110 = scmp.ne.s32.totalorder %s95, %s109
      %p111 = scmp.eq.s32.totalorder %s22, 0
      %p112 = por %p110, %p111
      %s114 = sadd.s32 %s113, 1
      %p117 = scmp.eq.s32.totalorder %s16, 1
      %p118 = scmp.ne.s32.totalorder %s113, %s115
      %p119 = scmp.eq.s32.totalorder %s16, 0
      %p120 = por %p118, %p119
      %p121 = scmp.ne.s32.totalorder %s113, %s115
      %p122 = scmp.eq.s32.totalorder %s21, 1
      %p123 = por %p121, %p122
      %p124 = scmp.ne.s32.totalorder %s115, %s116
      %p125 = scmp.eq.s32.totalorder %s21, 0
      %p126 = por %p124, %p125
      %p127 = scmp.ne.s32.totalorder %s115, %s116
      %p128 = scmp.eq.s32.totalorder %s22, 1
      %p129 = por %p127, %p128
      %p131 = scmp.ne.s32.totalorder %s116, %s130
      %p132 = scmp.eq.s32.totalorder %s22, 0
      %p133 = por %p131, %p132
      %s134 = ssub.s32 %s16, %s23
      %p135 = scmp.eq.s32.totalorder %s134, 0
      %s137 = sadd.s32 %s136, 1
      %s138 = scalar_select %p135, %s136, %s137
      %p141 = pneg %p135
      %p142 = scmp.eq.s32.totalorder %s16, 1
      %p143 = por %p141, %p142
      %p144 = scmp.ne.s32.totalorder %s136, %s139
      %p145 = scmp.eq.s32.totalorder %s16, 0
      %p146 = por %p144, %p145
      %p147 = scmp.ne.s32.totalorder %s136, %s139
      %p148 = scmp.eq.s32.totalorder %s21, 1
      %p149 = por %p147, %p148
      %p150 = scmp.ne.s32.totalorder %s139, %s140
      %p151 = scmp.eq.s32.totalorder %s21, 0
      %p152 = por %p150, %p151
      %p153 = scmp.ne.s32.totalorder %s139, %s140
      %p154 = scmp.eq.s32.totalorder %s22, 1
      %p155 = por %p153, %p154
      %p157 = scmp.ne.s32.totalorder %s140, %s156
      %p158 = scmp.eq.s32.totalorder %s22, 0
      %p159 = por %p157, %p158
      %p160 = scmp.le.s32.totalorder 1, %s16
      %p161 = scmp.lt.s32.totalorder %s16, 3
      %p162 = pnand %p160, %p161
      %p163 = pneg %p162
      // Predicated region
      $region9: #{_lambda_.1} parent=5 // pred_check
        _
      $region10: #{_lambda_.1} parent=5 // pred_check_branch
        %165 = sbr.rel (%p162) target = $region12
      $region11: #{_lambda_.1} parent=5 // pred_region
        %s166 = ssub.s32 %s16, 1
        // Predicated region
        $region13: #{_lambda_.1} parent=11 // pred_check
          %p167 = pneg %p63
        $region14: #{_lambda_.1} parent=11 // pred_check_branch
          %169 = sbr.rel (%p167) target = $region16
        $region15: #{_lambda_.1} parent=11 // pred_region
          %s171 = ssub.s32 576, 576
          %172 = vsyncadd [#allocation7], %s171
          %s173 = sshll.u32 [#allocation6], 4
          %s174 = int_to_ptr.vmem [resolvable:$true] %s173
          %179 = dma.hbm_to_vmem [thread:$0]  %s1, 576, %s174, [#allocation7], 64, 64, 4
        $region16: #{_lambda_.1} parent=11 // pred_fallthru
          _
        // Predicated region
        $region17: #{_lambda_.1} parent=11 // pred_check
          %p180 = pneg %p84
        $region18: #{_lambda_.1} parent=11 // pred_check_branch
          %182 = sbr.rel (%p180) target = $region20
        $region19: #{_lambda_.1} parent=11 // pred_region
          %s184 = ssub.s32 128, 128
          %185 = vsyncadd [#allocation7], %s184
          %s187 = sshll.u32 [#allocation8], 4
          %s188 = int_to_ptr.vmem [resolvable:$true] %s187
          %190 = dma.hbm_to_vmem [thread:$0]  %s2, 128, %s188, [#allocation7]
        $region20: #{_lambda_.1} parent=11 // pred_fallthru
          _
        // Predicated region
        $region21: #{_lambda_.1} parent=11 // pred_check
          %p191 = pneg %p105
        $region22: #{_lambda_.1} parent=11 // pred_check_branch
          %193 = sbr.rel (%p191) target = $region24
        $region23: #{_lambda_.1} parent=11 // pred_region
          %s195 = ssub.s32 576, 576
          %196 = vsyncadd [#allocation10], %s195
          %s197 = sshll.u32 [#allocation9], 4
          %s198 = int_to_ptr.vmem [resolvable:$true] %s197
          %203 = dma.hbm_to_vmem [thread:$0]  %s3, 576, %s198, [#allocation10], 64, 64, 4
        $region24: #{_lambda_.1} parent=11 // pred_fallthru
          _
        // Predicated region
        $region25: #{_lambda_.1} parent=11 // pred_check
          %p204 = pneg %p126
        $region26: #{_lambda_.1} parent=11 // pred_check_branch
          %206 = sbr.rel (%p204) target = $region28
        $region27: #{_lambda_.1} parent=11 // pred_region
          %s208 = ssub.s32 128, 128
          %209 = vsyncadd [#allocation10], %s208
          %s211 = sshll.u32 [#allocation11], 4
          %s212 = int_to_ptr.vmem [resolvable:$true] %s211
          %214 = dma.hbm_to_vmem [thread:$0]  %s4, 128, %s212, [#allocation10]
        $region28: #{_lambda_.1} parent=11 // pred_fallthru
          _
      $region12: #{_lambda_.1} parent=5 // pred_fallthru
        _
      %p215 = scmp.lt.s32.totalorder %s16, 2
      // Predicated region
      $region29: #{_lambda_.1} parent=5 // pred_check
        %p216 = pneg %p215
      $region30: #{_lambda_.1} parent=5 // pred_check_branch
        %218 = sbr.rel (%p216) target = $region32
      $region31: #{_lambda_.1} parent=5 // pred_region
        // Predicated region
        $region33: #{_lambda_.1} parent=31 // pred_check
          %p219 = pneg %p36
        $region34: #{_lambda_.1} parent=31 // pred_check_branch
          %221 = sbr.rel (%p219) target = $region36
        $region35: #{_lambda_.1} parent=31 // pred_region
          %s222 = sand.u32 %s26, 1
          %s223 = scalar_lea.sflag [#allocation5], %s222
          %s224 = sand.u32 %s26, 1
          %s225 = smul.addr %s224, 64
          %s226 = scalar_lea.vmem [#allocation4], %s225
          %s228 = ssub.s32 1024, 1024
          %229 = vsyncadd %s223, %s228
          %s230 = smul.addr %s16, 8
          %s231 = smul.addr %s230, 128
          %s232 = scalar_lea.hbm %s0, %s231
          %s233 = sshll.u32 %s226, 4
          %s234 = int_to_ptr.vmem [resolvable:$true] %s233
          %239 = dma.hbm_to_vmem [thread:$0]  %s232, 1024, %s234, %s223, 128, 128, 8
        $region36: #{_lambda_.1} parent=31 // pred_fallthru
          _
      $region32: #{_lambda_.1} parent=5 // pred_fallthru
        _
      %p240 = scmp.le.s32.totalorder 1, %s16
      %p241 = scmp.lt.s32.totalorder %s16, 3
      %p242 = pnand %p240, %p241
      %p243 = pneg %p242
      // Predicated region
      $region37: #{_lambda_.1} parent=5 // pred_check
        _
      $region38: #{_lambda_.1} parent=5 // pred_check_branch
        %245 = sbr.rel (%p242) target = $region40
      $region39: #{_lambda_.1} parent=5 // pred_region
        %s246 = ssub.s32 %s16, 1
        %s247 = sand.u32 %s29, 1
        %s248 = scalar_lea.sflag [#allocation5], %s247
        %s249 = sand.u32 %s29, 1
        %s250 = smul.addr %s249, 64
        %s251 = scalar_lea.vmem [#allocation4], %s250
        // Predicated region
        $region41: #{_lambda_.1} parent=39 // pred_check
          %p252 = pneg %p42
        $region42: #{_lambda_.1} parent=39 // pred_check_branch
          %254 = sbr.rel (%p252) target = $region44
        $region43: #{_lambda_.1} parent=39 // pred_region
          %255 = dma.done %s248, 1024
        $region44: #{_lambda_.1} parent=39 // pred_fallthru
          _
        // Predicated region
        $region45: #{_lambda_.1} parent=39 // pred_check
          %p256 = pneg %p63
        $region46: #{_lambda_.1} parent=39 // pred_check_branch
          %258 = sbr.rel (%p256) target = $region48
        $region47: #{_lambda_.1} parent=39 // pred_region
          %259 = dma.done [#allocation7], 576
        $region48: #{_lambda_.1} parent=39 // pred_fallthru
          _
        // Predicated region
        $region49: #{_lambda_.1} parent=39 // pred_check
          %p260 = pneg %p84
        $region50: #{_lambda_.1} parent=39 // pred_check_branch
          %262 = sbr.rel (%p260) target = $region52
        $region51: #{_lambda_.1} parent=39 // pred_region
          %263 = dma.done [#allocation7], 128
        $region52: #{_lambda_.1} parent=39 // pred_fallthru
          _
        // Predicated region
        $region53: #{_lambda_.1} parent=39 // pred_check
          %p264 = pneg %p105
        $region54: #{_lambda_.1} parent=39 // pred_check_branch
          %266 = sbr.rel (%p264) target = $region56
        $region55: #{_lambda_.1} parent=39 // pred_region
          %267 = dma.done [#allocation10], 576
        $region56: #{_lambda_.1} parent=39 // pred_fallthru
          _
        // Predicated region
        $region57: #{_lambda_.1} parent=39 // pred_check
          %p268 = pneg %p126
        $region58: #{_lambda_.1} parent=39 // pred_check_branch
          %270 = sbr.rel (%p268) target = $region60
        $region59: #{_lambda_.1} parent=39 // pred_region
          %271 = dma.done [#allocation10], 128
        $region60: #{_lambda_.1} parent=39 // pred_fallthru
          _
        %s272 = sand.u32 %s29, 1
        %s273 = scalar_lea.sflag [#allocation5], %s272
        %s274 = sand.u32 %s29, 1
        %s275 = smul.addr %s274, 64
        %s276 = scalar_lea.vmem [#allocation4], %s275
        %p277 = pneg %p42
        %p278 = pneg %p39
        %p279 = pneg %p63
        %p280 = pneg %p60
        %p281 = pneg %p84
        %p282 = pneg %p81
        %p283 = pneg %p105
        %p284 = pneg %p102
        %p285 = pneg %p126
        %p286 = pneg %p123
        %p287 = pneg %p152
        %p288 = pneg %p149
        %p289 = scmp.lt.s32.totalorder %s21, 1
        %s290 = scalar_select %p289, %s21, 1
        %s291 = smul.addr %s290, 3
        %s292 = smul.addr %s291, 8
        %s293 = scalar_lea.vmem %s5, %s292
        %p294 = scmp.lt.s32.totalorder %s21, 1
        %s295 = scalar_select %p294, %s21, 1
        %s296 = smul.addr %s295, 3
        %s297 = smul.addr %s296, 8
        %s298 = scalar_lea.vmem %s5, %s297
        %v300 = vlaneseq
        %v301 = vand.u32 %v300, 127
        %v302 = vadd.s32 %v301, 128
        %v303 = vadd.s32 %v301, 256
        %vm304 = vcmp.lt.s32.totalorder %v301, 0
        %v305 = vsub.s32 0, %v301
        %v306 = vsel %vm304, %v305, %v301
        %v307 = vmul.u32.u64.compose %v306, 3817748708
        %v308 = vextract.low.u32 %v307
        %v309 = vextract.high.u32 %v307
        %v310 = vshrl.u32 %v309, 4
        %v311 = vmul.u32 %v310, 18
        %v312 = vsub.s32 %v306, %v311
        %v313 = vsub.s32 0, %v312
        %v314 = vsel %vm304, %v313, %v312
        %vm315 = vcmp.lt.s32.totalorder %v302, 0
        %v316 = vsub.s32 0, %v302
        %v317 = vsel %vm315, %v316, %v302
        %v318 = vmul.u32.u64.compose %v317, 3817748708
        %v319 = vextract.low.u32 %v318
        %v320 = vextract.high.u32 %v318
        %v321 = vshrl.u32 %v320, 4
        %v322 = vmul.u32 %v321, 18
        %v323 = vsub.s32 %v317, %v322
        %v324 = vsub.s32 0, %v323
        %v325 = vsel %vm315, %v324, %v323
        %vm326 = vcmp.lt.s32.totalorder %v303, 0
        %v327 = vsub.s32 0, %v303
        %v328 = vsel %vm326, %v327, %v303
        %v329 = vmul.u32.u64.compose %v328, 3817748708
        %v330 = vextract.low.u32 %v329
        %v331 = vextract.high.u32 %v329
        %v332 = vshrl.u32 %v331, 4
        %v333 = vmul.u32 %v332, 18
        %v334 = vsub.s32 %v328, %v333
        %v335 = vsub.s32 0, %v334
        %v336 = vsel %vm326, %v335, %v334
        %vm337 = vcmp.ne.s32.totalorder %v314, 0
        %vm338 = vcmp.ne.s32.totalorder %v325, 0
        %vm339 = vcmp.ne.s32.totalorder %v336, 0
        %vm340 = vcmp.lt.s32.totalorder %v314, 0
        %vm341 = vcmp.lt.s32.totalorder %v325, 0
        %vm342 = vcmp.lt.s32.totalorder %v336, 0
        %vm343 = vmand %vm340, %vm337
        %vm344 = vmand %vm341, %vm338
        %vm345 = vmand %vm342, %vm339
        %v346 = vadd.s32 %v314, 18
        %v347 = vadd.s32 %v325, 18
        %v348 = vadd.s32 %v336, 18
        %v349 = vsel %vm343, %v346, %v314
        %v350 = vsel %vm344, %v347, %v325
        %v351 = vsel %vm345, %v348, %v336
        %vm352 = vcmp.lt.s32.totalorder %v349, 16
        %vm353 = vcmp.lt.s32.totalorder %v350, 16
        %vm354 = vcmp.lt.s32.totalorder %v351, 16
        %v355 = vld [vmem:[%s251] sm:$0xff]
        %v356 = vld [vmem:[%s251 + $0x8] sm:$0xff]
        %v357 = vld [vmem:[%s251 + $0x10] sm:$0xff]
        %v358 = vld [vmem:[%s251 + $0x18] sm:$0xff]
        %v359 = vld [vmem:[%s251 + $0x20] sm:$0xff]
        %v360 = vld [vmem:[%s251 + $0x28] sm:$0xff]
        %v361 = vld [vmem:[%s251 + $0x30] sm:$0xff]
        %v362 = vld [vmem:[%s251 + $0x38] sm:$0xff]
        %v363 = vpack.c.bf16 %v356, %v355
        %v364 = vpack.c.bf16 %v358, %v357
        %v365 = vpack.c.bf16 %v360, %v359
        %v366 = vpack.c.bf16 %v362, %v361
        %vm367 = vcmask 148480
        %368 = vst.msk [vmem:[#allocation2] sm:$0x3] %vm367, 0
        %v374 = vunpack.c.l.s4 1983009808
        %v375 = vunpack.c.0.s8 %v374
        %v376 = vlaneseq
        %v377 = vshrl.u32 %v376, 7
        %v378 = vsub.s32 %v375, %v377
        %v379 = vrot.slane %v363, %v378
        %v381 = vunpack.c.l.s4 1983009808
        %v382 = vunpack.c.0.s8 %v381
        %v383 = vlaneseq
        %v384 = vshrl.u32 %v383, 7
        %v385 = vsub.s32 %v382, %v384
        %v386 = vrot.slane %v364, %v385
        %v388 = vunpack.c.l.s4 1983009808
        %v389 = vunpack.c.0.s8 %v388
        %v390 = vlaneseq
        %v391 = vshrl.u32 %v390, 7
        %v392 = vsub.s32 %v389, %v391
        %v393 = vrot.slane %v365, %v392
        %v395 = vunpack.c.l.s4 1983009808
        %v396 = vunpack.c.0.s8 %v395
        %v397 = vlaneseq
        %v398 = vshrl.u32 %v397, 7
        %v399 = vsub.s32 %v396, %v398
        %v400 = vrot.slane %v366, %v399
        %v402 = vunpack.c.l.s4 1983009808
        %v403 = vunpack.c.0.s8 %v402
        %v404 = vlaneseq
        %v405 = vshrl.u32 %v404, 7
        %v406 = vsub.s32 %v403, %v405
        %v407 = vrot.slane %v379, %v406
        %v409 = vunpack.c.l.s4 1983009808
        %v410 = vunpack.c.0.s8 %v409
        %v411 = vlaneseq
        %v412 = vshrl.u32 %v411, 7
        %v413 = vsub.s32 %v410, %v412
        %v414 = vrot.slane %v386, %v413
        %v416 = vunpack.c.l.s4 1983009808
        %v417 = vunpack.c.0.s8 %v416
        %v418 = vlaneseq
        %v419 = vshrl.u32 %v418, 7
        %v420 = vsub.s32 %v417, %v419
        %v421 = vrot.slane %v393, %v420
        %v423 = vunpack.c.l.s4 1983009808
        %v424 = vunpack.c.0.s8 %v423
        %v425 = vlaneseq
        %v426 = vshrl.u32 %v425, 7
        %v427 = vsub.s32 %v424, %v426
        %v428 = vrot.slane %v400, %v427
        %v429 = vunpack.c.l.b16 %v407
        %v430 = vunpack.c.l.b16 %v414
        %v431 = vunpack.c.l.b16 %v421
        %v432 = vunpack.c.l.b16 %v428
        %v433 = vrot.slane %v430, 7
        %vm434 = vcmask 1041409
        %v435 = vsel %vm434, %v433, %v429
        %v436 = vrot.slane %v431, 6
        %vm437 = vcmask 1042434
        %v438 = vsel %vm437, %v436, %v435
        %v439 = vrot.slane %v432, 5
        %vm440 = vcmask 1043459
        %v441 = vsel %vm440, %v439, %v438
        %v442 = vpack.c.b16 %v441, %v441
        %v444 = vunpack.c.l.s4 1983009808
        %v445 = vunpack.c.0.s8 %v444
        %v446 = vlaneseq
        %v447 = vshrl.u32 %v446, 7
        %v448 = vsub.s32 %v445, %v447
        %v449 = vrot.slane %v442, %v448
        %450 = vrot.lane.b32.xlu0 %v449, 19
        %v451 = vpop.permute.xlu0 %450
        %vm453 = vcmask 279704
        %454 = vst.msk [vmem:[#allocation2] sm:$0x3] %vm453, %v451
        %vm455 = vcmask 296216
        %456 = vst.msk [vmem:[#allocation2] sm:$0x3] %vm455, 0
        %v457 = vrot.slane %v429, 1
        %v458 = vsel %vm434, %v430, %v457
        %v459 = vrot.slane %v431, 7
        %v460 = vsel %vm437, %v459, %v458
        %v461 = vrot.slane %v432, 6
        %v462 = vsel %vm440, %v461, %v460
        %v463 = vpack.c.b16 %v462, %v462
        %v465 = vunpack.c.l.s4 1983009808
        %v466 = vunpack.c.0.s8 %v465
        %v467 = vlaneseq
        %v468 = vshrl.u32 %v467, 7
        %v469 = vsub.s32 %v466, %v468
        %v470 = vrot.slane %v463, %v469
        %471 = vrot.lane.b32.xlu0 %v470, 37
        %v472 = vpop.permute.xlu0 %471
        %vm474 = vcmask 427304
        %475 = vst.msk [vmem:[#allocation2] sm:$0x3] %vm474, %v472
        %vm476 = vcmask 443816
        %477 = vst.msk [vmem:[#allocation2] sm:$0x3] %vm476, 0
        %v478 = vrot.slane %v429, 2
        %v479 = vrot.slane %v430, 1
        %v480 = vsel %vm434, %v479, %v478
        %v481 = vsel %vm437, %v431, %v480
        %v482 = vrot.slane %v432, 7
        %v483 = vsel %vm440, %v482, %v481
        %v484 = vpack.c.b16 %v483, %v483
        %v486 = vunpack.c.l.s4 1983009808
        %v487 = vunpack.c.0.s8 %v486
        %v488 = vlaneseq
        %v489 = vshrl.u32 %v488, 7
        %v490 = vsub.s32 %v487, %v489
        %v491 = vrot.slane %v484, %v490
        %492 = vrot.lane.b32.xlu0 %v491, 55
        %v493 = vpop.permute.xlu0 %492
        %vm495 = vcmask 574904
        %496 = vst.msk [vmem:[#allocation2] sm:$0x3] %vm495, %v493
        %vm497 = vcmask 591416
        %498 = vst.msk [vmem:[#allocation2] sm:$0x3] %vm497, 0
        %v499 = vrot.slane %v429, 3
        %v500 = vrot.slane %v430, 2
        %v501 = vsel %vm434, %v500, %v499
        %v502 = vrot.slane %v431, 1
        %v503 = vsel %vm437, %v502, %v501
        %v504 = vsel %vm440, %v432, %v503
        %v505 = vpack.c.b16 %v504, %v504
        %v507 = vunpack.c.l.s4 1983009808
        %v508 = vunpack.c.0.s8 %v507
        %v509 = vlaneseq
        %v510 = vshrl.u32 %v509, 7
        %v511 = vsub.s32 %v508, %v510
        %v512 = vrot.slane %v505, %v511
        %513 = vrot.lane.b32.xlu0 %v512, 73
        %v514 = vpop.permute.xlu0 %513
        %vm516 = vcmask 722504
        %517 = vst.msk [vmem:[#allocation2] sm:$0x3] %vm516, %v514
        %vm518 = vcmask 739016
        %519 = vst.msk [vmem:[#allocation2] sm:$0x3] %vm518, 0
        %v520 = vcombine.high %v379, %v379
        %v521 = vcombine.high %v386, %v386
        %v522 = vcombine.high %v393, %v393
        %v523 = vcombine.high %v400, %v400
        %v525 = vunpack.c.l.s4 1983009808
        %v526 = vunpack.c.0.s8 %v525
        %v527 = vlaneseq
        %v528 = vshrl.u32 %v527, 7
        %v529 = vsub.s32 %v526, %v528
        %v530 = vrot.slane %v520, %v529
        %v532 = vunpack.c.l.s4 1983009808
        %v533 = vunpack.c.0.s8 %v532
        %v534 = vlaneseq
        %v535 = vshrl.u32 %v534, 7
        %v536 = vsub.s32 %v533, %v535
        %v537 = vrot.slane %v521, %v536
        %v539 = vunpack.c.l.s4 1983009808
        %v540 = vunpack.c.0.s8 %v539
        %v541 = vlaneseq
        %v542 = vshrl.u32 %v541, 7
        %v543 = vsub.s32 %v540, %v542
        %v544 = vrot.slane %v522, %v543
        %v546 = vunpack.c.l.s4 1983009808
        %v547 = vunpack.c.0.s8 %v546
        %v548 = vlaneseq
        %v549 = vshrl.u32 %v548, 7
        %v550 = vsub.s32 %v547, %v549
        %v551 = vrot.slane %v523, %v550
        %v552 = vunpack.c.l.b16 %v530
        %v553 = vunpack.c.l.b16 %v537
        %v554 = vunpack.c.l.b16 %v544
        %v555 = vunpack.c.l.b16 %v551
        %v556 = vrot.slane %v553, 7
        %v557 = vsel %vm434, %v556, %v552
        %v558 = vrot.slane %v554, 6
        %v559 = vsel %vm437, %v558, %v557
        %v560 = vrot.slane %v555, 5
        %v561 = vsel %vm440, %v560, %v559
        %v562 = vpack.c.b16 %v561, %v561
        %v564 = vunpack.c.l.s4 1983009808
        %v565 = vunpack.c.0.s8 %v564
        %v566 = vlaneseq
        %v567 = vshrl.u32 %v566, 7
        %v568 = vsub.s32 %v565, %v567
        %v569 = vrot.slane %v562, %v568
        %570 = vrot.lane.b32.xlu0 %v569, 91
        %v571 = vpop.permute.xlu0 %570
        %vm573 = vcmask 870104
        %574 = vst.msk [vmem:[#allocation2] sm:$0x3] %vm573, %v571
        %vm575 = vcmask 886616
        %576 = vst.msk [vmem:[#allocation2] sm:$0x3] %vm575, 0
        %v577 = vrot.slane %v552, 1
        %v578 = vsel %vm434, %v553, %v577
        %v579 = vrot.slane %v554, 7
        %v580 = vsel %vm437, %v579, %v578
        %v581 = vrot.slane %v555, 6
        %v582 = vsel %vm440, %v581, %v580
        %v583 = vpack.c.b16 %v582, %v582
        %v585 = vunpack.c.l.s4 1983009808
        %v586 = vunpack.c.0.s8 %v585
        %v587 = vlaneseq
        %v588 = vshrl.u32 %v587, 7
        %v589 = vsub.s32 %v586, %v588
        %v590 = vrot.slane %v583, %v589
        %591 = vrot.lane.b32.xlu0 %v590, 109
        %v592 = vpop.permute.xlu0 %591
        %vm594 = vcmask 1017704
        %595 = vst.msk [vmem:[#allocation2] sm:$0x3] %vm594, %v592
        %vm596 = vcmask 1034216
        %597 = vst.msk [vmem:[#allocation2] sm:$0x3] %vm596, 0
        %v598 = vrot.slane %v552, 2
        %v599 = vrot.slane %v553, 1
        %v600 = vsel %vm434, %v599, %v598
        %v601 = vsel %vm437, %v554, %v600
        %v602 = vrot.slane %v555, 7
        %v603 = vsel %vm440, %v602, %v601
        %v604 = vpack.c.b16 %v603, %v603
        %v606 = vunpack.c.l.s4 1983009808
        %v607 = vunpack.c.0.s8 %v606
        %v608 = vlaneseq
        %v609 = vshrl.u32 %v608, 7
        %v610 = vsub.s32 %v607, %v609
        %v611 = vrot.slane %v604, %v610
        %612 = vrot.lane.b32.xlu0 %v611, 127
        %v613 = vpop.permute.xlu0 %612
        %v614 = vrot.slane %v613, 6
        %vm615 = vcmask 1039360
        %v616 = vsel %vm615, %v614, %v613
        %vm618 = vcmask 1042424
        %vm619 = vcmask 117762
        %vm620 = vmor %vm619, %vm618
        %621 = vst.msk [vmem:[#allocation2] sm:$0xf] %vm620, %v616
        %vm622 = vcmask 132216
        %623 = vst.msk [vmem:[#allocation2 + $0x2] sm:$0x3] %vm622, 0
        %v624 = vrot.slane %v552, 3
        %v625 = vrot.slane %v553, 2
        %v626 = vsel %vm434, %v625, %v624
        %v627 = vrot.slane %v554, 1
        %v628 = vsel %vm437, %v627, %v626
        %v629 = vsel %vm440, %v555, %v628
        %v630 = vpack.c.b16 %v629, %v629
        %v632 = vunpack.c.l.s4 1983009808
        %v633 = vunpack.c.0.s8 %v632
        %v634 = vlaneseq
        %v635 = vshrl.u32 %v634, 7
        %v636 = vsub.s32 %v633, %v635
        %v637 = vrot.slane %v630, %v636
        %638 = vrot.lane.b32.xlu0 %v637, 17
        %v639 = vpop.permute.xlu0 %638
        %vm641 = vcmask 263304
        %642 = vst.msk [vmem:[#allocation2 + $0x2] sm:$0x3] %vm641, %v639
        %vm643 = vcmask 279816
        %644 = vst.msk [vmem:[#allocation2 + $0x2] sm:$0x3] %vm643, 0
        %v645 = vcombine.high %v363, %v363
        %v647 = vunpack.c.l.s4 1983009808
        %v648 = vunpack.c.0.s8 %v647
        %v649 = vlaneseq
        %v650 = vshrl.u32 %v649, 7
        %v651 = vsub.s32 %v648, %v650
        %v652 = vrot.slane %v645, %v651
        %v653 = vcombine.high %v364, %v364
        %v655 = vunpack.c.l.s4 1983009808
        %v656 = vunpack.c.0.s8 %v655
        %v657 = vlaneseq
        %v658 = vshrl.u32 %v657, 7
        %v659 = vsub.s32 %v656, %v658
        %v660 = vrot.slane %v653, %v659
        %v661 = vcombine.high %v365, %v365
        %v663 = vunpack.c.l.s4 1983009808
        %v664 = vunpack.c.0.s8 %v663
        %v665 = vlaneseq
        %v666 = vshrl.u32 %v665, 7
        %v667 = vsub.s32 %v664, %v666
        %v668 = vrot.slane %v661, %v667
        %v669 = vcombine.high %v366, %v366
        %v671 = vunpack.c.l.s4 1983009808
        %v672 = vunpack.c.0.s8 %v671
        %v673 = vlaneseq
        %v674 = vshrl.u32 %v673, 7
        %v675 = vsub.s32 %v672, %v674
        %v676 = vrot.slane %v669, %v675
        %v678 = vunpack.c.l.s4 1983009808
        %v679 = vunpack.c.0.s8 %v678
        %v680 = vlaneseq
        %v681 = vshrl.u32 %v680, 7
        %v682 = vsub.s32 %v679, %v681
        %v683 = vrot.slane %v652, %v682
        %v685 = vunpack.c.l.s4 1983009808
        %v686 = vunpack.c.0.s8 %v685
        %v687 = vlaneseq
        %v688 = vshrl.u32 %v687, 7
        %v689 = vsub.s32 %v686, %v688
        %v690 = vrot.slane %v660, %v689
        %v692 = vunpack.c.l.s4 1983009808
        %v693 = vunpack.c.0.s8 %v692
        %v694 = vlaneseq
        %v695 = vshrl.u32 %v694, 7
        %v696 = vsub.s32 %v693, %v695
        %v697 = vrot.slane %v668, %v696
        %v699 = vunpack.c.l.s4 1983009808
        %v700 = vunpack.c.0.s8 %v699
        %v701 = vlaneseq
        %v702 = vshrl.u32 %v701, 7
        %v703 = vsub.s32 %v700, %v702
        %v704 = vrot.slane %v676, %v703
        %v705 = vunpack.c.l.b16 %v683
        %v706 = vunpack.c.l.b16 %v690
        %v707 = vunpack.c.l.b16 %v697
        %v708 = vunpack.c.l.b16 %v704
        %v709 = vrot.slane %v706, 7
        %v710 = vsel %vm434, %v709, %v705
        %v711 = vrot.slane %v707, 6
        %v712 = vsel %vm437, %v711, %v710
        %v713 = vrot.slane %v708, 5
        %v714 = vsel %vm440, %v713, %v712
        %v715 = vpack.c.b16 %v714, %v714
        %v717 = vunpack.c.l.s4 1983009808
        %v718 = vunpack.c.0.s8 %v717
        %v719 = vlaneseq
        %v720 = vshrl.u32 %v719, 7
        %v721 = vsub.s32 %v718, %v720
        %v722 = vrot.slane %v715, %v721
        %723 = vrot.lane.b32.xlu0 %v722, 35
        %v724 = vpop.permute.xlu0 %723
        %vm726 = vcmask 410904
        %727 = vst.msk [vmem:[#allocation2 + $0x2] sm:$0x3] %vm726, %v724
        %vm728 = vcmask 427416
        %729 = vst.msk [vmem:[#allocation2 + $0x2] sm:$0x3] %vm728, 0
        %v730 = vrot.slane %v705, 1
        %v731 = vsel %vm434, %v706, %v730
        %v732 = vrot.slane %v707, 7
        %v733 = vsel %vm437, %v732, %v731
        %v734 = vrot.slane %v708, 6
        %v735 = vsel %vm440, %v734, %v733
        %v736 = vpack.c.b16 %v735, %v735
        %v738 = vunpack.c.l.s4 1983009808
        %v739 = vunpack.c.0.s8 %v738
        %v740 = vlaneseq
        %v741 = vshrl.u32 %v740, 7
        %v742 = vsub.s32 %v739, %v741
        %v743 = vrot.slane %v736, %v742
        %744 = vrot.lane.b32.xlu0 %v743, 53
        %v745 = vpop.permute.xlu0 %744
        %vm747 = vcmask 558504
        %748 = vst.msk [vmem:[#allocation2 + $0x2] sm:$0x3] %vm747, %v745
        %vm749 = vcmask 575016
        %750 = vst.msk [vmem:[#allocation2 + $0x2] sm:$0x3] %vm749, 0
        %v751 = vrot.slane %v705, 2
        %v752 = vrot.slane %v706, 1
        %v753 = vsel %vm434, %v752, %v751
        %v754 = vsel %vm437, %v707, %v753
        %v755 = vrot.slane %v708, 7
        %v756 = vsel %vm440, %v755, %v754
        %v757 = vpack.c.b16 %v756, %v756
        %v759 = vunpack.c.l.s4 1983009808
        %v760 = vunpack.c.0.s8 %v759
        %v761 = vlaneseq
        %v762 = vshrl.u32 %v761, 7
        %v763 = vsub.s32 %v760, %v762
        %v764 = vrot.slane %v757, %v763
        %765 = vrot.lane.b32.xlu0 %v764, 71
        %v766 = vpop.permute.xlu0 %765
        %vm768 = vcmask 706104
        %769 = vst.msk [vmem:[#allocation2 + $0x2] sm:$0x3] %vm768, %v766
        %vm770 = vcmask 722616
        %771 = vst.msk [vmem:[#allocation2 + $0x2] sm:$0x3] %vm770, 0
        %v772 = vrot.slane %v705, 3
        %v773 = vrot.slane %v706, 2
        %v774 = vsel %vm434, %v773, %v772
        %v775 = vrot.slane %v707, 1
        %v776 = vsel %vm437, %v775, %v774
        %v777 = vsel %vm440, %v708, %v776
        %v778 = vpack.c.b16 %v777, %v777
        %v780 = vunpack.c.l.s4 1983009808
        %v781 = vunpack.c.0.s8 %v780
        %v782 = vlaneseq
        %v783 = vshrl.u32 %v782, 7
        %v784 = vsub.s32 %v781, %v783
        %v785 = vrot.slane %v778, %v784
        %786 = vrot.lane.b32.xlu0 %v785, 89
        %v787 = vpop.permute.xlu0 %786
        %vm789 = vcmask 853704
        %790 = vst.msk [vmem:[#allocation2 + $0x2] sm:$0x3] %vm789, %v787
        %vm791 = vcmask 870216
        %792 = vst.msk [vmem:[#allocation2 + $0x2] sm:$0x3] %vm791, 0
        %v793 = vcombine.high %v652, %v652
        %v794 = vcombine.high %v660, %v660
        %v795 = vcombine.high %v668, %v668
        %v796 = vcombine.high %v676, %v676
        %v798 = vunpack.c.l.s4 1983009808
        %v799 = vunpack.c.0.s8 %v798
        %v800 = vlaneseq
        %v801 = vshrl.u32 %v800, 7
        %v802 = vsub.s32 %v799, %v801
        %v803 = vrot.slane %v793, %v802
        %v805 = vunpack.c.l.s4 1983009808
        %v806 = vunpack.c.0.s8 %v805
        %v807 = vlaneseq
        %v808 = vshrl.u32 %v807, 7
        %v809 = vsub.s32 %v806, %v808
        %v810 = vrot.slane %v794, %v809
        %v812 = vunpack.c.l.s4 1983009808
        %v813 = vunpack.c.0.s8 %v812
        %v814 = vlaneseq
        %v815 = vshrl.u32 %v814, 7
        %v816 = vsub.s32 %v813, %v815
        %v817 = vrot.slane %v795, %v816
        %v819 = vunpack.c.l.s4 1983009808
        %v820 = vunpack.c.0.s8 %v819
        %v821 = vlaneseq
        %v822 = vshrl.u32 %v821, 7
        %v823 = vsub.s32 %v820, %v822
        %v824 = vrot.slane %v796, %v823
        %v825 = vunpack.c.l.b16 %v803
        %v826 = vunpack.c.l.b16 %v810
        %v827 = vunpack.c.l.b16 %v817
        %v828 = vunpack.c.l.b16 %v824
        %v829 = vrot.slane %v826, 7
        %v830 = vsel %vm434, %v829, %v825
        %v831 = vrot.slane %v827, 6
        %v832 = vsel %vm437, %v831, %v830
        %v833 = vrot.slane %v828, 5
        %v834 = vsel %vm440, %v833, %v832
        %v835 = vpack.c.b16 %v834, %v834
        %v837 = vunpack.c.l.s4 1983009808
        %v838 = vunpack.c.0.s8 %v837
        %v839 = vlaneseq
        %v840 = vshrl.u32 %v839, 7
        %v841 = vsub.s32 %v838, %v840
        %v842 = vrot.slane %v835, %v841
        %843 = vrot.lane.b32.xlu0 %v842, 107
        %v844 = vpop.permute.xlu0 %843
        %vm846 = vcmask 1001304
        %847 = vst.msk [vmem:[#allocation2 + $0x2] sm:$0x3] %vm846, %v844
        %vm848 = vcmask 1017816
        %849 = vst.msk [vmem:[#allocation2 + $0x2] sm:$0x3] %vm848, 0
        %v850 = vrot.slane %v825, 1
        %v851 = vsel %vm434, %v826, %v850
        %v852 = vrot.slane %v827, 7
        %v853 = vsel %vm437, %v852, %v851
        %v854 = vrot.slane %v828, 6
        %v855 = vsel %vm440, %v854, %v853
        %v856 = vpack.c.b16 %v855, %v855
        %v858 = vunpack.c.l.s4 1983009808
        %v859 = vunpack.c.0.s8 %v858
        %v860 = vlaneseq
        %v861 = vshrl.u32 %v860, 7
        %v862 = vsub.s32 %v859, %v861
        %v863 = vrot.slane %v856, %v862
        %864 = vrot.lane.b32.xlu0 %v863, 125
        %v865 = vpop.permute.xlu0 %864
        %v866 = vrot.slane %v865, 6
        %vm867 = vcmask 1022976
        %v868 = vsel %vm867, %v866, %v865
        %vm870 = vcmask 1042408
        %vm871 = vcmask 101378
        %vm872 = vmor %vm871, %vm870
        %873 = vst.msk [vmem:[#allocation2 + $0x2] sm:$0xf] %vm872, %v868
        %vm874 = vcmask 115816
        %875 = vst.msk [vmem:[#allocation2 + $0x4] sm:$0x3] %vm874, 0
        %v876 = vrot.slane %v825, 2
        %v877 = vrot.slane %v826, 1
        %v878 = vsel %vm434, %v877, %v876
        %v879 = vsel %vm437, %v827, %v878
        %v880 = vrot.slane %v828, 7
        %v881 = vsel %vm440, %v880, %v879
        %v882 = vpack.c.b16 %v881, %v881
        %v884 = vunpack.c.l.s4 1983009808
        %v885 = vunpack.c.0.s8 %v884
        %v886 = vlaneseq
        %v887 = vshrl.u32 %v886, 7
        %v888 = vsub.s32 %v885, %v887
        %v889 = vrot.slane %v882, %v888
        %890 = vrot.lane.b32.xlu0 %v889, 15
        %v891 = vpop.permute.xlu0 %890
        %vm893 = vcmask 246904
        %894 = vst.msk [vmem:[#allocation2 + $0x4] sm:$0x3] %vm893, %v891
        %vm895 = vcmask 263416
        %896 = vst.msk [vmem:[#allocation2 + $0x4] sm:$0x3] %vm895, 0
        %v897 = vrot.slane %v825, 3
        %v898 = vrot.slane %v826, 2
        %v899 = vsel %vm434, %v898, %v897
        %v900 = vrot.slane %v827, 1
        %v901 = vsel %vm437, %v900, %v899
        %v902 = vsel %vm440, %v828, %v901
        %v903 = vpack.c.b16 %v902, %v902
        %v905 = vunpack.c.l.s4 1983009808
        %v906 = vunpack.c.0.s8 %v905
        %v907 = vlaneseq
        %v908 = vshrl.u32 %v907, 7
        %v909 = vsub.s32 %v906, %v908
        %v910 = vrot.slane %v903, %v909
        %911 = vrot.lane.b32.xlu0 %v910, 33
        %v912 = vpop.permute.xlu0 %911
        %vm914 = vcmask 394504
        %915 = vst.msk [vmem:[#allocation2 + $0x4] sm:$0x3] %vm914, %v912
        %vm916 = vcmask 411016
        %917 = vst.msk [vmem:[#allocation2 + $0x4] sm:$0x3] %vm916, 0
        %vm918 = vcmask 697752
        %919 = vst.msk [vmem:[#allocation2 + $0x4] sm:$0x3] %vm918, 0
        %v920 = vld [vmem:[#allocation2] sm:$0x3f]
        %v921 = vld [vmem:[#allocation6] sm:$0xf]
        %s922 = scalar_lea.vmem [#allocation6], 4
        %v923 = vld [vmem:[%s922] sm:$0xf]
        %v925 = vcombine.high %v920, %v920
        %v927 = vunpack.c.l.s4 1983009808
        %v928 = vunpack.c.0.s8 %v927
        %v929 = vlaneseq
        %v930 = vshrl.u32 %v929, 7
        %v931 = vsub.s32 %v928, %v930
        %v932 = vrot.slane %v920, %v931
        %v934 = vunpack.c.l.s4 1983009808
        %v935 = vunpack.c.0.s8 %v934
        %v936 = vlaneseq
        %v937 = vshrl.u32 %v936, 7
        %v938 = vsub.s32 %v935, %v937
        %v939 = vrot.slane %v925, %v938
        %v940 = vcombine.high %v932, %v932
        %941 = vrot.lane.b32.xlu0 %v932, 127
        %v942 = vpop.permute.xlu0 %941
        %943 = vrot.lane.b32.xlu0 %v940, 127
        %v944 = vpop.permute.xlu0 %943
        %945 = vrot.lane.b32.xlu0 %v939, 127
        %v946 = vpop.permute.xlu0 %945
        %v947 = vsel %vm615, %v942, %v944
        %v948 = vsel %vm615, %v944, %v946
        %vm949 = vcmask 31744
        %v951 = vsel %vm949, %v923, 0
        %vm953 = vcmask 1041408
        %v955 = vsel %vm953, %v947, 0
        %v958 = vsel %vm953, %v948, 0
        %v961 = vsel %vm953, %v946, 0
        %963 = vmatprep.subr.bf16.mxu0 %v958
        %964 = vmatpush1.bf16.msra.mxu0 %v955
        %965 = vmatprep.subr.bf16.mxu0 0
        %966 = vmatpush1.bf16.msra.mxu0 0
        %967 = vmatprep.subr.bf16.mxu0 0
        %968 = vmatpush1.bf16.msra.mxu0 0
        %969 = vmatprep.subr.bf16.mxu0 0
        %970 = vmatpush1.bf16.msra.mxu0 0
        %971 = vmatprep.subr.bf16.mxu0 0
        %972 = vmatpush1.bf16.msra.mxu0 0
        %973 = vmatprep.subr.bf16.mxu0 0
        %974 = vmatpush1.bf16.msra.mxu0 0
        %975 = vmatprep.subr.bf16.mxu0 0
        %976 = vmatpush1.bf16.msra.mxu0 0
        %977 = vmatprep.subr.bf16.mxu0 0
        %978 = vmatpush1.bf16.msra.mxu0 0
        %979 = vmatprep.subr.bf16.mxu0 0
        %980 = vmatpush1.bf16.msra.mxu0 0
        %981 = vmatprep.subr.bf16.mxu0 0
        %982 = vmatpush1.bf16.msra.mxu0 0
        %983 = vmatprep.subr.bf16.mxu0 0
        %984 = vmatpush1.bf16.msra.mxu0 0
        %985 = vmatprep.subr.bf16.mxu0 0
        %986 = vmatpush1.bf16.msra.mxu0 0
        %987 = vmatprep.subr.bf16.mxu0 0
        %988 = vmatpush1.bf16.msra.mxu0 0
        %989 = vmatprep.subr.bf16.mxu0 0
        %990 = vmatpush1.bf16.msra.mxu0 0
        %991 = vmatprep.subr.bf16.mxu0 0
        %992 = vmatpush1.bf16.msra.mxu0 0
        %993 = vmatprep.subr.bf16.mxu0 0
        %994 = vmatpush1.bf16.msra.mxu0 0
        %995 = vmatprep.mubr.bf16.mxu0 0
        %996 = vmatmul.mubr.bf16.gmra.mrb[0].mxu0 %v951
        %v997 = vpop.f32.mrb[0].mxu0
        %v998 = vadd.f32 0.0, %v997
        %v999 = vpop.f32.mrb[0].mxu0
        %v1000 = vadd.f32 0.0, %v999
        %v1001 = vpop.f32.mrb[0].mxu0
        %v1002 = vpop.f32.mrb[0].mxu0
        %1003 = vdwg.mxu0
        %1004 = vmatprep.subr.bf16.mxu0 0
        %1005 = vmatpush1.bf16.msra.mxu0 %v961
        %1006 = vmatprep.subr.bf16.mxu0 0
        %1007 = vmatpush1.bf16.msra.mxu0 0
        %1008 = vmatprep.subr.bf16.mxu0 0
        %1009 = vmatpush1.bf16.msra.mxu0 0
        %1010 = vmatprep.subr.bf16.mxu0 0
        %1011 = vmatpush1.bf16.msra.mxu0 0
        %1012 = vmatprep.subr.bf16.mxu0 0
        %1013 = vmatpush1.bf16.msra.mxu0 0
        %1014 = vmatprep.subr.bf16.mxu0 0
        %1015 = vmatpush1.bf16.msra.mxu0 0
        %1016 = vmatprep.subr.bf16.mxu0 0
        %1017 = vmatpush1.bf16.msra.mxu0 0
        %1018 = vmatprep.subr.bf16.mxu0 0
        %1019 = vmatpush1.bf16.msra.mxu0 0
        %1020 = vmatprep.subr.bf16.mxu0 0
        %1021 = vmatpush1.bf16.msra.mxu0 0
        %1022 = vmatprep.subr.bf16.mxu0 0
        %1023 = vmatpush1.bf16.msra.mxu0 0
        %1024 = vmatprep.subr.bf16.mxu0 0
        %1025 = vmatpush1.bf16.msra.mxu0 0
        %1026 = vmatprep.subr.bf16.mxu0 0
        %1027 = vmatpush1.bf16.msra.mxu0 0
        %1028 = vmatprep.subr.bf16.mxu0 0
        %1029 = vmatpush1.bf16.msra.mxu0 0
        %1030 = vmatprep.subr.bf16.mxu0 0
        %1031 = vmatpush1.bf16.msra.mxu0 0
        %1032 = vmatprep.subr.bf16.mxu0 0
        %1033 = vmatpush1.bf16.msra.mxu0 0
        %1034 = vmatprep.subr.bf16.mxu0 0
        %1035 = vmatpush1.bf16.msra.mxu0 0
        %1036 = vmatprep.mubr.bf16.mxu0 0
        %1037 = vmatmul.mubr.bf16.gmra.mrb[0].mxu0 %v951
        %v1038 = vpop.f32.mrb[0].mxu0
        %v1039 = vadd.f32 0.0, %v1038
        %v1040 = vpop.f32.mrb[0].mxu0
        %v1041 = vpop.f32.mrb[0].mxu0
        %v1042 = vpop.f32.mrb[0].mxu0
        %1043 = vdwg.mxu0
        %v1045 = vsel %vm949, %v921, 0
        %v1048 = vsel %vm953, %v932, 0
        %v1051 = vsel %vm953, %v940, 0
        %v1054 = vsel %vm953, %v939, 0
        %1056 = vmatprep.subr.bf16.mxu0 %v1051
        %1057 = vmatpush1.bf16.msra.mxu0 %v1048
        %1058 = vmatprep.subr.bf16.mxu0 0
        %1059 = vmatpush1.bf16.msra.mxu0 0
        %1060 = vmatprep.subr.bf16.mxu0 0
        %1061 = vmatpush1.bf16.msra.mxu0 0
        %1062 = vmatprep.subr.bf16.mxu0 0
        %1063 = vmatpush1.bf16.msra.mxu0 0
        %1064 = vmatprep.subr.bf16.mxu0 0
        %1065 = vmatpush1.bf16.msra.mxu0 0
        %1066 = vmatprep.subr.bf16.mxu0 0
        %1067 = vmatpush1.bf16.msra.mxu0 0
        %1068 = vmatprep.subr.bf16.mxu0 0
        %1069 = vmatpush1.bf16.msra.mxu0 0
        %1070 = vmatprep.subr.bf16.mxu0 0
        %1071 = vmatpush1.bf16.msra.mxu0 0
        %1072 = vmatprep.subr.bf16.mxu0 0
        %1073 = vmatpush1.bf16.msra.mxu0 0
        %1074 = vmatprep.subr.bf16.mxu0 0
        %1075 = vmatpush1.bf16.msra.mxu0 0
        %1076 = vmatprep.subr.bf16.mxu0 0
        %1077 = vmatpush1.bf16.msra.mxu0 0
        %1078 = vmatprep.subr.bf16.mxu0 0
        %1079 = vmatpush1.bf16.msra.mxu0 0
        %1080 = vmatprep.subr.bf16.mxu0 0
        %1081 = vmatpush1.bf16.msra.mxu0 0
        %1082 = vmatprep.subr.bf16.mxu0 0
        %1083 = vmatpush1.bf16.msra.mxu0 0
        %1084 = vmatprep.subr.bf16.mxu0 0
        %1085 = vmatpush1.bf16.msra.mxu0 0
        %1086 = vmatprep.subr.bf16.mxu0 0
        %1087 = vmatpush1.bf16.msra.mxu0 0
        %1088 = vmatprep.mubr.bf16.mxu0 0
        %1089 = vmatmul.mubr.bf16.gmra.mrb[0].mxu0 %v1045
        %v1090 = vpop.f32.mrb[0].mxu0
        %v1091 = vadd.f32 %v998, %v1090
        %v1092 = vpop.f32.mrb[0].mxu0
        %v1093 = vadd.f32 %v1000, %v1092
        %v1094 = vpop.f32.mrb[0].mxu0
        %v1095 = vpop.f32.mrb[0].mxu0
        %1096 = vdwg.mxu0
        %1097 = vmatprep.subr.bf16.mxu0 0
        %1098 = vmatpush1.bf16.msra.mxu0 %v1054
        %1099 = vmatprep.subr.bf16.mxu0 0
        %1100 = vmatpush1.bf16.msra.mxu0 0
        %1101 = vmatprep.subr.bf16.mxu0 0
        %1102 = vmatpush1.bf16.msra.mxu0 0
        %1103 = vmatprep.subr.bf16.mxu0 0
        %1104 = vmatpush1.bf16.msra.mxu0 0
        %1105 = vmatprep.subr.bf16.mxu0 0
        %1106 = vmatpush1.bf16.msra.mxu0 0
        %1107 = vmatprep.subr.bf16.mxu0 0
        %1108 = vmatpush1.bf16.msra.mxu0 0
        %1109 = vmatprep.subr.bf16.mxu0 0
        %1110 = vmatpush1.bf16.msra.mxu0 0
        %1111 = vmatprep.subr.bf16.mxu0 0
        %1112 = vmatpush1.bf16.msra.mxu0 0
        %1113 = vmatprep.subr.bf16.mxu0 0
        %1114 = vmatpush1.bf16.msra.mxu0 0
        %1115 = vmatprep.subr.bf16.mxu0 0
        %1116 = vmatpush1.bf16.msra.mxu0 0
        %1117 = vmatprep.subr.bf16.mxu0 0
        %1118 = vmatpush1.bf16.msra.mxu0 0
        %1119 = vmatprep.subr.bf16.mxu0 0
        %1120 = vmatpush1.bf16.msra.mxu0 0
        %1121 = vmatprep.subr.bf16.mxu0 0
        %1122 = vmatpush1.bf16.msra.mxu0 0
        %1123 = vmatprep.subr.bf16.mxu0 0
        %1124 = vmatpush1.bf16.msra.mxu0 0
        %1125 = vmatprep.subr.bf16.mxu0 0
        %1126 = vmatpush1.bf16.msra.mxu0 0
        %1127 = vmatprep.subr.bf16.mxu0 0
        %1128 = vmatpush1.bf16.msra.mxu0 0
        %1129 = vmatprep.mubr.bf16.mxu0 0
        %1130 = vmatmul.mubr.bf16.gmra.mrb[0].mxu0 %v1045
        %v1131 = vpop.f32.mrb[0].mxu0
        %v1132 = vadd.f32 %v1039, %v1131
        %v1133 = vpop.f32.mrb[0].mxu0
        %v1134 = vpop.f32.mrb[0].mxu0
        %v1135 = vpop.f32.mrb[0].mxu0
        %1136 = vdwg.mxu0
        %v1137 = vld [vmem:[#allocation2] sm:$0x3f]
        %s1138 = scalar_lea.vmem [#allocation6], 8
        %v1139 = vld [vmem:[%s1138] sm:$0xf]
        %v1141 = vcombine.high %v1137, %v1137
        %v1143 = vunpack.c.l.s4 1983009808
        %v1144 = vunpack.c.0.s8 %v1143
        %v1145 = vlaneseq
        %v1146 = vshrl.u32 %v1145, 7
        %v1147 = vsub.s32 %v1144, %v1146
        %v1148 = vrot.slane %v1137, %v1147
        %v1150 = vunpack.c.l.s4 1983009808
        %v1151 = vunpack.c.0.s8 %v1150
        %v1152 = vlaneseq
        %v1153 = vshrl.u32 %v1152, 7
        %v1154 = vsub.s32 %v1151, %v1153
        %v1155 = vrot.slane %v1141, %v1154
        %v1156 = vcombine.high %v1148, %v1148
        %1157 = vrot.lane.b32.xlu0 %v1148, 126
        %v1158 = vpop.permute.xlu0 %1157
        %1159 = vrot.lane.b32.xlu0 %v1156, 126
        %v1160 = vpop.permute.xlu0 %1159
        %1161 = vrot.lane.b32.xlu0 %v1155, 126
        %v1162 = vpop.permute.xlu0 %1161
        %vm1163 = vcmask 1031168
        %v1164 = vsel %vm1163, %v1158, %v1160
        %v1165 = vsel %vm1163, %v1160, %v1162
        %v1167 = vsel %vm949, %v1139, 0
        %v1170 = vsel %vm953, %v1164, 0
        %v1173 = vsel %vm953, %v1165, 0
        %v1176 = vsel %vm953, %v1162, 0
        %1178 = vmatprep.subr.bf16.mxu0 %v1173
        %1179 = vmatpush1.bf16.msra.mxu0 %v1170
        %1180 = vmatprep.subr.bf16.mxu0 0
        %1181 = vmatpush1.bf16.msra.mxu0 0
        %1182 = vmatprep.subr.bf16.mxu0 0
        %1183 = vmatpush1.bf16.msra.mxu0 0
        %1184 = vmatprep.subr.bf16.mxu0 0
        %1185 = vmatpush1.bf16.msra.mxu0 0
        %1186 = vmatprep.subr.bf16.mxu0 0
        %1187 = vmatpush1.bf16.msra.mxu0 0
        %1188 = vmatprep.subr.bf16.mxu0 0
        %1189 = vmatpush1.bf16.msra.mxu0 0
        %1190 = vmatprep.subr.bf16.mxu0 0
        %1191 = vmatpush1.bf16.msra.mxu0 0
        %1192 = vmatprep.subr.bf16.mxu0 0
        %1193 = vmatpush1.bf16.msra.mxu0 0
        %1194 = vmatprep.subr.bf16.mxu0 0
        %1195 = vmatpush1.bf16.msra.mxu0 0
        %1196 = vmatprep.subr.bf16.mxu0 0
        %1197 = vmatpush1.bf16.msra.mxu0 0
        %1198 = vmatprep.subr.bf16.mxu0 0
        %1199 = vmatpush1.bf16.msra.mxu0 0
        %1200 = vmatprep.subr.bf16.mxu0 0
        %1201 = vmatpush1.bf16.msra.mxu0 0
        %1202 = vmatprep.subr.bf16.mxu0 0
        %1203 = vmatpush1.bf16.msra.mxu0 0
        %1204 = vmatprep.subr.bf16.mxu0 0
        %1205 = vmatpush1.bf16.msra.mxu0 0
        %1206 = vmatprep.subr.bf16.mxu0 0
        %1207 = vmatpush1.bf16.msra.mxu0 0
        %1208 = vmatprep.subr.bf16.mxu0 0
        %1209 = vmatpush1.bf16.msra.mxu0 0
        %1210 = vmatprep.mubr.bf16.mxu0 0
        %1211 = vmatmul.mubr.bf16.gmra.mrb[0].mxu0 %v1167
        %v1212 = vpop.f32.mrb[0].mxu0
        %v1213 = vadd.f32 0.0, %v1212
        %v1214 = vpop.f32.mrb[0].mxu0
        %v1215 = vadd.f32 0.0, %v1214
        %v1216 = vpop.f32.mrb[0].mxu0
        %v1217 = vpop.f32.mrb[0].mxu0
        %1218 = vdwg.mxu0
        %1219 = vmatprep.subr.bf16.mxu0 0
        %1220 = vmatpush1.bf16.msra.mxu0 %v1176
        %1221 = vmatprep.subr.bf16.mxu0 0
        %1222 = vmatpush1.bf16.msra.mxu0 0
        %1223 = vmatprep.subr.bf16.mxu0 0
        %1224 = vmatpush1.bf16.msra.mxu0 0
        %1225 = vmatprep.subr.bf16.mxu0 0
        %1226 = vmatpush1.bf16.msra.mxu0 0
        %1227 = vmatprep.subr.bf16.mxu0 0
        %1228 = vmatpush1.bf16.msra.mxu0 0
        %1229 = vmatprep.subr.bf16.mxu0 0
        %1230 = vmatpush1.bf16.msra.mxu0 0
        %1231 = vmatprep.subr.bf16.mxu0 0
        %1232 = vmatpush1.bf16.msra.mxu0 0
        %1233 = vmatprep.subr.bf16.mxu0 0
        %1234 = vmatpush1.bf16.msra.mxu0 0
        %1235 = vmatprep.subr.bf16.mxu0 0
        %1236 = vmatpush1.bf16.msra.mxu0 0
        %1237 = vmatprep.subr.bf16.mxu0 0
        %1238 = vmatpush1.bf16.msra.mxu0 0
        %1239 = vmatprep.subr.bf16.mxu0 0
        %1240 = vmatpush1.bf16.msra.mxu0 0
        %1241 = vmatprep.subr.bf16.mxu0 0
        %1242 = vmatpush1.bf16.msra.mxu0 0
        %1243 = vmatprep.subr.bf16.mxu0 0
        %1244 = vmatpush1.bf16.msra.mxu0 0
        %1245 = vmatprep.subr.bf16.mxu0 0
        %1246 = vmatpush1.bf16.msra.mxu0 0
        %1247 = vmatprep.subr.bf16.mxu0 0
        %1248 = vmatpush1.bf16.msra.mxu0 0
        %1249 = vmatprep.subr.bf16.mxu0 0
        %1250 = vmatpush1.bf16.msra.mxu0 0
        %1251 = vmatprep.mubr.bf16.mxu0 0
        %1252 = vmatmul.mubr.bf16.gmra.mrb[0].mxu0 %v1167
        %v1253 = vpop.f32.mrb[0].mxu0
        %v1254 = vadd.f32 0.0, %v1253
        %v1255 = vpop.f32.mrb[0].mxu0
        %v1256 = vpop.f32.mrb[0].mxu0
        %v1257 = vpop.f32.mrb[0].mxu0
        %1258 = vdwg.mxu0
        %v1259 = vadd.f32 %v1091, %v1213
        %v1260 = vadd.f32 %v1093, %v1215
        %v1261 = vadd.f32 %v1132, %v1254
        %v1262 = vld [vmem:[#allocation2] sm:$0x3f]
        %s1263 = scalar_lea.vmem [#allocation6], 12
        %v1264 = vld [vmem:[%s1263] sm:$0xf]
        %v1266 = vcombine.high %v1262, %v1262
        %v1268 = vunpack.c.l.s4 1983009808
        %v1269 = vunpack.c.0.s8 %v1268
        %v1270 = vlaneseq
        %v1271 = vshrl.u32 %v1270, 7
        %v1272 = vsub.s32 %v1269, %v1271
        %v1273 = vrot.slane %v1262, %v1272
        %v1275 = vunpack.c.l.s4 1983009808
        %v1276 = vunpack.c.0.s8 %v1275
        %v1277 = vlaneseq
        %v1278 = vshrl.u32 %v1277, 7
        %v1279 = vsub.s32 %v1276, %v1278
        %v1280 = vrot.slane %v1266, %v1279
        %v1281 = vcombine.high %v1273, %v1273
        %1282 = vrot.lane.b32.xlu0 %v1273, 110
        %v1283 = vpop.permute.xlu0 %1282
        %1284 = vrot.lane.b32.xlu0 %v1281, 110
        %v1285 = vpop.permute.xlu0 %1284
        %1286 = vrot.lane.b32.xlu0 %v1280, 110
        %v1287 = vpop.permute.xlu0 %1286
        %vm1288 = vcmask 900096
        %v1289 = vsel %vm1288, %v1283, %v1285
        %v1290 = vsel %vm1288, %v1285, %v1287
        %v1292 = vsel %vm949, %v1264, 0
        %v1295 = vsel %vm953, %v1289, 0
        %v1298 = vsel %vm953, %v1290, 0
        %v1301 = vsel %vm953, %v1287, 0
        %1303 = vmatprep.subr.bf16.mxu0 %v1298
        %1304 = vmatpush1.bf16.msra.mxu0 %v1295
        %1305 = vmatprep.subr.bf16.mxu0 0
        %1306 = vmatpush1.bf16.msra.mxu0 0
        %1307 = vmatprep.subr.bf16.mxu0 0
        %1308 = vmatpush1.bf16.msra.mxu0 0
        %1309 = vmatprep.subr.bf16.mxu0 0
        %1310 = vmatpush1.bf16.msra.mxu0 0
        %1311 = vmatprep.subr.bf16.mxu0 0
        %1312 = vmatpush1.bf16.msra.mxu0 0
        %1313 = vmatprep.subr.bf16.mxu0 0
        %1314 = vmatpush1.bf16.msra.mxu0 0
        %1315 = vmatprep.subr.bf16.mxu0 0
        %1316 = vmatpush1.bf16.msra.mxu0 0
        %1317 = vmatprep.subr.bf16.mxu0 0
        %1318 = vmatpush1.bf16.msra.mxu0 0
        %1319 = vmatprep.subr.bf16.mxu0 0
        %1320 = vmatpush1.bf16.msra.mxu0 0
        %1321 = vmatprep.subr.bf16.mxu0 0
        %1322 = vmatpush1.bf16.msra.mxu0 0
        %1323 = vmatprep.subr.bf16.mxu0 0
        %1324 = vmatpush1.bf16.msra.mxu0 0
        %1325 = vmatprep.subr.bf16.mxu0 0
        %1326 = vmatpush1.bf16.msra.mxu0 0
        %1327 = vmatprep.subr.bf16.mxu0 0
        %1328 = vmatpush1.bf16.msra.mxu0 0
        %1329 = vmatprep.subr.bf16.mxu0 0
        %1330 = vmatpush1.bf16.msra.mxu0 0
        %1331 = vmatprep.subr.bf16.mxu0 0
        %1332 = vmatpush1.bf16.msra.mxu0 0
        %1333 = vmatprep.subr.bf16.mxu0 0
        %1334 = vmatpush1.bf16.msra.mxu0 0
        %1335 = vmatprep.mubr.bf16.mxu0 0
        %1336 = vmatmul.mubr.bf16.gmra.mrb[0].mxu0 %v1292
        %v1337 = vpop.f32.mrb[0].mxu0
        %v1338 = vadd.f32 0.0, %v1337
        %v1339 = vpop.f32.mrb[0].mxu0
        %v1340 = vadd.f32 0.0, %v1339
        %v1341 = vpop.f32.mrb[0].mxu0
        %v1342 = vpop.f32.mrb[0].mxu0
        %1343 = vdwg.mxu0
        %1344 = vmatprep.subr.bf16.mxu0 0
        %1345 = vmatpush1.bf16.msra.mxu0 %v1301
        %1346 = vmatprep.subr.bf16.mxu0 0
        %1347 = vmatpush1.bf16.msra.mxu0 0
        %1348 = vmatprep.subr.bf16.mxu0 0
        %1349 = vmatpush1.bf16.msra.mxu0 0
        %1350 = vmatprep.subr.bf16.mxu0 0
        %1351 = vmatpush1.bf16.msra.mxu0 0
        %1352 = vmatprep.subr.bf16.mxu0 0
        %1353 = vmatpush1.bf16.msra.mxu0 0
        %1354 = vmatprep.subr.bf16.mxu0 0
        %1355 = vmatpush1.bf16.msra.mxu0 0
        %1356 = vmatprep.subr.bf16.mxu0 0
        %1357 = vmatpush1.bf16.msra.mxu0 0
        %1358 = vmatprep.subr.bf16.mxu0 0
        %1359 = vmatpush1.bf16.msra.mxu0 0
        %1360 = vmatprep.subr.bf16.mxu0 0
        %1361 = vmatpush1.bf16.msra.mxu0 0
        %1362 = vmatprep.subr.bf16.mxu0 0
        %1363 = vmatpush1.bf16.msra.mxu0 0
        %1364 = vmatprep.subr.bf16.mxu0 0
        %1365 = vmatpush1.bf16.msra.mxu0 0
        %1366 = vmatprep.subr.bf16.mxu0 0
        %1367 = vmatpush1.bf16.msra.mxu0 0
        %1368 = vmatprep.subr.bf16.mxu0 0
        %1369 = vmatpush1.bf16.msra.mxu0 0
        %1370 = vmatprep.subr.bf16.mxu0 0
        %1371 = vmatpush1.bf16.msra.mxu0 0
        %1372 = vmatprep.subr.bf16.mxu0 0
        %1373 = vmatpush1.bf16.msra.mxu0 0
        %1374 = vmatprep.subr.bf16.mxu0 0
        %1375 = vmatpush1.bf16.msra.mxu0 0
        %1376 = vmatprep.mubr.bf16.mxu0 0
        %1377 = vmatmul.mubr.bf16.gmra.mrb[0].mxu0 %v1292
        %v1378 = vpop.f32.mrb[0].mxu0
        %v1379 = vadd.f32 0.0, %v1378
        %v1380 = vpop.f32.mrb[0].mxu0
        %v1381 = vpop.f32.mrb[0].mxu0
        %v1382 = vpop.f32.mrb[0].mxu0
        %1383 = vdwg.mxu0
        %v1384 = vadd.f32 %v1259, %v1338
        %v1385 = vadd.f32 %v1260, %v1340
        %v1386 = vadd.f32 %v1261, %v1379
        %v1387 = vld [vmem:[#allocation2] sm:$0x3f]
        %s1388 = scalar_lea.vmem [#allocation6], 16
        %v1389 = vld [vmem:[%s1388] sm:$0xf]
        %v1391 = vcombine.high %v1387, %v1387
        %v1393 = vunpack.c.l.s4 1983009808
        %v1394 = vunpack.c.0.s8 %v1393
        %v1395 = vlaneseq
        %v1396 = vshrl.u32 %v1395, 7
        %v1397 = vsub.s32 %v1394, %v1396
        %v1398 = vrot.slane %v1387, %v1397
        %v1400 = vunpack.c.l.s4 1983009808
        %v1401 = vunpack.c.0.s8 %v1400
        %v1402 = vlaneseq
        %v1403 = vshrl.u32 %v1402, 7
        %v1404 = vsub.s32 %v1401, %v1403
        %v1405 = vrot.slane %v1391, %v1404
        %v1406 = vcombine.high %v1398, %v1398
        %1407 = vrot.lane.b32.xlu0 %v1398, 109
        %v1408 = vpop.permute.xlu0 %1407
        %1409 = vrot.lane.b32.xlu0 %v1406, 109
        %v1410 = vpop.permute.xlu0 %1409
        %1411 = vrot.lane.b32.xlu0 %v1405, 109
        %v1412 = vpop.permute.xlu0 %1411
        %vm1413 = vcmask 891904
        %v1414 = vsel %vm1413, %v1408, %v1410
        %v1415 = vsel %vm1413, %v1410, %v1412
        %v1417 = vsel %vm949, %v1389, 0
        %v1420 = vsel %vm953, %v1414, 0
        %v1423 = vsel %vm953, %v1415, 0
        %v1426 = vsel %vm953, %v1412, 0
        %1428 = vmatprep.subr.bf16.mxu0 %v1423
        %1429 = vmatpush1.bf16.msra.mxu0 %v1420
        %1430 = vmatprep.subr.bf16.mxu0 0
        %1431 = vmatpush1.bf16.msra.mxu0 0
        %1432 = vmatprep.subr.bf16.mxu0 0
        %1433 = vmatpush1.bf16.msra.mxu0 0
        %1434 = vmatprep.subr.bf16.mxu0 0
        %1435 = vmatpush1.bf16.msra.mxu0 0
        %1436 = vmatprep.subr.bf16.mxu0 0
        %1437 = vmatpush1.bf16.msra.mxu0 0
        %1438 = vmatprep.subr.bf16.mxu0 0
        %1439 = vmatpush1.bf16.msra.mxu0 0
        %1440 = vmatprep.subr.bf16.mxu0 0
        %1441 = vmatpush1.bf16.msra.mxu0 0
        %1442 = vmatprep.subr.bf16.mxu0 0
        %1443 = vmatpush1.bf16.msra.mxu0 0
        %1444 = vmatprep.subr.bf16.mxu0 0
        %1445 = vmatpush1.bf16.msra.mxu0 0
        %1446 = vmatprep.subr.bf16.mxu0 0
        %1447 = vmatpush1.bf16.msra.mxu0 0
        %1448 = vmatprep.subr.bf16.mxu0 0
        %1449 = vmatpush1.bf16.msra.mxu0 0
        %1450 = vmatprep.subr.bf16.mxu0 0
        %1451 = vmatpush1.bf16.msra.mxu0 0
        %1452 = vmatprep.subr.bf16.mxu0 0
        %1453 = vmatpush1.bf16.msra.mxu0 0
        %1454 = vmatprep.subr.bf16.mxu0 0
        %1455 = vmatpush1.bf16.msra.mxu0 0
        %1456 = vmatprep.subr.bf16.mxu0 0
        %1457 = vmatpush1.bf16.msra.mxu0 0
        %1458 = vmatprep.subr.bf16.mxu0 0
        %1459 = vmatpush1.bf16.msra.mxu0 0
        %1460 = vmatprep.mubr.bf16.mxu0 0
        %1461 = vmatmul.mubr.bf16.gmra.mrb[0].mxu0 %v1417
        %v1462 = vpop.f32.mrb[0].mxu0
        %v1463 = vadd.f32 0.0, %v1462
        %v1464 = vpop.f32.mrb[0].mxu0
        %v1465 = vadd.f32 0.0, %v1464
        %v1466 = vpop.f32.mrb[0].mxu0
        %v1467 = vpop.f32.mrb[0].mxu0
        %1468 = vdwg.mxu0
        %1469 = vmatprep.subr.bf16.mxu0 0
        %1470 = vmatpush1.bf16.msra.mxu0 %v1426
        %1471 = vmatprep.subr.bf16.mxu0 0
        %1472 = vmatpush1.bf16.msra.mxu0 0
        %1473 = vmatprep.subr.bf16.mxu0 0
        %1474 = vmatpush1.bf16.msra.mxu0 0
        %1475 = vmatprep.subr.bf16.mxu0 0
        %1476 = vmatpush1.bf16.msra.mxu0 0
        %1477 = vmatprep.subr.bf16.mxu0 0
        %1478 = vmatpush1.bf16.msra.mxu0 0
        %1479 = vmatprep.subr.bf16.mxu0 0
        %1480 = vmatpush1.bf16.msra.mxu0 0
        %1481 = vmatprep.subr.bf16.mxu0 0
        %1482 = vmatpush1.bf16.msra.mxu0 0
        %1483 = vmatprep.subr.bf16.mxu0 0
        %1484 = vmatpush1.bf16.msra.mxu0 0
        %1485 = vmatprep.subr.bf16.mxu0 0
        %1486 = vmatpush1.bf16.msra.mxu0 0
        %1487 = vmatprep.subr.bf16.mxu0 0
        %1488 = vmatpush1.bf16.msra.mxu0 0
        %1489 = vmatprep.subr.bf16.mxu0 0
        %1490 = vmatpush1.bf16.msra.mxu0 0
        %1491 = vmatprep.subr.bf16.mxu0 0
        %1492 = vmatpush1.bf16.msra.mxu0 0
        %1493 = vmatprep.subr.bf16.mxu0 0
        %1494 = vmatpush1.bf16.msra.mxu0 0
        %1495 = vmatprep.subr.bf16.mxu0 0
        %1496 = vmatpush1.bf16.msra.mxu0 0
        %1497 = vmatprep.subr.bf16.mxu0 0
        %1498 = vmatpush1.bf16.msra.mxu0 0
        %1499 = vmatprep.subr.bf16.mxu0 0
        %1500 = vmatpush1.bf16.msra.mxu0 0
        %1501 = vmatprep.mubr.bf16.mxu0 0
        %1502 = vmatmul.mubr.bf16.gmra.mrb[0].mxu0 %v1417
        %v1503 = vpop.f32.mrb[0].mxu0
        %v1504 = vadd.f32 0.0, %v1503
        %v1505 = vpop.f32.mrb[0].mxu0
        %v1506 = vpop.f32.mrb[0].mxu0
        %v1507 = vpop.f32.mrb[0].mxu0
        %1508 = vdwg.mxu0
        %v1509 = vadd.f32 %v1384, %v1463
        %v1510 = vadd.f32 %v1385, %v1465
        %v1511 = vadd.f32 %v1386, %v1504
        %v1512 = vld [vmem:[#allocation2] sm:$0x3f]
        %s1513 = scalar_lea.vmem [#allocation6], 20
        %v1514 = vld [vmem:[%s1513] sm:$0xf]
        %v1516 = vcombine.high %v1512, %v1512
        %v1518 = vunpack.c.l.s4 1983009808
        %v1519 = vunpack.c.0.s8 %v1518
        %v1520 = vlaneseq
        %v1521 = vshrl.u32 %v1520, 7
        %v1522 = vsub.s32 %v1519, %v1521
        %v1523 = vrot.slane %v1512, %v1522
        %v1525 = vunpack.c.l.s4 1983009808
        %v1526 = vunpack.c.0.s8 %v1525
        %v1527 = vlaneseq
        %v1528 = vshrl.u32 %v1527, 7
        %v1529 = vsub.s32 %v1526, %v1528
        %v1530 = vrot.slane %v1516, %v1529
        %v1531 = vcombine.high %v1523, %v1523
        %1532 = vrot.lane.b32.xlu0 %v1523, 108
        %v1533 = vpop.permute.xlu0 %1532
        %1534 = vrot.lane.b32.xlu0 %v1531, 108
        %v1535 = vpop.permute.xlu0 %1534
        %1536 = vrot.lane.b32.xlu0 %v1530, 108
        %v1537 = vpop.permute.xlu0 %1536
        %vm1538 = vcmask 883712
        %v1539 = vsel %vm1538, %v1533, %v1535
        %v1540 = vsel %vm1538, %v1535, %v1537
        %v1542 = vsel %vm949, %v1514, 0
        %v1545 = vsel %vm953, %v1539, 0
        %v1548 = vsel %vm953, %v1540, 0
        %v1551 = vsel %vm953, %v1537, 0
        %1553 = vmatprep.subr.bf16.mxu0 %v1548
        %1554 = vmatpush1.bf16.msra.mxu0 %v1545
        %1555 = vmatprep.subr.bf16.mxu0 0
        %1556 = vmatpush1.bf16.msra.mxu0 0
        %1557 = vmatprep.subr.bf16.mxu0 0
        %1558 = vmatpush1.bf16.msra.mxu0 0
        %1559 = vmatprep.subr.bf16.mxu0 0
        %1560 = vmatpush1.bf16.msra.mxu0 0
        %1561 = vmatprep.subr.bf16.mxu0 0
        %1562 = vmatpush1.bf16.msra.mxu0 0
        %1563 = vmatprep.subr.bf16.mxu0 0
        %1564 = vmatpush1.bf16.msra.mxu0 0
        %1565 = vmatprep.subr.bf16.mxu0 0
        %1566 = vmatpush1.bf16.msra.mxu0 0
        %1567 = vmatprep.subr.bf16.mxu0 0
        %1568 = vmatpush1.bf16.msra.mxu0 0
        %1569 = vmatprep.subr.bf16.mxu0 0
        %1570 = vmatpush1.bf16.msra.mxu0 0
        %1571 = vmatprep.subr.bf16.mxu0 0
        %1572 = vmatpush1.bf16.msra.mxu0 0
        %1573 = vmatprep.subr.bf16.mxu0 0
        %1574 = vmatpush1.bf16.msra.mxu0 0
        %1575 = vmatprep.subr.bf16.mxu0 0
        %1576 = vmatpush1.bf16.msra.mxu0 0
        %1577 = vmatprep.subr.bf16.mxu0 0
        %1578 = vmatpush1.bf16.msra.mxu0 0
        %1579 = vmatprep.subr.bf16.mxu0 0
        %1580 = vmatpush1.bf16.msra.mxu0 0
        %1581 = vmatprep.subr.bf16.mxu0 0
        %1582 = vmatpush1.bf16.msra.mxu0 0
        %1583 = vmatprep.subr.bf16.mxu0 0
        %1584 = vmatpush1.bf16.msra.mxu0 0
        %1585 = vmatprep.mubr.bf16.mxu0 0
        %1586 = vmatmul.mubr.bf16.gmra.mrb[0].mxu0 %v1542
        %v1587 = vpop.f32.mrb[0].mxu0
        %v1588 = vadd.f32 0.0, %v1587
        %v1589 = vpop.f32.mrb[0].mxu0
        %v1590 = vadd.f32 0.0, %v1589
        %v1591 = vpop.f32.mrb[0].mxu0
        %v1592 = vpop.f32.mrb[0].mxu0
        %1593 = vdwg.mxu0
        %1594 = vmatprep.subr.bf16.mxu0 0
        %1595 = vmatpush1.bf16.msra.mxu0 %v1551
        %1596 = vmatprep.subr.bf16.mxu0 0
        %1597 = vmatpush1.bf16.msra.mxu0 0
        %1598 = vmatprep.subr.bf16.mxu0 0
        %1599 = vmatpush1.bf16.msra.mxu0 0
        %1600 = vmatprep.subr.bf16.mxu0 0
        %1601 = vmatpush1.bf16.msra.mxu0 0
        %1602 = vmatprep.subr.bf16.mxu0 0
        %1603 = vmatpush1.bf16.msra.mxu0 0
        %1604 = vmatprep.subr.bf16.mxu0 0
        %1605 = vmatpush1.bf16.msra.mxu0 0
        %1606 = vmatprep.subr.bf16.mxu0 0
        %1607 = vmatpush1.bf16.msra.mxu0 0
        %1608 = vmatprep.subr.bf16.mxu0 0
        %1609 = vmatpush1.bf16.msra.mxu0 0
        %1610 = vmatprep.subr.bf16.mxu0 0
        %1611 = vmatpush1.bf16.msra.mxu0 0
        %1612 = vmatprep.subr.bf16.mxu0 0
        %1613 = vmatpush1.bf16.msra.mxu0 0
        %1614 = vmatprep.subr.bf16.mxu0 0
        %1615 = vmatpush1.bf16.msra.mxu0 0
        %1616 = vmatprep.subr.bf16.mxu0 0
        %1617 = vmatpush1.bf16.msra.mxu0 0
        %1618 = vmatprep.subr.bf16.mxu0 0
        %1619 = vmatpush1.bf16.msra.mxu0 0
        %1620 = vmatprep.subr.bf16.mxu0 0
        %1621 = vmatpush1.bf16.msra.mxu0 0
        %1622 = vmatprep.subr.bf16.mxu0 0
        %1623 = vmatpush1.bf16.msra.mxu0 0
        %1624 = vmatprep.subr.bf16.mxu0 0
        %1625 = vmatpush1.bf16.msra.mxu0 0
        %1626 = vmatprep.mubr.bf16.mxu0 0
        %1627 = vmatmul.mubr.bf16.gmra.mrb[0].mxu0 %v1542
        %v1628 = vpop.f32.mrb[0].mxu0
        %v1629 = vadd.f32 0.0, %v1628
        %v1630 = vpop.f32.mrb[0].mxu0
        %v1631 = vpop.f32.mrb[0].mxu0
        %v1632 = vpop.f32.mrb[0].mxu0
        %1633 = vdwg.mxu0
        %v1634 = vadd.f32 %v1509, %v1588
        %v1635 = vadd.f32 %v1510, %v1590
        %v1636 = vadd.f32 %v1511, %v1629
        %v1637 = vld [vmem:[#allocation2] sm:$0x3f]
        %s1638 = scalar_lea.vmem [#allocation6], 24
        %v1639 = vld [vmem:[%s1638] sm:$0xf]
        %v1641 = vcombine.high %v1637, %v1637
        %v1643 = vunpack.c.l.s4 1983009808
        %v1644 = vunpack.c.0.s8 %v1643
        %v1645 = vlaneseq
        %v1646 = vshrl.u32 %v1645, 7
        %v1647 = vsub.s32 %v1644, %v1646
        %v1648 = vrot.slane %v1637, %v1647
        %v1650 = vunpack.c.l.s4 1983009808
        %v1651 = vunpack.c.0.s8 %v1650
        %v1652 = vlaneseq
        %v1653 = vshrl.u32 %v1652, 7
        %v1654 = vsub.s32 %v1651, %v1653
        %v1655 = vrot.slane %v1641, %v1654
        %v1656 = vcombine.high %v1648, %v1648
        %1657 = vrot.lane.b32.xlu0 %v1648, 92
        %v1658 = vpop.permute.xlu0 %1657
        %1659 = vrot.lane.b32.xlu0 %v1656, 92
        %v1660 = vpop.permute.xlu0 %1659
        %1661 = vrot.lane.b32.xlu0 %v1655, 92
        %v1662 = vpop.permute.xlu0 %1661
        %vm1663 = vcmask 752640
        %v1664 = vsel %vm1663, %v1658, %v1660
        %v1665 = vsel %vm1663, %v1660, %v1662
        %v1667 = vsel %vm949, %v1639, 0
        %v1670 = vsel %vm953, %v1664, 0
        %v1673 = vsel %vm953, %v1665, 0
        %v1676 = vsel %vm953, %v1662, 0
        %1678 = vmatprep.subr.bf16.mxu0 %v1673
        %1679 = vmatpush1.bf16.msra.mxu0 %v1670
        %1680 = vmatprep.subr.bf16.mxu0 0
        %1681 = vmatpush1.bf16.msra.mxu0 0
        %1682 = vmatprep.subr.bf16.mxu0 0
        %1683 = vmatpush1.bf16.msra.mxu0 0
        %1684 = vmatprep.subr.bf16.mxu0 0
        %1685 = vmatpush1.bf16.msra.mxu0 0
        %1686 = vmatprep.subr.bf16.mxu0 0
        %1687 = vmatpush1.bf16.msra.mxu0 0
        %1688 = vmatprep.subr.bf16.mxu0 0
        %1689 = vmatpush1.bf16.msra.mxu0 0
        %1690 = vmatprep.subr.bf16.mxu0 0
        %1691 = vmatpush1.bf16.msra.mxu0 0
        %1692 = vmatprep.subr.bf16.mxu0 0
        %1693 = vmatpush1.bf16.msra.mxu0 0
        %1694 = vmatprep.subr.bf16.mxu0 0
        %1695 = vmatpush1.bf16.msra.mxu0 0
        %1696 = vmatprep.subr.bf16.mxu0 0
        %1697 = vmatpush1.bf16.msra.mxu0 0
        %1698 = vmatprep.subr.bf16.mxu0 0
        %1699 = vmatpush1.bf16.msra.mxu0 0
        %1700 = vmatprep.subr.bf16.mxu0 0
        %1701 = vmatpush1.bf16.msra.mxu0 0
        %1702 = vmatprep.subr.bf16.mxu0 0
        %1703 = vmatpush1.bf16.msra.mxu0 0
        %1704 = vmatprep.subr.bf16.mxu0 0
        %1705 = vmatpush1.bf16.msra.mxu0 0
        %1706 = vmatprep.subr.bf16.mxu0 0
        %1707 = vmatpush1.bf16.msra.mxu0 0
        %1708 = vmatprep.subr.bf16.mxu0 0
        %1709 = vmatpush1.bf16.msra.mxu0 0
        %1710 = vmatprep.mubr.bf16.mxu0 0
        %1711 = vmatmul.mubr.bf16.gmra.mrb[0].mxu0 %v1667
        %v1712 = vpop.f32.mrb[0].mxu0
        %v1713 = vadd.f32 0.0, %v1712
        %v1714 = vpop.f32.mrb[0].mxu0
        %v1715 = vadd.f32 0.0, %v1714
        %v1716 = vpop.f32.mrb[0].mxu0
        %v1717 = vpop.f32.mrb[0].mxu0
        %1718 = vdwg.mxu0
        %1719 = vmatprep.subr.bf16.mxu0 0
        %1720 = vmatpush1.bf16.msra.mxu0 %v1676
        %1721 = vmatprep.subr.bf16.mxu0 0
        %1722 = vmatpush1.bf16.msra.mxu0 0
        %1723 = vmatprep.subr.bf16.mxu0 0
        %1724 = vmatpush1.bf16.msra.mxu0 0
        %1725 = vmatprep.subr.bf16.mxu0 0
        %1726 = vmatpush1.bf16.msra.mxu0 0
        %1727 = vmatprep.subr.bf16.mxu0 0
        %1728 = vmatpush1.bf16.msra.mxu0 0
        %1729 = vmatprep.subr.bf16.mxu0 0
        %1730 = vmatpush1.bf16.msra.mxu0 0
        %1731 = vmatprep.subr.bf16.mxu0 0
        %1732 = vmatpush1.bf16.msra.mxu0 0
        %1733 = vmatprep.subr.bf16.mxu0 0
        %1734 = vmatpush1.bf16.msra.mxu0 0
        %1735 = vmatprep.subr.bf16.mxu0 0
        %1736 = vmatpush1.bf16.msra.mxu0 0
        %1737 = vmatprep.subr.bf16.mxu0 0
        %1738 = vmatpush1.bf16.msra.mxu0 0
        %1739 = vmatprep.subr.bf16.mxu0 0
        %1740 = vmatpush1.bf16.msra.mxu0 0
        %1741 = vmatprep.subr.bf16.mxu0 0
        %1742 = vmatpush1.bf16.msra.mxu0 0
        %1743 = vmatprep.subr.bf16.mxu0 0
        %1744 = vmatpush1.bf16.msra.mxu0 0
        %1745 = vmatprep.subr.bf16.mxu0 0
        %1746 = vmatpush1.bf16.msra.mxu0 0
        %1747 = vmatprep.subr.bf16.mxu0 0
        %1748 = vmatpush1.bf16.msra.mxu0 0
        %1749 = vmatprep.subr.bf16.mxu0 0
        %1750 = vmatpush1.bf16.msra.mxu0 0
        %1751 = vmatprep.mubr.bf16.mxu0 0
        %1752 = vmatmul.mubr.bf16.gmra.mrb[0].mxu0 %v1667
        %v1753 = vpop.f32.mrb[0].mxu0
        %v1754 = vadd.f32 0.0, %v1753
        %v1755 = vpop.f32.mrb[0].mxu0
        %v1756 = vpop.f32.mrb[0].mxu0
        %v1757 = vpop.f32.mrb[0].mxu0
        %1758 = vdwg.mxu0
        %v1759 = vadd.f32 %v1634, %v1713
        %v1760 = vadd.f32 %v1635, %v1715
        %v1761 = vadd.f32 %v1636, %v1754
        %v1762 = vld [vmem:[#allocation2] sm:$0x3f]
        %s1763 = scalar_lea.vmem [#allocation6], 28
        %v1764 = vld [vmem:[%s1763] sm:$0xf]
        %v1766 = vcombine.high %v1762, %v1762
        %v1768 = vunpack.c.l.s4 1983009808
        %v1769 = vunpack.c.0.s8 %v1768
        %v1770 = vlaneseq
        %v1771 = vshrl.u32 %v1770, 7
        %v1772 = vsub.s32 %v1769, %v1771
        %v1773 = vrot.slane %v1762, %v1772
        %v1775 = vunpack.c.l.s4 1983009808
        %v1776 = vunpack.c.0.s8 %v1775
        %v1777 = vlaneseq
        %v1778 = vshrl.u32 %v1777, 7
        %v1779 = vsub.s32 %v1776, %v1778
        %v1780 = vrot.slane %v1766, %v1779
        %v1781 = vcombine.high %v1773, %v1773
        %1782 = vrot.lane.b32.xlu0 %v1773, 91
        %v1783 = vpop.permute.xlu0 %1782
        %1784 = vrot.lane.b32.xlu0 %v1781, 91
        %v1785 = vpop.permute.xlu0 %1784
        %1786 = vrot.lane.b32.xlu0 %v1780, 91
        %v1787 = vpop.permute.xlu0 %1786
        %vm1788 = vcmask 744448
        %v1789 = vsel %vm1788, %v1783, %v1785
        %v1790 = vsel %vm1788, %v1785, %v1787
        %v1792 = vsel %vm949, %v1764, 0
        %v1795 = vsel %vm953, %v1789, 0
        %v1798 = vsel %vm953, %v1790, 0
        %v1801 = vsel %vm953, %v1787, 0
        %1803 = vmatprep.subr.bf16.mxu0 %v1798
        %1804 = vmatpush1.bf16.msra.mxu0 %v1795
        %1805 = vmatprep.subr.bf16.mxu0 0
        %1806 = vmatpush1.bf16.msra.mxu0 0
        %1807 = vmatprep.subr.bf16.mxu0 0
        %1808 = vmatpush1.bf16.msra.mxu0 0
        %1809 = vmatprep.subr.bf16.mxu0 0
        %1810 = vmatpush1.bf16.msra.mxu0 0
        %1811 = vmatprep.subr.bf16.mxu0 0
        %1812 = vmatpush1.bf16.msra.mxu0 0
        %1813 = vmatprep.subr.bf16.mxu0 0
        %1814 = vmatpush1.bf16.msra.mxu0 0
        %1815 = vmatprep.subr.bf16.mxu0 0
        %1816 = vmatpush1.bf16.msra.mxu0 0
        %1817 = vmatprep.subr.bf16.mxu0 0
        %1818 = vmatpush1.bf16.msra.mxu0 0
        %1819 = vmatprep.subr.bf16.mxu0 0
        %1820 = vmatpush1.bf16.msra.mxu0 0
        %1821 = vmatprep.subr.bf16.mxu0 0
        %1822 = vmatpush1.bf16.msra.mxu0 0
        %1823 = vmatprep.subr.bf16.mxu0 0
        %1824 = vmatpush1.bf16.msra.mxu0 0
        %1825 = vmatprep.subr.bf16.mxu0 0
        %1826 = vmatpush1.bf16.msra.mxu0 0
        %1827 = vmatprep.subr.bf16.mxu0 0
        %1828 = vmatpush1.bf16.msra.mxu0 0
        %1829 = vmatprep.subr.bf16.mxu0 0
        %1830 = vmatpush1.bf16.msra.mxu0 0
        %1831 = vmatprep.subr.bf16.mxu0 0
        %1832 = vmatpush1.bf16.msra.mxu0 0
        %1833 = vmatprep.subr.bf16.mxu0 0
        %1834 = vmatpush1.bf16.msra.mxu0 0
        %1835 = vmatprep.mubr.bf16.mxu0 0
        %1836 = vmatmul.mubr.bf16.gmra.mrb[0].mxu0 %v1792
        %v1837 = vpop.f32.mrb[0].mxu0
        %v1838 = vadd.f32 0.0, %v1837
        %v1839 = vpop.f32.mrb[0].mxu0
        %v1840 = vadd.f32 0.0, %v1839
        %v1841 = vpop.f32.mrb[0].mxu0
        %v1842 = vpop.f32.mrb[0].mxu0
        %1843 = vdwg.mxu0
        %1844 = vmatprep.subr.bf16.mxu0 0
        %1845 = vmatpush1.bf16.msra.mxu0 %v1801
        %1846 = vmatprep.subr.bf16.mxu0 0
        %1847 = vmatpush1.bf16.msra.mxu0 0
        %1848 = vmatprep.subr.bf16.mxu0 0
        %1849 = vmatpush1.bf16.msra.mxu0 0
        %1850 = vmatprep.subr.bf16.mxu0 0
        %1851 = vmatpush1.bf16.msra.mxu0 0
        %1852 = vmatprep.subr.bf16.mxu0 0
        %1853 = vmatpush1.bf16.msra.mxu0 0
        %1854 = vmatprep.subr.bf16.mxu0 0
        %1855 = vmatpush1.bf16.msra.mxu0 0
        %1856 = vmatprep.subr.bf16.mxu0 0
        %1857 = vmatpush1.bf16.msra.mxu0 0
        %1858 = vmatprep.subr.bf16.mxu0 0
        %1859 = vmatpush1.bf16.msra.mxu0 0
        %1860 = vmatprep.subr.bf16.mxu0 0
        %1861 = vmatpush1.bf16.msra.mxu0 0
        %1862 = vmatprep.subr.bf16.mxu0 0
        %1863 = vmatpush1.bf16.msra.mxu0 0
        %1864 = vmatprep.subr.bf16.mxu0 0
        %1865 = vmatpush1.bf16.msra.mxu0 0
        %1866 = vmatprep.subr.bf16.mxu0 0
        %1867 = vmatpush1.bf16.msra.mxu0 0
        %1868 = vmatprep.subr.bf16.mxu0 0
        %1869 = vmatpush1.bf16.msra.mxu0 0
        %1870 = vmatprep.subr.bf16.mxu0 0
        %1871 = vmatpush1.bf16.msra.mxu0 0
        %1872 = vmatprep.subr.bf16.mxu0 0
        %1873 = vmatpush1.bf16.msra.mxu0 0
        %1874 = vmatprep.subr.bf16.mxu0 0
        %1875 = vmatpush1.bf16.msra.mxu0 0
        %1876 = vmatprep.mubr.bf16.mxu0 0
        %1877 = vmatmul.mubr.bf16.gmra.mrb[0].mxu0 %v1792
        %v1878 = vpop.f32.mrb[0].mxu0
        %v1879 = vadd.f32 0.0, %v1878
        %v1880 = vpop.f32.mrb[0].mxu0
        %v1881 = vpop.f32.mrb[0].mxu0
        %v1882 = vpop.f32.mrb[0].mxu0
        %1883 = vdwg.mxu0
        %v1884 = vadd.f32 %v1759, %v1838
        %v1885 = vadd.f32 %v1760, %v1840
        %v1886 = vadd.f32 %v1761, %v1879
        %v1887 = vld [vmem:[#allocation2] sm:$0x3f]
        %s1888 = scalar_lea.vmem [#allocation6], 32
        %v1889 = vld [vmem:[%s1888] sm:$0xf]
        %v1891 = vcombine.high %v1887, %v1887
        %v1893 = vunpack.c.l.s4 1983009808
        %v1894 = vunpack.c.0.s8 %v1893
        %v1895 = vlaneseq
        %v1896 = vshrl.u32 %v1895, 7
        %v1897 = vsub.s32 %v1894, %v1896
        %v1898 = vrot.slane %v1887, %v1897
        %v1900 = vunpack.c.l.s4 1983009808
        %v1901 = vunpack.c.0.s8 %v1900
        %v1902 = vlaneseq
        %v1903 = vshrl.u32 %v1902, 7
        %v1904 = vsub.s32 %v1901, %v1903
        %v1905 = vrot.slane %v1891, %v1904
        %v1906 = vcombine.high %v1898, %v1898
        %1907 = vrot.lane.b32.xlu0 %v1898, 90
        %v1908 = vpop.permute.xlu0 %1907
        %1909 = vrot.lane.b32.xlu0 %v1906, 90
        %v1910 = vpop.permute.xlu0 %1909
        %1911 = vrot.lane.b32.xlu0 %v1905, 90
        %v1912 = vpop.permute.xlu0 %1911
        %vm1913 = vcmask 736256
        %v1914 = vsel %vm1913, %v1908, %v1910
        %v1915 = vsel %vm1913, %v1910, %v1912
        %v1917 = vsel %vm949, %v1889, 0
        %v1920 = vsel %vm953, %v1914, 0
        %v1923 = vsel %vm953, %v1915, 0
        %v1926 = vsel %vm953, %v1912, 0
        %1928 = vmatprep.subr.bf16.mxu0 %v1923
        %1929 = vmatpush1.bf16.msra.mxu0 %v1920
        %1930 = vmatprep.subr.bf16.mxu0 0
        %1931 = vmatpush1.bf16.msra.mxu0 0
        %1932 = vmatprep.subr.bf16.mxu0 0
        %1933 = vmatpush1.bf16.msra.mxu0 0
        %1934 = vmatprep.subr.bf16.mxu0 0
        %1935 = vmatpush1.bf16.msra.mxu0 0
        %1936 = vmatprep.subr.bf16.mxu0 0
        %1937 = vmatpush1.bf16.msra.mxu0 0
        %1938 = vmatprep.subr.bf16.mxu0 0
        %1939 = vmatpush1.bf16.msra.mxu0 0
        %1940 = vmatprep.subr.bf16.mxu0 0
        %1941 = vmatpush1.bf16.msra.mxu0 0
        %1942 = vmatprep.subr.bf16.mxu0 0
        %1943 = vmatpush1.bf16.msra.mxu0 0
        %1944 = vmatprep.subr.bf16.mxu0 0
        %1945 = vmatpush1.bf16.msra.mxu0 0
        %1946 = vmatprep.subr.bf16.mxu0 0
        %1947 = vmatpush1.bf16.msra.mxu0 0
        %1948 = vmatprep.subr.bf16.mxu0 0
        %1949 = vmatpush1.bf16.msra.mxu0 0
        %1950 = vmatprep.subr.bf16.mxu0 0
        %1951 = vmatpush1.bf16.msra.mxu0 0
        %1952 = vmatprep.subr.bf16.mxu0 0
        %1953 = vmatpush1.bf16.msra.mxu0 0
        %1954 = vmatprep.subr.bf16.mxu0 0
        %1955 = vmatpush1.bf16.msra.mxu0 0
        %1956 = vmatprep.subr.bf16.mxu0 0
        %1957 = vmatpush1.bf16.msra.mxu0 0
        %1958 = vmatprep.subr.bf16.mxu0 0
        %1959 = vmatpush1.bf16.msra.mxu0 0
        %1960 = vmatprep.mubr.bf16.mxu0 0
        %1961 = vmatmul.mubr.bf16.gmra.mrb[0].mxu0 %v1917
        %v1962 = vpop.f32.mrb[0].mxu0
        %v1963 = vadd.f32 0.0, %v1962
        %v1964 = vpop.f32.mrb[0].mxu0
        %v1965 = vadd.f32 0.0, %v1964
        %v1966 = vpop.f32.mrb[0].mxu0
        %v1967 = vpop.f32.mrb[0].mxu0
        %1968 = vdwg.mxu0
        %1969 = vmatprep.subr.bf16.mxu0 0
        %1970 = vmatpush1.bf16.msra.mxu0 %v1926
        %1971 = vmatprep.subr.bf16.mxu0 0
        %1972 = vmatpush1.bf16.msra.mxu0 0
        %1973 = vmatprep.subr.bf16.mxu0 0
        %1974 = vmatpush1.bf16.msra.mxu0 0
        %1975 = vmatprep.subr.bf16.mxu0 0
        %1976 = vmatpush1.bf16.msra.mxu0 0
        %1977 = vmatprep.subr.bf16.mxu0 0
        %1978 = vmatpush1.bf16.msra.mxu0 0
        %1979 = vmatprep.subr.bf16.mxu0 0
        %1980 = vmatpush1.bf16.msra.mxu0 0
        %1981 = vmatprep.subr.bf16.mxu0 0
        %1982 = vmatpush1.bf16.msra.mxu0 0
        %1983 = vmatprep.subr.bf16.mxu0 0
        %1984 = vmatpush1.bf16.msra.mxu0 0
        %1985 = vmatprep.subr.bf16.mxu0 0
        %1986 = vmatpush1.bf16.msra.mxu0 0
        %1987 = vmatprep.subr.bf16.mxu0 0
        %1988 = vmatpush1.bf16.msra.mxu0 0
        %1989 = vmatprep.subr.bf16.mxu0 0
        %1990 = vmatpush1.bf16.msra.mxu0 0
        %1991 = vmatprep.subr.bf16.mxu0 0
        %1992 = vmatpush1.bf16.msra.mxu0 0
        %1993 = vmatprep.subr.bf16.mxu0 0
        %1994 = vmatpush1.bf16.msra.mxu0 0
        %1995 = vmatprep.subr.bf16.mxu0 0
        %1996 = vmatpush1.bf16.msra.mxu0 0
        %1997 = vmatprep.subr.bf16.mxu0 0
        %1998 = vmatpush1.bf16.msra.mxu0 0
        %1999 = vmatprep.subr.bf16.mxu0 0
        %2000 = vmatpush1.bf16.msra.mxu0 0
        %2001 = vmatprep.mubr.bf16.mxu0 0
        %2002 = vmatmul.mubr.bf16.gmra.mrb[0].mxu0 %v1917
        %v2003 = vpop.f32.mrb[0].mxu0
        %v2004 = vadd.f32 0.0, %v2003
        %v2005 = vpop.f32.mrb[0].mxu0
        %v2006 = vpop.f32.mrb[0].mxu0
        %v2007 = vpop.f32.mrb[0].mxu0
        %2008 = vdwg.mxu0
        %v2009 = vadd.f32 %v1884, %v1963
        %v2010 = vadd.f32 %v1885, %v1965
        %v2011 = vadd.f32 %v1886, %v2004
        %v2012 = vld [vmem:[#allocation8] sm:$0xff]
        %2014 = vset.pattern.permute.xlu0 0
        %2015 = vperm.xlu0 %2014, %v2012
        %v2016 = vpop.permute.xlu0 %2015
        %v2018 = vadd.f32 %v2009, %v2016
        %v2019 = vadd.f32 %v2010, %v2016
        %v2020 = vadd.f32 %v2011, %v2016
        %v2021 = vmax.f32 %v2018, 0.0
        %v2022 = vmax.f32 %v2019, 0.0
        %v2023 = vmax.f32 %v2020, 0.0
        %v2024 = vsel %vm352, 1, 0
        %v2025 = vsel %vm353, 1, 0
        %v2026 = vsel %vm354, 1, 0
        %vm2027 = vcmp.eq.s32.totalorder %v2024, 1
        %vm2028 = vcmp.eq.s32.totalorder %v2025, 1
        %vm2029 = vcmp.eq.s32.totalorder %v2026, 1
        %v2030 = vsel %vm2027, %v2021, 0.0
        %v2031 = vsel %vm2028, %v2022, 0.0
        %v2032 = vsel %vm2029, %v2023, 0.0
        %v2033 = vpack.c.bf16 %v2030, %v2030
        %v2034 = vpack.c.bf16 %v2031, %v2031
        %v2035 = vpack.c.bf16 %v2032, %v2032
        %vm2036 = vcmask 150528
        %2037 = vst.msk [vmem:[#allocation3] sm:$0xf] %vm2036, 0
        %v2041 = vunpack.c.l.b16 %v2033
        %v2042 = vunpack.c.l.b16 %v2034
        %v2043 = vunpack.c.l.b16 %v2035
        %v2044 = vpack.c.b16 %v2042, %v2041
        %v2045 = vpack.c.b16 %v2043, %v2043
        %2046 = vrot.lane.b32.xlu0 %v2044, 19
        %v2047 = vpop.permute.xlu0 %2046
        %2048 = vrot.lane.b32.xlu0 %v2045, 19
        %v2049 = vpop.permute.xlu0 %2048
        %v2050 = vrot.slane %v2047, 4
        %vm2051 = vcmask 154624
        %v2052 = vsel %vm2051, %v2050, %v2047
        %v2053 = vsel %vm2051, %v2050, %v2049
        %vm2056 = vcmask 1043608
        %vm2057 = vcmask 1047556
        %vm2058 = vmor %vm2057, %vm2056
        %2059 = vst.msk [vmem:[#allocation3] sm:$0xff] %vm2058, %v2052
        %vm2060 = vcmask 412672
        %2061 = vst.msk [vmem:[#allocation3 + $0x8] sm:$0xf] %vm2060, %v2053
        %vm2062 = vcmask 699800
        %2063 = vst.msk [vmem:[#allocation3 + $0x8] sm:$0xf] %vm2062, 0
        %v2064 = vld [vmem:[#allocation3] sm:$0xff]
        %v2065 = vld [vmem:[#allocation3 + $0x8] sm:$0xf]
        %v2066 = vld [vmem:[#allocation9] sm:$0xf]
        %s2067 = scalar_lea.vmem [#allocation9], 4
        %v2068 = vld [vmem:[%s2067] sm:$0xf]
        %v2071 = vunpack.c.l.b16 %v2064
        %v2072 = vunpack.c.h.b16 %v2064
        %v2073 = vunpack.c.l.b16 %v2065
        %v2074 = vpack.c.b16 %v2071, %v2071
        %v2075 = vpack.c.b16 %v2072, %v2072
        %v2076 = vpack.c.b16 %v2073, %v2073
        %2077 = vrot.lane.b32.xlu0 %v2074, 127
        %v2078 = vpop.permute.xlu0 %2077
        %2079 = vrot.lane.b32.xlu0 %v2075, 127
        %v2080 = vpop.permute.xlu0 %2079
        %2081 = vrot.lane.b32.xlu0 %v2076, 127
        %v2082 = vpop.permute.xlu0 %2081
        %v2083 = vsel %vm615, %v2078, %v2080
        %v2084 = vsel %vm615, %v2080, %v2082
        %vm2085 = vcmask 64512
        %v2087 = vsel %vm2085, %v2068, 0
        %vm2089 = vcmask 1043456
        %v2091 = vsel %vm2089, %v2083, 0
        %v2094 = vsel %vm2089, %v2084, 0
        %v2097 = vsel %vm2089, %v2082, 0
        %2099 = vmatprep.subr.bf16.mxu0 %v2094
        %2100 = vmatpush1.bf16.msra.mxu0 %v2091
        %2101 = vmatprep.subr.bf16.mxu0 0
        %2102 = vmatpush1.bf16.msra.mxu0 0
        %2103 = vmatprep.subr.bf16.mxu0 0
        %2104 = vmatpush1.bf16.msra.mxu0 0
        %2105 = vmatprep.subr.bf16.mxu0 0
        %2106 = vmatpush1.bf16.msra.mxu0 0
        %2107 = vmatprep.subr.bf16.mxu0 0
        %2108 = vmatpush1.bf16.msra.mxu0 0
        %2109 = vmatprep.subr.bf16.mxu0 0
        %2110 = vmatpush1.bf16.msra.mxu0 0
        %2111 = vmatprep.subr.bf16.mxu0 0
        %2112 = vmatpush1.bf16.msra.mxu0 0
        %2113 = vmatprep.subr.bf16.mxu0 0
        %2114 = vmatpush1.bf16.msra.mxu0 0
        %2115 = vmatprep.subr.bf16.mxu0 0
        %2116 = vmatpush1.bf16.msra.mxu0 0
        %2117 = vmatprep.subr.bf16.mxu0 0
        %2118 = vmatpush1.bf16.msra.mxu0 0
        %2119 = vmatprep.subr.bf16.mxu0 0
        %2120 = vmatpush1.bf16.msra.mxu0 0
        %2121 = vmatprep.subr.bf16.mxu0 0
        %2122 = vmatpush1.bf16.msra.mxu0 0
        %2123 = vmatprep.subr.bf16.mxu0 0
        %2124 = vmatpush1.bf16.msra.mxu0 0
        %2125 = vmatprep.subr.bf16.mxu0 0
        %2126 = vmatpush1.bf16.msra.mxu0 0
        %2127 = vmatprep.subr.bf16.mxu0 0
        %2128 = vmatpush1.bf16.msra.mxu0 0
        %2129 = vmatprep.subr.bf16.mxu0 0
        %2130 = vmatpush1.bf16.msra.mxu0 0
        %2131 = vmatprep.mubr.bf16.mxu0 0
        %2132 = vmatmul.mubr.bf16.gmra.mrb[0].mxu0 %v2087
        %v2133 = vpop.f32.mrb[0].mxu0
        %v2134 = vadd.f32 0.0, %v2133
        %v2135 = vpop.f32.mrb[0].mxu0
        %v2136 = vadd.f32 0.0, %v2135
        %v2137 = vpop.f32.mrb[0].mxu0
        %v2138 = vpop.f32.mrb[0].mxu0
        %2139 = vdwg.mxu0
        %2140 = vmatprep.subr.bf16.mxu0 0
        %2141 = vmatpush1.bf16.msra.mxu0 %v2097
        %2142 = vmatprep.subr.bf16.mxu0 0
        %2143 = vmatpush1.bf16.msra.mxu0 0
        %2144 = vmatprep.subr.bf16.mxu0 0
        %2145 = vmatpush1.bf16.msra.mxu0 0
        %2146 = vmatprep.subr.bf16.mxu0 0
        %2147 = vmatpush1.bf16.msra.mxu0 0
        %2148 = vmatprep.subr.bf16.mxu0 0
        %2149 = vmatpush1.bf16.msra.mxu0 0
        %2150 = vmatprep.subr.bf16.mxu0 0
        %2151 = vmatpush1.bf16.msra.mxu0 0
        %2152 = vmatprep.subr.bf16.mxu0 0
        %2153 = vmatpush1.bf16.msra.mxu0 0
        %2154 = vmatprep.subr.bf16.mxu0 0
        %2155 = vmatpush1.bf16.msra.mxu0 0
        %2156 = vmatprep.subr.bf16.mxu0 0
        %2157 = vmatpush1.bf16.msra.mxu0 0
        %2158 = vmatprep.subr.bf16.mxu0 0
        %2159 = vmatpush1.bf16.msra.mxu0 0
        %2160 = vmatprep.subr.bf16.mxu0 0
        %2161 = vmatpush1.bf16.msra.mxu0 0
        %2162 = vmatprep.subr.bf16.mxu0 0
        %2163 = vmatpush1.bf16.msra.mxu0 0
        %2164 = vmatprep.subr.bf16.mxu0 0
        %2165 = vmatpush1.bf16.msra.mxu0 0
        %2166 = vmatprep.subr.bf16.mxu0 0
        %2167 = vmatpush1.bf16.msra.mxu0 0
        %2168 = vmatprep.subr.bf16.mxu0 0
        %2169 = vmatpush1.bf16.msra.mxu0 0
        %2170 = vmatprep.subr.bf16.mxu0 0
        %2171 = vmatpush1.bf16.msra.mxu0 0
        %2172 = vmatprep.mubr.bf16.mxu0 0
        %2173 = vmatmul.mubr.bf16.gmra.mrb[0].mxu0 %v2087
        %v2174 = vpop.f32.mrb[0].mxu0
        %v2175 = vadd.f32 0.0, %v2174
        %v2176 = vpop.f32.mrb[0].mxu0
        %v2177 = vpop.f32.mrb[0].mxu0
        %v2178 = vpop.f32.mrb[0].mxu0
        %2179 = vdwg.mxu0
        %v2181 = vsel %vm2085, %v2066, 0
        %v2184 = vsel %vm2089, %v2074, 0
        %v2187 = vsel %vm2089, %v2075, 0
        %v2190 = vsel %vm2089, %v2076, 0
        %2192 = vmatprep.subr.bf16.mxu0 %v2187
        %2193 = vmatpush1.bf16.msra.mxu0 %v2184
        %2194 = vmatprep.subr.bf16.mxu0 0
        %2195 = vmatpush1.bf16.msra.mxu0 0
        %2196 = vmatprep.subr.bf16.mxu0 0
        %2197 = vmatpush1.bf16.msra.mxu0 0
        %2198 = vmatprep.subr.bf16.mxu0 0
        %2199 = vmatpush1.bf16.msra.mxu0 0
        %2200 = vmatprep.subr.bf16.mxu0 0
        %2201 = vmatpush1.bf16.msra.mxu0 0
        %2202 = vmatprep.subr.bf16.mxu0 0
        %2203 = vmatpush1.bf16.msra.mxu0 0
        %2204 = vmatprep.subr.bf16.mxu0 0
        %2205 = vmatpush1.bf16.msra.mxu0 0
        %2206 = vmatprep.subr.bf16.mxu0 0
        %2207 = vmatpush1.bf16.msra.mxu0 0
        %2208 = vmatprep.subr.bf16.mxu0 0
        %2209 = vmatpush1.bf16.msra.mxu0 0
        %2210 = vmatprep.subr.bf16.mxu0 0
        %2211 = vmatpush1.bf16.msra.mxu0 0
        %2212 = vmatprep.subr.bf16.mxu0 0
        %2213 = vmatpush1.bf16.msra.mxu0 0
        %2214 = vmatprep.subr.bf16.mxu0 0
        %2215 = vmatpush1.bf16.msra.mxu0 0
        %2216 = vmatprep.subr.bf16.mxu0 0
        %2217 = vmatpush1.bf16.msra.mxu0 0
        %2218 = vmatprep.subr.bf16.mxu0 0
        %2219 = vmatpush1.bf16.msra.mxu0 0
        %2220 = vmatprep.subr.bf16.mxu0 0
        %2221 = vmatpush1.bf16.msra.mxu0 0
        %2222 = vmatprep.subr.bf16.mxu0 0
        %2223 = vmatpush1.bf16.msra.mxu0 0
        %2224 = vmatprep.mubr.bf16.mxu0 0
        %2225 = vmatmul.mubr.bf16.gmra.mrb[0].mxu0 %v2181
        %v2226 = vpop.f32.mrb[0].mxu0
        %v2227 = vadd.f32 %v2134, %v2226
        %v2228 = vpop.f32.mrb[0].mxu0
        %v2229 = vadd.f32 %v2136, %v2228
        %v2230 = vpop.f32.mrb[0].mxu0
        %v2231 = vpop.f32.mrb[0].mxu0
        %2232 = vdwg.mxu0
        %2233 = vmatprep.subr.bf16.mxu0 0
        %2234 = vmatpush1.bf16.msra.mxu0 %v2190
        %2235 = vmatprep.subr.bf16.mxu0 0
        %2236 = vmatpush1.bf16.msra.mxu0 0
        %2237 = vmatprep.subr.bf16.mxu0 0
        %2238 = vmatpush1.bf16.msra.mxu0 0
        %2239 = vmatprep.subr.bf16.mxu0 0
        %2240 = vmatpush1.bf16.msra.mxu0 0
        %2241 = vmatprep.subr.bf16.mxu0 0
        %2242 = vmatpush1.bf16.msra.mxu0 0
        %2243 = vmatprep.subr.bf16.mxu0 0
        %2244 = vmatpush1.bf16.msra.mxu0 0
        %2245 = vmatprep.subr.bf16.mxu0 0
        %2246 = vmatpush1.bf16.msra.mxu0 0
        %2247 = vmatprep.subr.bf16.mxu0 0
        %2248 = vmatpush1.bf16.msra.mxu0 0
        %2249 = vmatprep.subr.bf16.mxu0 0
        %2250 = vmatpush1.bf16.msra.mxu0 0
        %2251 = vmatprep.subr.bf16.mxu0 0
        %2252 = vmatpush1.bf16.msra.mxu0 0
        %2253 = vmatprep.subr.bf16.mxu0 0
        %2254 = vmatpush1.bf16.msra.mxu0 0
        %2255 = vmatprep.subr.bf16.mxu0 0
        %2256 = vmatpush1.bf16.msra.mxu0 0
        %2257 = vmatprep.subr.bf16.mxu0 0
        %2258 = vmatpush1.bf16.msra.mxu0 0
        %2259 = vmatprep.subr.bf16.mxu0 0
        %2260 = vmatpush1.bf16.msra.mxu0 0
        %2261 = vmatprep.subr.bf16.mxu0 0
        %2262 = vmatpush1.bf16.msra.mxu0 0
        %2263 = vmatprep.subr.bf16.mxu0 0
        %2264 = vmatpush1.bf16.msra.mxu0 0
        %2265 = vmatprep.mubr.bf16.mxu0 0
        %2266 = vmatmul.mubr.bf16.gmra.mrb[0].mxu0 %v2181
        %v2267 = vpop.f32.mrb[0].mxu0
        %v2268 = vadd.f32 %v2175, %v2267
        %v2269 = vpop.f32.mrb[0].mxu0
        %v2270 = vpop.f32.mrb[0].mxu0
        %v2271 = vpop.f32.mrb[0].mxu0
        %2272 = vdwg.mxu0
        %s2273 = scalar_lea.vmem [#allocation9], 8
        %v2274 = vld [vmem:[%s2273] sm:$0xf]
        %2275 = vrot.lane.b32.xlu0 %v2074, 126
        %v2276 = vpop.permute.xlu0 %2275
        %2277 = vrot.lane.b32.xlu0 %v2075, 126
        %v2278 = vpop.permute.xlu0 %2277
        %2279 = vrot.lane.b32.xlu0 %v2076, 126
        %v2280 = vpop.permute.xlu0 %2279
        %v2281 = vsel %vm1163, %v2276, %v2278
        %v2282 = vsel %vm1163, %v2278, %v2280
        %v2284 = vsel %vm2085, %v2274, 0
        %v2287 = vsel %vm2089, %v2281, 0
        %v2290 = vsel %vm2089, %v2282, 0
        %v2293 = vsel %vm2089, %v2280, 0
        %2295 = vmatprep.subr.bf16.mxu0 %v2290
        %2296 = vmatpush1.bf16.msra.mxu0 %v2287
        %2297 = vmatprep.subr.bf16.mxu0 0
        %2298 = vmatpush1.bf16.msra.mxu0 0
        %2299 = vmatprep.subr.bf16.mxu0 0
        %2300 = vmatpush1.bf16.msra.mxu0 0
        %2301 = vmatprep.subr.bf16.mxu0 0
        %2302 = vmatpush1.bf16.msra.mxu0 0
        %2303 = vmatprep.subr.bf16.mxu0 0
        %2304 = vmatpush1.bf16.msra.mxu0 0
        %2305 = vmatprep.subr.bf16.mxu0 0
        %2306 = vmatpush1.bf16.msra.mxu0 0
        %2307 = vmatprep.subr.bf16.mxu0 0
        %2308 = vmatpush1.bf16.msra.mxu0 0
        %2309 = vmatprep.subr.bf16.mxu0 0
        %2310 = vmatpush1.bf16.msra.mxu0 0
        %2311 = vmatprep.subr.bf16.mxu0 0
        %2312 = vmatpush1.bf16.msra.mxu0 0
        %2313 = vmatprep.subr.bf16.mxu0 0
        %2314 = vmatpush1.bf16.msra.mxu0 0
        %2315 = vmatprep.subr.bf16.mxu0 0
        %2316 = vmatpush1.bf16.msra.mxu0 0
        %2317 = vmatprep.subr.bf16.mxu0 0
        %2318 = vmatpush1.bf16.msra.mxu0 0
        %2319 = vmatprep.subr.bf16.mxu0 0
        %2320 = vmatpush1.bf16.msra.mxu0 0
        %2321 = vmatprep.subr.bf16.mxu0 0
        %2322 = vmatpush1.bf16.msra.mxu0 0
        %2323 = vmatprep.subr.bf16.mxu0 0
        %2324 = vmatpush1.bf16.msra.mxu0 0
        %2325 = vmatprep.subr.bf16.mxu0 0
        %2326 = vmatpush1.bf16.msra.mxu0 0
        %2327 = vmatprep.mubr.bf16.mxu0 0
        %2328 = vmatmul.mubr.bf16.gmra.mrb[0].mxu0 %v2284
        %v2329 = vpop.f32.mrb[0].mxu0
        %v2330 = vadd.f32 0.0, %v2329
        %v2331 = vpop.f32.mrb[0].mxu0
        %v2332 = vadd.f32 0.0, %v2331
        %v2333 = vpop.f32.mrb[0].mxu0
        %v2334 = vpop.f32.mrb[0].mxu0
        %2335 = vdwg.mxu0
        %2336 = vmatprep.subr.bf16.mxu0 0
        %2337 = vmatpush1.bf16.msra.mxu0 %v2293
        %2338 = vmatprep.subr.bf16.mxu0 0
        %2339 = vmatpush1.bf16.msra.mxu0 0
        %2340 = vmatprep.subr.bf16.mxu0 0
        %2341 = vmatpush1.bf16.msra.mxu0 0
        %2342 = vmatprep.subr.bf16.mxu0 0
        %2343 = vmatpush1.bf16.msra.mxu0 0
        %2344 = vmatprep.subr.bf16.mxu0 0
        %2345 = vmatpush1.bf16.msra.mxu0 0
        %2346 = vmatprep.subr.bf16.mxu0 0
        %2347 = vmatpush1.bf16.msra.mxu0 0
        %2348 = vmatprep.subr.bf16.mxu0 0
        %2349 = vmatpush1.bf16.msra.mxu0 0
        %2350 = vmatprep.subr.bf16.mxu0 0
        %2351 = vmatpush1.bf16.msra.mxu0 0
        %2352 = vmatprep.subr.bf16.mxu0 0
        %2353 = vmatpush1.bf16.msra.mxu0 0
        %2354 = vmatprep.subr.bf16.mxu0 0
        %2355 = vmatpush1.bf16.msra.mxu0 0
        %2356 = vmatprep.subr.bf16.mxu0 0
        %2357 = vmatpush1.bf16.msra.mxu0 0
        %2358 = vmatprep.subr.bf16.mxu0 0
        %2359 = vmatpush1.bf16.msra.mxu0 0
        %2360 = vmatprep.subr.bf16.mxu0 0
        %2361 = vmatpush1.bf16.msra.mxu0 0
        %2362 = vmatprep.subr.bf16.mxu0 0
        %2363 = vmatpush1.bf16.msra.mxu0 0
        %2364 = vmatprep.subr.bf16.mxu0 0
        %2365 = vmatpush1.bf16.msra.mxu0 0
        %2366 = vmatprep.subr.bf16.mxu0 0
        %2367 = vmatpush1.bf16.msra.mxu0 0
        %2368 = vmatprep.mubr.bf16.mxu0 0
        %2369 = vmatmul.mubr.bf16.gmra.mrb[0].mxu0 %v2284
        %v2370 = vpop.f32.mrb[0].mxu0
        %v2371 = vadd.f32 0.0, %v2370
        %v2372 = vpop.f32.mrb[0].mxu0
        %v2373 = vpop.f32.mrb[0].mxu0
        %v2374 = vpop.f32.mrb[0].mxu0
        %2375 = vdwg.mxu0
        %v2376 = vadd.f32 %v2227, %v2330
        %v2377 = vadd.f32 %v2229, %v2332
        %v2378 = vadd.f32 %v2268, %v2371
        %s2379 = scalar_lea.vmem [#allocation9], 12
        %v2380 = vld [vmem:[%s2379] sm:$0xf]
        %2381 = vrot.lane.b32.xlu0 %v2074, 110
        %v2382 = vpop.permute.xlu0 %2381
        %2383 = vrot.lane.b32.xlu0 %v2075, 110
        %v2384 = vpop.permute.xlu0 %2383
        %2385 = vrot.lane.b32.xlu0 %v2076, 110
        %v2386 = vpop.permute.xlu0 %2385
        %v2387 = vsel %vm1288, %v2382, %v2384
        %v2388 = vsel %vm1288, %v2384, %v2386
        %v2390 = vsel %vm2085, %v2380, 0
        %v2393 = vsel %vm2089, %v2387, 0
        %v2396 = vsel %vm2089, %v2388, 0
        %v2399 = vsel %vm2089, %v2386, 0
        %2401 = vmatprep.subr.bf16.mxu0 %v2396
        %2402 = vmatpush1.bf16.msra.mxu0 %v2393
        %2403 = vmatprep.subr.bf16.mxu0 0
        %2404 = vmatpush1.bf16.msra.mxu0 0
        %2405 = vmatprep.subr.bf16.mxu0 0
        %2406 = vmatpush1.bf16.msra.mxu0 0
        %2407 = vmatprep.subr.bf16.mxu0 0
        %2408 = vmatpush1.bf16.msra.mxu0 0
        %2409 = vmatprep.subr.bf16.mxu0 0
        %2410 = vmatpush1.bf16.msra.mxu0 0
        %2411 = vmatprep.subr.bf16.mxu0 0
        %2412 = vmatpush1.bf16.msra.mxu0 0
        %2413 = vmatprep.subr.bf16.mxu0 0
        %2414 = vmatpush1.bf16.msra.mxu0 0
        %2415 = vmatprep.subr.bf16.mxu0 0
        %2416 = vmatpush1.bf16.msra.mxu0 0
        %2417 = vmatprep.subr.bf16.mxu0 0
        %2418 = vmatpush1.bf16.msra.mxu0 0
        %2419 = vmatprep.subr.bf16.mxu0 0
        %2420 = vmatpush1.bf16.msra.mxu0 0
        %2421 = vmatprep.subr.bf16.mxu0 0
        %2422 = vmatpush1.bf16.msra.mxu0 0
        %2423 = vmatprep.subr.bf16.mxu0 0
        %2424 = vmatpush1.bf16.msra.mxu0 0
        %2425 = vmatprep.subr.bf16.mxu0 0
        %2426 = vmatpush1.bf16.msra.mxu0 0
        %2427 = vmatprep.subr.bf16.mxu0 0
        %2428 = vmatpush1.bf16.msra.mxu0 0
        %2429 = vmatprep.subr.bf16.mxu0 0
        %2430 = vmatpush1.bf16.msra.mxu0 0
        %2431 = vmatprep.subr.bf16.mxu0 0
        %2432 = vmatpush1.bf16.msra.mxu0 0
        %2433 = vmatprep.mubr.bf16.mxu0 0
        %2434 = vmatmul.mubr.bf16.gmra.mrb[0].mxu0 %v2390
        %v2435 = vpop.f32.mrb[0].mxu0
        %v2436 = vadd.f32 0.0, %v2435
        %v2437 = vpop.f32.mrb[0].mxu0
        %v2438 = vadd.f32 0.0, %v2437
        %v2439 = vpop.f32.mrb[0].mxu0
        %v2440 = vpop.f32.mrb[0].mxu0
        %2441 = vdwg.mxu0
        %2442 = vmatprep.subr.bf16.mxu0 0
        %2443 = vmatpush1.bf16.msra.mxu0 %v2399
        %2444 = vmatprep.subr.bf16.mxu0 0
        %2445 = vmatpush1.bf16.msra.mxu0 0
        %2446 = vmatprep.subr.bf16.mxu0 0
        %2447 = vmatpush1.bf16.msra.mxu0 0
        %2448 = vmatprep.subr.bf16.mxu0 0
        %2449 = vmatpush1.bf16.msra.mxu0 0
        %2450 = vmatprep.subr.bf16.mxu0 0
        %2451 = vmatpush1.bf16.msra.mxu0 0
        %2452 = vmatprep.subr.bf16.mxu0 0
        %2453 = vmatpush1.bf16.msra.mxu0 0
        %2454 = vmatprep.subr.bf16.mxu0 0
        %2455 = vmatpush1.bf16.msra.mxu0 0
        %2456 = vmatprep.subr.bf16.mxu0 0
        %2457 = vmatpush1.bf16.msra.mxu0 0
        %2458 = vmatprep.subr.bf16.mxu0 0
        %2459 = vmatpush1.bf16.msra.mxu0 0
        %2460 = vmatprep.subr.bf16.mxu0 0
        %2461 = vmatpush1.bf16.msra.mxu0 0
        %2462 = vmatprep.subr.bf16.mxu0 0
        %2463 = vmatpush1.bf16.msra.mxu0 0
        %2464 = vmatprep.subr.bf16.mxu0 0
        %2465 = vmatpush1.bf16.msra.mxu0 0
        %2466 = vmatprep.subr.bf16.mxu0 0
        %2467 = vmatpush1.bf16.msra.mxu0 0
        %2468 = vmatprep.subr.bf16.mxu0 0
        %2469 = vmatpush1.bf16.msra.mxu0 0
        %2470 = vmatprep.subr.bf16.mxu0 0
        %2471 = vmatpush1.bf16.msra.mxu0 0
        %2472 = vmatprep.subr.bf16.mxu0 0
        %2473 = vmatpush1.bf16.msra.mxu0 0
        %2474 = vmatprep.mubr.bf16.mxu0 0
        %2475 = vmatmul.mubr.bf16.gmra.mrb[0].mxu0 %v2390
        %v2476 = vpop.f32.mrb[0].mxu0
        %v2477 = vadd.f32 0.0, %v2476
        %v2478 = vpop.f32.mrb[0].mxu0
        %v2479 = vpop.f32.mrb[0].mxu0
        %v2480 = vpop.f32.mrb[0].mxu0
        %2481 = vdwg.mxu0
        %v2482 = vadd.f32 %v2376, %v2436
        %v2483 = vadd.f32 %v2377, %v2438
        %v2484 = vadd.f32 %v2378, %v2477
        %s2485 = scalar_lea.vmem [#allocation9], 16
        %v2486 = vld [vmem:[%s2485] sm:$0xf]
        %2487 = vrot.lane.b32.xlu0 %v2074, 109
        %v2488 = vpop.permute.xlu0 %2487
        %2489 = vrot.lane.b32.xlu0 %v2075, 109
        %v2490 = vpop.permute.xlu0 %2489
        %2491 = vrot.lane.b32.xlu0 %v2076, 109
        %v2492 = vpop.permute.xlu0 %2491
        %v2493 = vsel %vm1413, %v2488, %v2490
        %v2494 = vsel %vm1413, %v2490, %v2492
        %v2496 = vsel %vm2085, %v2486, 0
        %v2499 = vsel %vm2089, %v2493, 0
        %v2502 = vsel %vm2089, %v2494, 0
        %v2505 = vsel %vm2089, %v2492, 0
        %2507 = vmatprep.subr.bf16.mxu0 %v2502
        %2508 = vmatpush1.bf16.msra.mxu0 %v2499
        %2509 = vmatprep.subr.bf16.mxu0 0
        %2510 = vmatpush1.bf16.msra.mxu0 0
        %2511 = vmatprep.subr.bf16.mxu0 0
        %2512 = vmatpush1.bf16.msra.mxu0 0
        %2513 = vmatprep.subr.bf16.mxu0 0
        %2514 = vmatpush1.bf16.msra.mxu0 0
        %2515 = vmatprep.subr.bf16.mxu0 0
        %2516 = vmatpush1.bf16.msra.mxu0 0
        %2517 = vmatprep.subr.bf16.mxu0 0
        %2518 = vmatpush1.bf16.msra.mxu0 0
        %2519 = vmatprep.subr.bf16.mxu0 0
        %2520 = vmatpush1.bf16.msra.mxu0 0
        %2521 = vmatprep.subr.bf16.mxu0 0
        %2522 = vmatpush1.bf16.msra.mxu0 0
        %2523 = vmatprep.subr.bf16.mxu0 0
        %2524 = vmatpush1.bf16.msra.mxu0 0
        %2525 = vmatprep.subr.bf16.mxu0 0
        %2526 = vmatpush1.bf16.msra.mxu0 0
        %2527 = vmatprep.subr.bf16.mxu0 0
        %2528 = vmatpush1.bf16.msra.mxu0 0
        %2529 = vmatprep.subr.bf16.mxu0 0
        %2530 = vmatpush1.bf16.msra.mxu0 0
        %2531 = vmatprep.subr.bf16.mxu0 0
        %2532 = vmatpush1.bf16.msra.mxu0 0
        %2533 = vmatprep.subr.bf16.mxu0 0
        %2534 = vmatpush1.bf16.msra.mxu0 0
        %2535 = vmatprep.subr.bf16.mxu0 0
        %2536 = vmatpush1.bf16.msra.mxu0 0
        %2537 = vmatprep.subr.bf16.mxu0 0
        %2538 = vmatpush1.bf16.msra.mxu0 0
        %2539 = vmatprep.mubr.bf16.mxu0 0
        %2540 = vmatmul.mubr.bf16.gmra.mrb[0].mxu0 %v2496
        %v2541 = vpop.f32.mrb[0].mxu0
        %v2542 = vadd.f32 0.0, %v2541
        %v2543 = vpop.f32.mrb[0].mxu0
        %v2544 = vadd.f32 0.0, %v2543
        %v2545 = vpop.f32.mrb[0].mxu0
        %v2546 = vpop.f32.mrb[0].mxu0
        %2547 = vdwg.mxu0
        %2548 = vmatprep.subr.bf16.mxu0 0
        %2549 = vmatpush1.bf16.msra.mxu0 %v2505
        %2550 = vmatprep.subr.bf16.mxu0 0
        %2551 = vmatpush1.bf16.msra.mxu0 0
        %2552 = vmatprep.subr.bf16.mxu0 0
        %2553 = vmatpush1.bf16.msra.mxu0 0
        %2554 = vmatprep.subr.bf16.mxu0 0
        %2555 = vmatpush1.bf16.msra.mxu0 0
        %2556 = vmatprep.subr.bf16.mxu0 0
        %2557 = vmatpush1.bf16.msra.mxu0 0
        %2558 = vmatprep.subr.bf16.mxu0 0
        %2559 = vmatpush1.bf16.msra.mxu0 0
        %2560 = vmatprep.subr.bf16.mxu0 0
        %2561 = vmatpush1.bf16.msra.mxu0 0
        %2562 = vmatprep.subr.bf16.mxu0 0
        %2563 = vmatpush1.bf16.msra.mxu0 0
        %2564 = vmatprep.subr.bf16.mxu0 0
        %2565 = vmatpush1.bf16.msra.mxu0 0
        %2566 = vmatprep.subr.bf16.mxu0 0
        %2567 = vmatpush1.bf16.msra.mxu0 0
        %2568 = vmatprep.subr.bf16.mxu0 0
        %2569 = vmatpush1.bf16.msra.mxu0 0
        %2570 = vmatprep.subr.bf16.mxu0 0
        %2571 = vmatpush1.bf16.msra.mxu0 0
        %2572 = vmatprep.subr.bf16.mxu0 0
        %2573 = vmatpush1.bf16.msra.mxu0 0
        %2574 = vmatprep.subr.bf16.mxu0 0
        %2575 = vmatpush1.bf16.msra.mxu0 0
        %2576 = vmatprep.subr.bf16.mxu0 0
        %2577 = vmatpush1.bf16.msra.mxu0 0
        %2578 = vmatprep.subr.bf16.mxu0 0
        %2579 = vmatpush1.bf16.msra.mxu0 0
        %2580 = vmatprep.mubr.bf16.mxu0 0
        %2581 = vmatmul.mubr.bf16.gmra.mrb[0].mxu0 %v2496
        %v2582 = vpop.f32.mrb[0].mxu0
        %v2583 = vadd.f32 0.0, %v2582
        %v2584 = vpop.f32.mrb[0].mxu0
        %v2585 = vpop.f32.mrb[0].mxu0
        %v2586 = vpop.f32.mrb[0].mxu0
        %2587 = vdwg.mxu0
        %v2588 = vadd.f32 %v2482, %v2542
        %v2589 = vadd.f32 %v2483, %v2544
        %v2590 = vadd.f32 %v2484, %v2583
        %s2591 = scalar_lea.vmem [#allocation9], 20
        %v2592 = vld [vmem:[%s2591] sm:$0xf]
        %2593 = vrot.lane.b32.xlu0 %v2074, 108
        %v2594 = vpop.permute.xlu0 %2593
        %2595 = vrot.lane.b32.xlu0 %v2075, 108
        %v2596 = vpop.permute.xlu0 %2595
        %2597 = vrot.lane.b32.xlu0 %v2076, 108
        %v2598 = vpop.permute.xlu0 %2597
        %v2599 = vsel %vm1538, %v2594, %v2596
        %v2600 = vsel %vm1538, %v2596, %v2598
        %v2602 = vsel %vm2085, %v2592, 0
        %v2605 = vsel %vm2089, %v2599, 0
        %v2608 = vsel %vm2089, %v2600, 0
        %v2611 = vsel %vm2089, %v2598, 0
        %2613 = vmatprep.subr.bf16.mxu0 %v2608
        %2614 = vmatpush1.bf16.msra.mxu0 %v2605
        %2615 = vmatprep.subr.bf16.mxu0 0
        %2616 = vmatpush1.bf16.msra.mxu0 0
        %2617 = vmatprep.subr.bf16.mxu0 0
        %2618 = vmatpush1.bf16.msra.mxu0 0
        %2619 = vmatprep.subr.bf16.mxu0 0
        %2620 = vmatpush1.bf16.msra.mxu0 0
        %2621 = vmatprep.subr.bf16.mxu0 0
        %2622 = vmatpush1.bf16.msra.mxu0 0
        %2623 = vmatprep.subr.bf16.mxu0 0
        %2624 = vmatpush1.bf16.msra.mxu0 0
        %2625 = vmatprep.subr.bf16.mxu0 0
        %2626 = vmatpush1.bf16.msra.mxu0 0
        %2627 = vmatprep.subr.bf16.mxu0 0
        %2628 = vmatpush1.bf16.msra.mxu0 0
        %2629 = vmatprep.subr.bf16.mxu0 0
        %2630 = vmatpush1.bf16.msra.mxu0 0
        %2631 = vmatprep.subr.bf16.mxu0 0
        %2632 = vmatpush1.bf16.msra.mxu0 0
        %2633 = vmatprep.subr.bf16.mxu0 0
        %2634 = vmatpush1.bf16.msra.mxu0 0
        %2635 = vmatprep.subr.bf16.mxu0 0
        %2636 = vmatpush1.bf16.msra.mxu0 0
        %2637 = vmatprep.subr.bf16.mxu0 0
        %2638 = vmatpush1.bf16.msra.mxu0 0
        %2639 = vmatprep.subr.bf16.mxu0 0
        %2640 = vmatpush1.bf16.msra.mxu0 0
        %2641 = vmatprep.subr.bf16.mxu0 0
        %2642 = vmatpush1.bf16.msra.mxu0 0
        %2643 = vmatprep.subr.bf16.mxu0 0
        %2644 = vmatpush1.bf16.msra.mxu0 0
        %2645 = vmatprep.mubr.bf16.mxu0 0
        %2646 = vmatmul.mubr.bf16.gmra.mrb[0].mxu0 %v2602
        %v2647 = vpop.f32.mrb[0].mxu0
        %v2648 = vadd.f32 0.0, %v2647
        %v2649 = vpop.f32.mrb[0].mxu0
        %v2650 = vadd.f32 0.0, %v2649
        %v2651 = vpop.f32.mrb[0].mxu0
        %v2652 = vpop.f32.mrb[0].mxu0
        %2653 = vdwg.mxu0
        %2654 = vmatprep.subr.bf16.mxu0 0
        %2655 = vmatpush1.bf16.msra.mxu0 %v2611
        %2656 = vmatprep.subr.bf16.mxu0 0
        %2657 = vmatpush1.bf16.msra.mxu0 0
        %2658 = vmatprep.subr.bf16.mxu0 0
        %2659 = vmatpush1.bf16.msra.mxu0 0
        %2660 = vmatprep.subr.bf16.mxu0 0
        %2661 = vmatpush1.bf16.msra.mxu0 0
        %2662 = vmatprep.subr.bf16.mxu0 0
        %2663 = vmatpush1.bf16.msra.mxu0 0
        %2664 = vmatprep.subr.bf16.mxu0 0
        %2665 = vmatpush1.bf16.msra.mxu0 0
        %2666 = vmatprep.subr.bf16.mxu0 0
        %2667 = vmatpush1.bf16.msra.mxu0 0
        %2668 = vmatprep.subr.bf16.mxu0 0
        %2669 = vmatpush1.bf16.msra.mxu0 0
        %2670 = vmatprep.subr.bf16.mxu0 0
        %2671 = vmatpush1.bf16.msra.mxu0 0
        %2672 = vmatprep.subr.bf16.mxu0 0
        %2673 = vmatpush1.bf16.msra.mxu0 0
        %2674 = vmatprep.subr.bf16.mxu0 0
        %2675 = vmatpush1.bf16.msra.mxu0 0
        %2676 = vmatprep.subr.bf16.mxu0 0
        %2677 = vmatpush1.bf16.msra.mxu0 0
        %2678 = vmatprep.subr.bf16.mxu0 0
        %2679 = vmatpush1.bf16.msra.mxu0 0
        %2680 = vmatprep.subr.bf16.mxu0 0
        %2681 = vmatpush1.bf16.msra.mxu0 0
        %2682 = vmatprep.subr.bf16.mxu0 0
        %2683 = vmatpush1.bf16.msra.mxu0 0
        %2684 = vmatprep.subr.bf16.mxu0 0
        %2685 = vmatpush1.bf16.msra.mxu0 0
        %2686 = vmatprep.mubr.bf16.mxu0 0
        %2687 = vmatmul.mubr.bf16.gmra.mrb[0].mxu0 %v2602
        %v2688 = vpop.f32.mrb[0].mxu0
        %v2689 = vadd.f32 0.0, %v2688
        %v2690 = vpop.f32.mrb[0].mxu0
        %v2691 = vpop.f32.mrb[0].mxu0
        %v2692 = vpop.f32.mrb[0].mxu0
        %2693 = vdwg.mxu0
        %v2694 = vadd.f32 %v2588, %v2648
        %v2695 = vadd.f32 %v2589, %v2650
        %v2696 = vadd.f32 %v2590, %v2689
        %s2697 = scalar_lea.vmem [#allocation9], 24
        %v2698 = vld [vmem:[%s2697] sm:$0xf]
        %2699 = vrot.lane.b32.xlu0 %v2074, 92
        %v2700 = vpop.permute.xlu0 %2699
        %2701 = vrot.lane.b32.xlu0 %v2075, 92
        %v2702 = vpop.permute.xlu0 %2701
        %2703 = vrot.lane.b32.xlu0 %v2076, 92
        %v2704 = vpop.permute.xlu0 %2703
        %v2705 = vsel %vm1663, %v2700, %v2702
        %v2706 = vsel %vm1663, %v2702, %v2704
        %v2708 = vsel %vm2085, %v2698, 0
        %v2711 = vsel %vm2089, %v2705, 0
        %v2714 = vsel %vm2089, %v2706, 0
        %v2717 = vsel %vm2089, %v2704, 0
        %2719 = vmatprep.subr.bf16.mxu0 %v2714
        %2720 = vmatpush1.bf16.msra.mxu0 %v2711
        %2721 = vmatprep.subr.bf16.mxu0 0
        %2722 = vmatpush1.bf16.msra.mxu0 0
        %2723 = vmatprep.subr.bf16.mxu0 0
        %2724 = vmatpush1.bf16.msra.mxu0 0
        %2725 = vmatprep.subr.bf16.mxu0 0
        %2726 = vmatpush1.bf16.msra.mxu0 0
        %2727 = vmatprep.subr.bf16.mxu0 0
        %2728 = vmatpush1.bf16.msra.mxu0 0
        %2729 = vmatprep.subr.bf16.mxu0 0
        %2730 = vmatpush1.bf16.msra.mxu0 0
        %2731 = vmatprep.subr.bf16.mxu0 0
        %2732 = vmatpush1.bf16.msra.mxu0 0
        %2733 = vmatprep.subr.bf16.mxu0 0
        %2734 = vmatpush1.bf16.msra.mxu0 0
        %2735 = vmatprep.subr.bf16.mxu0 0
        %2736 = vmatpush1.bf16.msra.mxu0 0
        %2737 = vmatprep.subr.bf16.mxu0 0
        %2738 = vmatpush1.bf16.msra.mxu0 0
        %2739 = vmatprep.subr.bf16.mxu0 0
        %2740 = vmatpush1.bf16.msra.mxu0 0
        %2741 = vmatprep.subr.bf16.mxu0 0
        %2742 = vmatpush1.bf16.msra.mxu0 0
        %2743 = vmatprep.subr.bf16.mxu0 0
        %2744 = vmatpush1.bf16.msra.mxu0 0
        %2745 = vmatprep.subr.bf16.mxu0 0
        %2746 = vmatpush1.bf16.msra.mxu0 0
        %2747 = vmatprep.subr.bf16.mxu0 0
        %2748 = vmatpush1.bf16.msra.mxu0 0
        %2749 = vmatprep.subr.bf16.mxu0 0
        %2750 = vmatpush1.bf16.msra.mxu0 0
        %2751 = vmatprep.mubr.bf16.mxu0 0
        %2752 = vmatmul.mubr.bf16.gmra.mrb[0].mxu0 %v2708
        %v2753 = vpop.f32.mrb[0].mxu0
        %v2754 = vadd.f32 0.0, %v2753
        %v2755 = vpop.f32.mrb[0].mxu0
        %v2756 = vadd.f32 0.0, %v2755
        %v2757 = vpop.f32.mrb[0].mxu0
        %v2758 = vpop.f32.mrb[0].mxu0
        %2759 = vdwg.mxu0
        %2760 = vmatprep.subr.bf16.mxu0 0
        %2761 = vmatpush1.bf16.msra.mxu0 %v2717
        %2762 = vmatprep.subr.bf16.mxu0 0
        %2763 = vmatpush1.bf16.msra.mxu0 0
        %2764 = vmatprep.subr.bf16.mxu0 0
        %2765 = vmatpush1.bf16.msra.mxu0 0
        %2766 = vmatprep.subr.bf16.mxu0 0
        %2767 = vmatpush1.bf16.msra.mxu0 0
        %2768 = vmatprep.subr.bf16.mxu0 0
        %2769 = vmatpush1.bf16.msra.mxu0 0
        %2770 = vmatprep.subr.bf16.mxu0 0
        %2771 = vmatpush1.bf16.msra.mxu0 0
        %2772 = vmatprep.subr.bf16.mxu0 0
        %2773 = vmatpush1.bf16.msra.mxu0 0
        %2774 = vmatprep.subr.bf16.mxu0 0
        %2775 = vmatpush1.bf16.msra.mxu0 0
        %2776 = vmatprep.subr.bf16.mxu0 0
        %2777 = vmatpush1.bf16.msra.mxu0 0
        %2778 = vmatprep.subr.bf16.mxu0 0
        %2779 = vmatpush1.bf16.msra.mxu0 0
        %2780 = vmatprep.subr.bf16.mxu0 0
        %2781 = vmatpush1.bf16.msra.mxu0 0
        %2782 = vmatprep.subr.bf16.mxu0 0
        %2783 = vmatpush1.bf16.msra.mxu0 0
        %2784 = vmatprep.subr.bf16.mxu0 0
        %2785 = vmatpush1.bf16.msra.mxu0 0
        %2786 = vmatprep.subr.bf16.mxu0 0
        %2787 = vmatpush1.bf16.msra.mxu0 0
        %2788 = vmatprep.subr.bf16.mxu0 0
        %2789 = vmatpush1.bf16.msra.mxu0 0
        %2790 = vmatprep.subr.bf16.mxu0 0
        %2791 = vmatpush1.bf16.msra.mxu0 0
        %2792 = vmatprep.mubr.bf16.mxu0 0
        %2793 = vmatmul.mubr.bf16.gmra.mrb[0].mxu0 %v2708
        %v2794 = vpop.f32.mrb[0].mxu0
        %v2795 = vadd.f32 0.0, %v2794
        %v2796 = vpop.f32.mrb[0].mxu0
        %v2797 = vpop.f32.mrb[0].mxu0
        %v2798 = vpop.f32.mrb[0].mxu0
        %2799 = vdwg.mxu0
        %v2800 = vadd.f32 %v2694, %v2754
        %v2801 = vadd.f32 %v2695, %v2756
        %v2802 = vadd.f32 %v2696, %v2795
        %s2803 = scalar_lea.vmem [#allocation9], 28
        %v2804 = vld [vmem:[%s2803] sm:$0xf]
        %2805 = vrot.lane.b32.xlu0 %v2074, 91
        %v2806 = vpop.permute.xlu0 %2805
        %2807 = vrot.lane.b32.xlu0 %v2075, 91
        %v2808 = vpop.permute.xlu0 %2807
        %2809 = vrot.lane.b32.xlu0 %v2076, 91
        %v2810 = vpop.permute.xlu0 %2809
        %v2811 = vsel %vm1788, %v2806, %v2808
        %v2812 = vsel %vm1788, %v2808, %v2810
        %v2814 = vsel %vm2085, %v2804, 0
        %v2817 = vsel %vm2089, %v2811, 0
        %v2820 = vsel %vm2089, %v2812, 0
        %v2823 = vsel %vm2089, %v2810, 0
        %2825 = vmatprep.subr.bf16.mxu0 %v2820
        %2826 = vmatpush1.bf16.msra.mxu0 %v2817
        %2827 = vmatprep.subr.bf16.mxu0 0
        %2828 = vmatpush1.bf16.msra.mxu0 0
        %2829 = vmatprep.subr.bf16.mxu0 0
        %2830 = vmatpush1.bf16.msra.mxu0 0
        %2831 = vmatprep.subr.bf16.mxu0 0
        %2832 = vmatpush1.bf16.msra.mxu0 0
        %2833 = vmatprep.subr.bf16.mxu0 0
        %2834 = vmatpush1.bf16.msra.mxu0 0
        %2835 = vmatprep.subr.bf16.mxu0 0
        %2836 = vmatpush1.bf16.msra.mxu0 0
        %2837 = vmatprep.subr.bf16.mxu0 0
        %2838 = vmatpush1.bf16.msra.mxu0 0
        %2839 = vmatprep.subr.bf16.mxu0 0
        %2840 = vmatpush1.bf16.msra.mxu0 0
        %2841 = vmatprep.subr.bf16.mxu0 0
        %2842 = vmatpush1.bf16.msra.mxu0 0
        %2843 = vmatprep.subr.bf16.mxu0 0
        %2844 = vmatpush1.bf16.msra.mxu0 0
        %2845 = vmatprep.subr.bf16.mxu0 0
        %2846 = vmatpush1.bf16.msra.mxu0 0
        %2847 = vmatprep.subr.bf16.mxu0 0
        %2848 = vmatpush1.bf16.msra.mxu0 0
        %2849 = vmatprep.subr.bf16.mxu0 0
        %2850 = vmatpush1.bf16.msra.mxu0 0
        %2851 = vmatprep.subr.bf16.mxu0 0
        %2852 = vmatpush1.bf16.msra.mxu0 0
        %2853 = vmatprep.subr.bf16.mxu0 0
        %2854 = vmatpush1.bf16.msra.mxu0 0
        %2855 = vmatprep.subr.bf16.mxu0 0
        %2856 = vmatpush1.bf16.msra.mxu0 0
        %2857 = vmatprep.mubr.bf16.mxu0 0
        %2858 = vmatmul.mubr.bf16.gmra.mrb[0].mxu0 %v2814
        %v2859 = vpop.f32.mrb[0].mxu0
        %v2860 = vadd.f32 0.0, %v2859
        %v2861 = vpop.f32.mrb[0].mxu0
        %v2862 = vadd.f32 0.0, %v2861
        %v2863 = vpop.f32.mrb[0].mxu0
        %v2864 = vpop.f32.mrb[0].mxu0
        %2865 = vdwg.mxu0
        %2866 = vmatprep.subr.bf16.mxu0 0
        %2867 = vmatpush1.bf16.msra.mxu0 %v2823
        %2868 = vmatprep.subr.bf16.mxu0 0
        %2869 = vmatpush1.bf16.msra.mxu0 0
        %2870 = vmatprep.subr.bf16.mxu0 0
        %2871 = vmatpush1.bf16.msra.mxu0 0
        %2872 = vmatprep.subr.bf16.mxu0 0
        %2873 = vmatpush1.bf16.msra.mxu0 0
        %2874 = vmatprep.subr.bf16.mxu0 0
        %2875 = vmatpush1.bf16.msra.mxu0 0
        %2876 = vmatprep.subr.bf16.mxu0 0
        %2877 = vmatpush1.bf16.msra.mxu0 0
        %2878 = vmatprep.subr.bf16.mxu0 0
        %2879 = vmatpush1.bf16.msra.mxu0 0
        %2880 = vmatprep.subr.bf16.mxu0 0
        %2881 = vmatpush1.bf16.msra.mxu0 0
        %2882 = vmatprep.subr.bf16.mxu0 0
        %2883 = vmatpush1.bf16.msra.mxu0 0
        %2884 = vmatprep.subr.bf16.mxu0 0
        %2885 = vmatpush1.bf16.msra.mxu0 0
        %2886 = vmatprep.subr.bf16.mxu0 0
        %2887 = vmatpush1.bf16.msra.mxu0 0
        %2888 = vmatprep.subr.bf16.mxu0 0
        %2889 = vmatpush1.bf16.msra.mxu0 0
        %2890 = vmatprep.subr.bf16.mxu0 0
        %2891 = vmatpush1.bf16.msra.mxu0 0
        %2892 = vmatprep.subr.bf16.mxu0 0
        %2893 = vmatpush1.bf16.msra.mxu0 0
        %2894 = vmatprep.subr.bf16.mxu0 0
        %2895 = vmatpush1.bf16.msra.mxu0 0
        %2896 = vmatprep.subr.bf16.mxu0 0
        %2897 = vmatpush1.bf16.msra.mxu0 0
        %2898 = vmatprep.mubr.bf16.mxu0 0
        %2899 = vmatmul.mubr.bf16.gmra.mrb[0].mxu0 %v2814
        %v2900 = vpop.f32.mrb[0].mxu0
        %v2901 = vadd.f32 0.0, %v2900
        %v2902 = vpop.f32.mrb[0].mxu0
        %v2903 = vpop.f32.mrb[0].mxu0
        %v2904 = vpop.f32.mrb[0].mxu0
        %2905 = vdwg.mxu0
        %v2906 = vadd.f32 %v2800, %v2860
        %v2907 = vadd.f32 %v2801, %v2862
        %v2908 = vadd.f32 %v2802, %v2901
        %s2909 = scalar_lea.vmem [#allocation9], 32
        %v2910 = vld [vmem:[%s2909] sm:$0xf]
        %2911 = vrot.lane.b32.xlu0 %v2074, 90
        %v2912 = vpop.permute.xlu0 %2911
        %2913 = vrot.lane.b32.xlu0 %v2075, 90
        %v2914 = vpop.permute.xlu0 %2913
        %2915 = vrot.lane.b32.xlu0 %v2076, 90
        %v2916 = vpop.permute.xlu0 %2915
        %v2917 = vsel %vm1913, %v2912, %v2914
        %v2918 = vsel %vm1913, %v2914, %v2916
        %v2920 = vsel %vm2085, %v2910, 0
        %v2923 = vsel %vm2089, %v2917, 0
        %v2926 = vsel %vm2089, %v2918, 0
        %v2929 = vsel %vm2089, %v2916, 0
        %2931 = vmatprep.subr.bf16.mxu0 %v2926
        %2932 = vmatpush1.bf16.msra.mxu0 %v2923
        %2933 = vmatprep.subr.bf16.mxu0 0
        %2934 = vmatpush1.bf16.msra.mxu0 0
        %2935 = vmatprep.subr.bf16.mxu0 0
        %2936 = vmatpush1.bf16.msra.mxu0 0
        %2937 = vmatprep.subr.bf16.mxu0 0
        %2938 = vmatpush1.bf16.msra.mxu0 0
        %2939 = vmatprep.subr.bf16.mxu0 0
        %2940 = vmatpush1.bf16.msra.mxu0 0
        %2941 = vmatprep.subr.bf16.mxu0 0
        %2942 = vmatpush1.bf16.msra.mxu0 0
        %2943 = vmatprep.subr.bf16.mxu0 0
        %2944 = vmatpush1.bf16.msra.mxu0 0
        %2945 = vmatprep.subr.bf16.mxu0 0
        %2946 = vmatpush1.bf16.msra.mxu0 0
        %2947 = vmatprep.subr.bf16.mxu0 0
        %2948 = vmatpush1.bf16.msra.mxu0 0
        %2949 = vmatprep.subr.bf16.mxu0 0
        %2950 = vmatpush1.bf16.msra.mxu0 0
        %2951 = vmatprep.subr.bf16.mxu0 0
        %2952 = vmatpush1.bf16.msra.mxu0 0
        %2953 = vmatprep.subr.bf16.mxu0 0
        %2954 = vmatpush1.bf16.msra.mxu0 0
        %2955 = vmatprep.subr.bf16.mxu0 0
        %2956 = vmatpush1.bf16.msra.mxu0 0
        %2957 = vmatprep.subr.bf16.mxu0 0
        %2958 = vmatpush1.bf16.msra.mxu0 0
        %2959 = vmatprep.subr.bf16.mxu0 0
        %2960 = vmatpush1.bf16.msra.mxu0 0
        %2961 = vmatprep.subr.bf16.mxu0 0
        %2962 = vmatpush1.bf16.msra.mxu0 0
        %2963 = vmatprep.mubr.bf16.mxu0 0
        %2964 = vmatmul.mubr.bf16.gmra.mrb[0].mxu0 %v2920
        %v2965 = vpop.f32.mrb[0].mxu0
        %v2966 = vadd.f32 0.0, %v2965
        %v2967 = vpop.f32.mrb[0].mxu0
        %v2968 = vadd.f32 0.0, %v2967
        %v2969 = vpop.f32.mrb[0].mxu0
        %v2970 = vpop.f32.mrb[0].mxu0
        %2971 = vdwg.mxu0
        %2972 = vmatprep.subr.bf16.mxu0 0
        %2973 = vmatpush1.bf16.msra.mxu0 %v2929
        %2974 = vmatprep.subr.bf16.mxu0 0
        %2975 = vmatpush1.bf16.msra.mxu0 0
        %2976 = vmatprep.subr.bf16.mxu0 0
        %2977 = vmatpush1.bf16.msra.mxu0 0
        %2978 = vmatprep.subr.bf16.mxu0 0
        %2979 = vmatpush1.bf16.msra.mxu0 0
        %2980 = vmatprep.subr.bf16.mxu0 0
        %2981 = vmatpush1.bf16.msra.mxu0 0
        %2982 = vmatprep.subr.bf16.mxu0 0
        %2983 = vmatpush1.bf16.msra.mxu0 0
        %2984 = vmatprep.subr.bf16.mxu0 0
        %2985 = vmatpush1.bf16.msra.mxu0 0
        %2986 = vmatprep.subr.bf16.mxu0 0
        %2987 = vmatpush1.bf16.msra.mxu0 0
        %2988 = vmatprep.subr.bf16.mxu0 0
        %2989 = vmatpush1.bf16.msra.mxu0 0
        %2990 = vmatprep.subr.bf16.mxu0 0
        %2991 = vmatpush1.bf16.msra.mxu0 0
        %2992 = vmatprep.subr.bf16.mxu0 0
        %2993 = vmatpush1.bf16.msra.mxu0 0
        %2994 = vmatprep.subr.bf16.mxu0 0
        %2995 = vmatpush1.bf16.msra.mxu0 0
        %2996 = vmatprep.subr.bf16.mxu0 0
        %2997 = vmatpush1.bf16.msra.mxu0 0
        %2998 = vmatprep.subr.bf16.mxu0 0
        %2999 = vmatpush1.bf16.msra.mxu0 0
        %3000 = vmatprep.subr.bf16.mxu0 0
        %3001 = vmatpush1.bf16.msra.mxu0 0
        %3002 = vmatprep.subr.bf16.mxu0 0
        %3003 = vmatpush1.bf16.msra.mxu0 0
        %3004 = vmatprep.mubr.bf16.mxu0 0
        %3005 = vmatmul.mubr.bf16.gmra.mrb[0].mxu0 %v2920
        %v3006 = vpop.f32.mrb[0].mxu0
        %v3007 = vadd.f32 0.0, %v3006
        %v3008 = vpop.f32.mrb[0].mxu0
        %v3009 = vpop.f32.mrb[0].mxu0
        %v3010 = vpop.f32.mrb[0].mxu0
        %3011 = vdwg.mxu0
        %v3012 = vadd.f32 %v2906, %v2966
        %v3013 = vadd.f32 %v2907, %v2968
        %v3014 = vadd.f32 %v2908, %v3007
        %v3015 = vld [vmem:[#allocation11] sm:$0xff]
        %3017 = vset.pattern.permute.xlu0 0
        %3018 = vperm.xlu0 %3017, %v3015
        %v3019 = vpop.permute.xlu0 %3018
        %v3021 = vadd.f32 %v3012, %v3019
        %v3022 = vadd.f32 %v3013, %v3019
        %v3023 = vadd.f32 %v3014, %v3019
        %v3024 = vmax.f32 %v3021, 0.0
        %v3025 = vmax.f32 %v3022, 0.0
        %v3026 = vmax.f32 %v3023, 0.0
        %3027 = vst [vmem:[%s298] sm:$0xff] %v3024
        %3028 = vst [vmem:[%s298 + $0x8] sm:$0xff] %v3025
        %vm3029 = vcmask 261120
        %3030 = vst.msk [vmem:[%s298 + $0x10] sm:$0xff] %vm3029, %v3026
        %p3031 = scmp.lt.s32.totalorder %s21, 1
        %s3032 = scalar_select %p3031, %s21, 1
        %s3033 = smul.addr %s3032, 3
        %s3034 = smul.addr %s3033, 8
        %s3035 = scalar_lea.vmem %s5, %s3034
        // Predicated region
        $region61: #{_lambda_.1} parent=39 // pred_check
          %p3036 = pneg %p149
        $region62: #{_lambda_.1} parent=39 // pred_check_branch
          %3038 = sbr.rel (%p3036) target = $region64
        $region63: #{_lambda_.1} parent=39 // pred_region
          _
        $region64: #{_lambda_.1} parent=39 // pred_fallthru
          _
      $region40: #{_lambda_.1} parent=5 // pred_fallthru
        _
      %p3039 = scmp.le.s32.totalorder 2, %s16
      // Predicated region
      $region65: #{_lambda_.1} parent=5 // pred_check
        %p3040 = pneg %p3039
      $region66: #{_lambda_.1} parent=5 // pred_check_branch
        %3042 = sbr.rel (%p3040) target = $region68
      $region67: #{_lambda_.1} parent=5 // pred_region
        %s3043 = ssub.s32 %s16, 2
        // Predicated region
        $region69: #{_lambda_.1} parent=67 // pred_check
          %p3044 = pneg %p155
        $region70: #{_lambda_.1} parent=67 // pred_check_branch
          %3046 = sbr.rel (%p3044) target = $region72
        $region71: #{_lambda_.1} parent=67 // pred_region
          %p3047 = scmp.lt.s32.totalorder %s22, 1
          %s3048 = scalar_select %p3047, %s22, 1
          %s3049 = smul.addr %s3048, 3
          %s3050 = smul.addr %s3049, 8
          %s3051 = scalar_lea.vmem %s5, %s3050
        $region72: #{_lambda_.1} parent=67 // pred_fallthru
          _
      $region68: #{_lambda_.1} parent=5 // pred_fallthru
        _
    $region6: #{_lambda_.1} parent=1 // loop_footer
      %s20 = sadd.s32 1, %s16
    $region7: #{_lambda_.1} parent=1 // loop_footer_branch
      %15 = sbr.rel target = $region3
    $region8: #{_lambda_.1} parent=1 // loop_exit
      _
    %3052 = vsyncpa [#allocation5], 1
    %s3053 = scalar_lea.sflag [#allocation5], 1
    %3054 = vsyncpa %s3053, 1
    %3055 = vsyncpa [#allocation7], 1
    %3056 = vsyncpa [#allocation10], 1

</llo_original>
